<compile_context>
chip_gen: v7x
topology: tpu7x:2x2x1
jax: 0.10.0
libtpu: 0.0.40
codegen_flags: <defaults>
</compile_context>

<pallas_src>
import jax
import jax.numpy as jnp
from jax.experimental import pallas as pl
from jax.experimental.pallas import tpu as pltpu

# ---------------- model config (small synthetic stand-in for roberta-base) -------------
B = 2           # batch
S = 8           # seqlen
H = 32          # hidden size (stand-in for EMBED_SIZE=768)
NH = 4          # attention heads
HD = H // NH    # head dim
F = 4 * H       # FFN intermediate
VOCAB = 100
MAXPOS = 64
NLAYERS = 2
NOUT = 5        # decoder output dim (Linear(EMBED_SIZE, 5))
LANE = 128      # lane-dense padded decoder width
LN_EPS = 1e-5

# TODO(synk): weights are deterministic synthetic tensors; loading the real
# `transformers` pretrained checkpoint (and its padding-offset position embeddings /
# exact-erf GELU) has no in-script Pallas equivalent.


# ---------------- in-kernel helpers ------------------------------------------------------
def _ln(x, g, b):
    mu = jnp.sum(x, axis=-1, keepdims=True) * (1.0 / H)
    d = x - mu
    var = jnp.sum(d * d, axis=-1, keepdims=True) * (1.0 / H)
    return d * jax.lax.rsqrt(var + LN_EPS) * g + b


def _gelu(x):
    # tanh approximation of GELU (EUP-friendly); HF RoBERTa uses exact erf.
    c = 0.7978845608028654  # sqrt(2/pi)
    return 0.5 * x * (1.0 + jnp.tanh(c * (x + 0.044715 * x * x * x)))


# ---------------- fused encoder + decoder kernel ------------------------------------------
def _fused_kernel(
        x_ref, bias_ref, pm_ref, emb_g_ref, emb_b_ref,
        wqkv_ref, bqkv_ref, wo_ref, bo_ref,
        ln1_g_ref, ln1_b_ref, w1_ref, b1_ref, w2_ref, b2_ref, ln2_g_ref, ln2_b_ref,
        dec_w_ref, dec_b_ref,
        o_ref,
        q_s, k_s, v_s, ctx_s):
    f32 = jnp.float32
    scale = 1.0 / (HD ** 0.5)

    # embedding LayerNorm (input already lane-dense (B*S, H))
    h = _ln(x_ref[...].astype(f32), emb_g_ref[...], emb_b_ref[...])

    # additive attention bias, loaded once, head-replicated: (NH*B, 1, S)
    bias3 = bias_ref[...]

    for l in range(NLAYERS):                      # weights stay resident in VMEM
        # ---------------- multi-head self-attention ----------------
        # fused QKV: one (B*S, H) @ (H, 3H) matmul
        qkv = jnp.dot(h, wqkv_ref[l], preferred_element_type=f32) + bqkv_ref[l]

        # scatter head slices into the head-batched (NH*B, S, HD) scratch (head-major)
        for n in range(NH):
            rows = slice(n * B, (n + 1) * B)
            q_s[rows] = qkv[:, n * HD:(n + 1) * HD].reshape(B, S, HD)
            k_s[rows] = qkv[:, H + n * HD:H + (n + 1) * HD].reshape(B, S, HD)
            v_s[rows] = qkv[:, 2 * H + n * HD:2 * H + (n + 1) * HD].reshape(B, S, HD)

        # one batched contraction for all (head, batch) pairs
        s = jnp.einsum('bqd,bkd->bqk', q_s[...], k_s[...],
                       preferred_element_type=f32) * scale + bias3
        s = s - jnp.max(s, axis=-1, keepdims=True)
        p = jnp.exp(s)
        p = p * pl.reciprocal(jnp.sum(p, axis=-1, keepdims=True), approx=True)
        ctx = jnp.einsum('bqk,bkd->bqd', p, v_s[...], preferred_element_type=f32)

        # gather heads back into a lane-contiguous (B*S, H) scratch, then ONE
        # output-projection matmul (instead of NH tiny K=HD matmuls summed)
        for n in range(NH):
            ctx_s[:, n * HD:(n + 1) * HD] = ctx[n * B:(n + 1) * B].reshape(B * S, HD)
        attn = jnp.dot(ctx_s[...], wo_ref[l], preferred_element_type=f32) + bo_ref[l]

        h = _ln(h + attn, ln1_g_ref[l], ln1_b_ref[l])       # residual + post-LN

        # ---------------- feed-forward ----------------
        f = jnp.dot(h, w1_ref[l], preferred_element_type=f32) + b1_ref[l]
        f = _gelu(f)
        f = jnp.dot(f, w2_ref[l], preferred_element_type=f32) + b2_ref[l]
        h = _ln(h + f, ln2_g_ref[l], ln2_b_ref[l])          # residual + post-LN

    # ---------------- decoder (lane-dense, padded to 128) + predict-mask fill ------------
    y = jnp.dot(h, dec_w_ref[...], preferred_element_type=f32) + dec_b_ref[...]
    o_ref[...] = jnp.where(pm_ref[...] == 0.0, -1.0, y).astype(o_ref.dtype)


# ---------------- pallas_call plumbing ----------------------------------------------------
def _full_spec(shape):
    nd = len(shape)
    return pl.BlockSpec(shape, lambda *_: (0,) * nd)


# ---------------- parameter init (deterministic, synthetic) ------------------------------
def init_params(key):
    keys = iter(jax.random.split(key, 16))

    def w(shape, scale=0.02):
        return (scale * jax.random.normal(next(keys), shape)).astype(jnp.float32)

    def stack(shape):
        return jnp.stack([w(shape) for _ in range(NLAYERS)])

    return {
        'word_emb': w((VOCAB, H)),
        'pos_emb': w((MAXPOS, H)),
        'emb_ln_g': jnp.ones((1, H), jnp.float32),
        'emb_ln_b': jnp.zeros((1, H), jnp.float32),
        'dec_w': w((H, NOUT)),
        'dec_b': jnp.zeros((1, NOUT), jnp.float32),
        'layers': {   # stacked over layers -> single set of kernel inputs
            'wq': stack((H, H)), 'bq': jnp.zeros((NLAYERS, 1, H), jnp.float32),
            'wk': stack((H, H)), 'bk': jnp.zeros((NLAYERS, 1, H), jnp.float32),
            'wv': stack((H, H)), 'bv': jnp.zeros((NLAYERS, 1, H), jnp.float32),
            'wo': stack((H, H)), 'bo': jnp.zeros((NLAYERS, 1, H), jnp.float32),
            'ln1_g': jnp.ones((NLAYERS, 1, H), jnp.float32),
            'ln1_b': jnp.zeros((NLAYERS, 1, H), jnp.float32),
            'w1': stack((H, F)), 'b1': jnp.zeros((NLAYERS, 1, F), jnp.float32),
            'w2': stack((F, H)), 'b2': jnp.zeros((NLAYERS, 1, H), jnp.float32),
            'ln2_g': jnp.ones((NLAYERS, 1, H), jnp.float32),
            'ln2_b': jnp.zeros((NLAYERS, 1, H), jnp.float32),
        },
    }


# ---------------- forward pass -------------------------------------------------------------
def roberta_regression_forward(params, X_ids, X_attns, predict_mask):
    # embedding gather is glue in plain JAX; everything else runs in the fused kernel
    word = jnp.take(params['word_emb'], X_ids, axis=0)            # (B, S, H)
    pos = params['pos_emb'][:S][None, :, :]                       # (1, S, H)
    emb = (word + pos).reshape(B * S, H).astype(jnp.float32)      # lane-dense 2D

    # additive attention bias, computed once and replicated per head (head-major rows)
    bias = (X_attns.astype(jnp.float32) - 1.0) * 1e9              # (B, S)
    bias3 = jnp.tile(bias, (NH, 1))[:, None, :]                   # (NH*B, 1, S)

    pm = predict_mask.astype(jnp.float32).reshape(B * S, 1)       # (B*S, 1)

    # lane-dense decoder weights (pad NOUT=5 -> 128); real 5 columns sliced after the call
    dec_w_pad = jnp.zeros((H, LANE), jnp.float32).at[:, :NOUT].set(params['dec_w'])
    dec_b_pad = jnp.zeros((1, LANE), jnp.float32).at[:, :NOUT].set(params['dec_b'])

    L = params['layers']
    # fused QKV weights/biases: (NLAYERS, H, 3H) / (NLAYERS, 1, 3H)
    wqkv = jnp.concatenate([L['wq'], L['wk'], L['wv']], axis=-1)
    bqkv = jnp.concatenate([L['bq'], L['bk'], L['bv']], axis=-1)

    args = [
        emb, bias3, pm, params['emb_ln_g'], params['emb_ln_b'],
        wqkv, bqkv, L['wo'], L['bo'],
        L['ln1_g'], L['ln1_b'], L['w1'], L['b1'], L['w2'], L['b2'],
        L['ln2_g'], L['ln2_b'],
        dec_w_pad, dec_b_pad,
    ]

    out_padded = pl.pallas_call(
        _fused_kernel,
        grid=(1,),
        in_specs=[_full_spec(a.shape) for a in args],
        out_specs=_full_spec((B * S, LANE)),
        out_shape=jax.ShapeDtypeStruct((B * S, LANE), jnp.float32),
        scratch_shapes=[pltpu.VMEM((NH * B, S, HD), jnp.float32) for _ in range(3)]
                      + [pltpu.VMEM((B * S, H), jnp.float32)],
    )(*args)

    # slice the 5 real decoder outputs and restore (B, S, NOUT)
    return out_padded[:, :NOUT].reshape(B, S, NOUT)


# ---------------- main ----------------------------------------------------------------------
if __name__ == "__main__":
    key = jax.random.PRNGKey(0)
    pkey, ikey, pmkey = jax.random.split(key, 3)

    params = init_params(pkey)

    X_ids = jax.random.randint(ikey, (B, S), 0, VOCAB, dtype=jnp.int32)
    X_attns = jnp.ones((B, S), dtype=jnp.int32).at[1, S - 2:].set(0)   # pad last 2 of row 1
    predict_mask = (jax.random.uniform(pmkey, (B, S)) > 0.5).astype(jnp.int32)

    out = roberta_regression_forward(params, X_ids, X_attns, predict_mask)
    out = jax.block_until_ready(out)

    assert out.shape == (B, S, NOUT), out.shape
    assert out.dtype == jnp.float32
    print("KERNEL_OK")
</pallas_src>

<mosaic_0001>
module attributes {stable_mosaic.version = 11 : i64} {
  func.func @_fused_kernel(%arg0: i32, %arg1: memref<16x32xf32, #tpu.memory_space<vmem>>, %arg2: memref<8x1x8xf32, #tpu.memory_space<vmem>>, %arg3: memref<16x1xf32, #tpu.memory_space<vmem>>, %arg4: memref<1x32xf32, #tpu.memory_space<vmem>>, %arg5: memref<1x32xf32, #tpu.memory_space<vmem>>, %arg6: memref<2x32x96xf32, #tpu.memory_space<vmem>>, %arg7: memref<2x1x96xf32, #tpu.memory_space<vmem>>, %arg8: memref<2x32x32xf32, #tpu.memory_space<vmem>>, %arg9: memref<2x1x32xf32, #tpu.memory_space<vmem>>, %arg10: memref<2x1x32xf32, #tpu.memory_space<vmem>>, %arg11: memref<2x1x32xf32, #tpu.memory_space<vmem>>, %arg12: memref<2x32x128xf32, #tpu.memory_space<vmem>>, %arg13: memref<2x1x128xf32, #tpu.memory_space<vmem>>, %arg14: memref<2x128x32xf32, #tpu.memory_space<vmem>>, %arg15: memref<2x1x32xf32, #tpu.memory_space<vmem>>, %arg16: memref<2x1x32xf32, #tpu.memory_space<vmem>>, %arg17: memref<2x1x32xf32, #tpu.memory_space<vmem>>, %arg18: memref<32x128xf32, #tpu.memory_space<vmem>>, %arg19: memref<1x128xf32, #tpu.memory_space<vmem>>, %arg20: memref<16x128xf32, #tpu.memory_space<vmem>>, %arg21: memref<8x8x8xf32, #tpu.memory_space<vmem>>, %arg22: memref<8x8x8xf32, #tpu.memory_space<vmem>>, %arg23: memref<8x8x8xf32, #tpu.memory_space<vmem>>, %arg24: memref<16x32xf32, #tpu.memory_space<vmem>>) attributes {dimension_semantics = [#tpu.dimension_semantics<arbitrary>], iteration_bounds = array<i64: 1>, scalar_prefetch = 0 : i64, scratch_operands = 4 : i64, tpu.core_type = #tpu.core_type<tc>, window_params = [{pipeline_mode = #tpu.pipeline_mode<synchronous>, transform_indices = @transform_0, window_bounds = array<i64: 16, 32>}, {pipeline_mode = #tpu.pipeline_mode<synchronous>, transform_indices = @transform_1, window_bounds = array<i64: 8, 1, 8>}, {pipeline_mode = #tpu.pipeline_mode<synchronous>, transform_indices = @transform_2, window_bounds = array<i64: 16, 1>}, {pipeline_mode = #tpu.pipeline_mode<synchronous>, transform_indices = @transform_3, window_bounds = array<i64: 1, 32>}, {pipeline_mode = #tpu.pipeline_mode<synchronous>, transform_indices = @transform_4, window_bounds = array<i64: 1, 32>}, {pipeline_mode = #tpu.pipeline_mode<synchronous>, transform_indices = @transform_5, window_bounds = array<i64: 2, 32, 96>}, {pipeline_mode = #tpu.pipeline_mode<synchronous>, transform_indices = @transform_6, window_bounds = array<i64: 2, 1, 96>}, {pipeline_mode = #tpu.pipeline_mode<synchronous>, transform_indices = @transform_7, window_bounds = array<i64: 2, 32, 32>}, {pipeline_mode = #tpu.pipeline_mode<synchronous>, transform_indices = @transform_8, window_bounds = array<i64: 2, 1, 32>}, {pipeline_mode = #tpu.pipeline_mode<synchronous>, transform_indices = @transform_9, window_bounds = array<i64: 2, 1, 32>}, {pipeline_mode = #tpu.pipeline_mode<synchronous>, transform_indices = @transform_10, window_bounds = array<i64: 2, 1, 32>}, {pipeline_mode = #tpu.pipeline_mode<synchronous>, transform_indices = @transform_11, window_bounds = array<i64: 2, 32, 128>}, {pipeline_mode = #tpu.pipeline_mode<synchronous>, transform_indices = @transform_12, window_bounds = array<i64: 2, 1, 128>}, {pipeline_mode = #tpu.pipeline_mode<synchronous>, transform_indices = @transform_13, window_bounds = array<i64: 2, 128, 32>}, {pipeline_mode = #tpu.pipeline_mode<synchronous>, transform_indices = @transform_14, window_bounds = array<i64: 2, 1, 32>}, {pipeline_mode = #tpu.pipeline_mode<synchronous>, transform_indices = @transform_15, window_bounds = array<i64: 2, 1, 32>}, {pipeline_mode = #tpu.pipeline_mode<synchronous>, transform_indices = @transform_16, window_bounds = array<i64: 2, 1, 32>}, {pipeline_mode = #tpu.pipeline_mode<synchronous>, transform_indices = @transform_17, window_bounds = array<i64: 32, 128>}, {pipeline_mode = #tpu.pipeline_mode<synchronous>, transform_indices = @transform_18, window_bounds = array<i64: 1, 128>}, {pipeline_mode = #tpu.pipeline_mode<synchronous>, transform_indices = @transform_19, window_bounds = array<i64: 16, 128>}]} {
    %c0 = arith.constant 0 : index
    %c0_0 = arith.constant 0 : index
    %0 = vector.load %arg1[%c0, %c0_0] : memref<16x32xf32, #tpu.memory_space<vmem>>, vector<16x32xf32>
    %c0_1 = arith.constant 0 : index
    %c0_2 = arith.constant 0 : index
    %1 = vector.load %arg4[%c0_1, %c0_2] : memref<1x32xf32, #tpu.memory_space<vmem>>, vector<1x32xf32>
    %c0_3 = arith.constant 0 : index
    %c0_4 = arith.constant 0 : index
    %2 = vector.load %arg5[%c0_3, %c0_4] : memref<1x32xf32, #tpu.memory_space<vmem>>, vector<1x32xf32>
    %cst = arith.constant dense<0.000000e+00> : vector<16xf32>
    %3 = vector.multi_reduction <add>, %0, %cst [1] : vector<16x32xf32> to vector<16xf32>
    %4 = vector.shape_cast %3 : vector<16xf32> to vector<16x1xf32>
    %cst_5 = arith.constant 3.125000e-02 : f32
    %5 = vector.broadcast %cst_5 : f32 to vector<16x1xf32>
    %6 = arith.mulf %4, %5 : vector<16x1xf32>
    %7 = vector.broadcast %6 : vector<16x1xf32> to vector<16x32xf32>
    %8 = arith.subf %0, %7 : vector<16x32xf32>
    %9 = arith.mulf %8, %8 : vector<16x32xf32>
    %cst_6 = arith.constant dense<0.000000e+00> : vector<16xf32>
    %10 = vector.multi_reduction <add>, %9, %cst_6 [1] : vector<16x32xf32> to vector<16xf32>
    %11 = vector.shape_cast %10 : vector<16xf32> to vector<16x1xf32>
    %cst_7 = arith.constant 3.125000e-02 : f32
    %12 = vector.broadcast %cst_7 : f32 to vector<16x1xf32>
    %13 = arith.mulf %11, %12 : vector<16x1xf32>
    %cst_8 = arith.constant 9.99999974E-6 : f32
    %14 = vector.broadcast %cst_8 : f32 to vector<16x1xf32>
    %15 = arith.addf %13, %14 : vector<16x1xf32>
    %16 = math.rsqrt %15 : vector<16x1xf32>
    %17 = vector.broadcast %16 : vector<16x1xf32> to vector<16x32xf32>
    %18 = arith.mulf %8, %17 : vector<16x32xf32>
    %19 = vector.broadcast %1 : vector<1x32xf32> to vector<16x32xf32>
    %20 = arith.mulf %18, %19 : vector<16x32xf32>
    %21 = vector.broadcast %2 : vector<1x32xf32> to vector<16x32xf32>
    %22 = arith.addf %20, %21 : vector<16x32xf32>
    %c0_9 = arith.constant 0 : index
    %c0_10 = arith.constant 0 : index
    %c0_11 = arith.constant 0 : index
    %23 = vector.load %arg2[%c0_9, %c0_10, %c0_11] : memref<8x1x8xf32, #tpu.memory_space<vmem>>, vector<8x1x8xf32>
    %c0_12 = arith.constant 0 : index
    %c0_13 = arith.constant 0 : index
    %c0_14 = arith.constant 0 : index
    %24 = vector.load %arg6[%c0_12, %c0_13, %c0_14] : memref<2x32x96xf32, #tpu.memory_space<vmem>>, vector<1x32x96xf32>
    %25 = vector.shape_cast %24 : vector<1x32x96xf32> to vector<32x96xf32>
    %cst_15 = arith.constant dense<0.000000e+00> : vector<16x96xf32>
    %26 = tpu.matmul %22, %25, %cst_15 {dimension_numbers = #tpu.dot_dimension_numbers<[1], [0], [0], [1], [0, 0, 1, 1], [], []>} : vector<16x32xf32>, vector<32x96xf32>, vector<16x96xf32> -> vector<16x96xf32>
    %c0_16 = arith.constant 0 : index
    %c0_17 = arith.constant 0 : index
    %c0_18 = arith.constant 0 : index
    %27 = vector.load %arg7[%c0_16, %c0_17, %c0_18] : memref<2x1x96xf32, #tpu.memory_space<vmem>>, vector<1x1x96xf32>
    %28 = vector.shape_cast %27 : vector<1x1x96xf32> to vector<1x96xf32>
    %29 = vector.broadcast %28 : vector<1x96xf32> to vector<16x96xf32>
    %30 = arith.addf %26, %29 : vector<16x96xf32>
    %31 = vector.extract_strided_slice %30 {offsets = [0, 0], sizes = [16, 8], strides = [1, 1]} : vector<16x96xf32> to vector<16x8xf32>
    %32 = vector.shape_cast %31 : vector<16x8xf32> to vector<2x8x8xf32>
    %c0_19 = arith.constant 0 : index
    %c0_20 = arith.constant 0 : index
    %c0_21 = arith.constant 0 : index
    %33 = vector.load %arg21[%c0_19, %c0_20, %c0_21] : memref<8x8x8xf32, #tpu.memory_space<vmem>>, vector<2x8x8xf32>
    tpu.vector_store %arg21[%c0_19, %c0_20, %c0_21], %32 {strides = array<i32>} : memref<8x8x8xf32, #tpu.memory_space<vmem>>, vector<2x8x8xf32>,
    %34 = vector.extract_strided_slice %30 {offsets = [0, 32], sizes = [16, 8], strides = [1, 1]} : vector<16x96xf32> to vector<16x8xf32>
    %35 = vector.shape_cast %34 : vector<16x8xf32> to vector<2x8x8xf32>
    %c0_22 = arith.constant 0 : index
    %c0_23 = arith.constant 0 : index
    %c0_24 = arith.constant 0 : index
    %36 = vector.load %arg22[%c0_22, %c0_23, %c0_24] : memref<8x8x8xf32, #tpu.memory_space<vmem>>, vector<2x8x8xf32>
    tpu.vector_store %arg22[%c0_22, %c0_23, %c0_24], %35 {strides = array<i32>} : memref<8x8x8xf32, #tpu.memory_space<vmem>>, vector<2x8x8xf32>,
    %37 = vector.extract_strided_slice %30 {offsets = [0, 64], sizes = [16, 8], strides = [1, 1]} : vector<16x96xf32> to vector<16x8xf32>
    %38 = vector.shape_cast %37 : vector<16x8xf32> to vector<2x8x8xf32>
    %c0_25 = arith.constant 0 : index
    %c0_26 = arith.constant 0 : index
    %c0_27 = arith.constant 0 : index
    %39 = vector.load %arg23[%c0_25, %c0_26, %c0_27] : memref<8x8x8xf32, #tpu.memory_space<vmem>>, vector<2x8x8xf32>
    tpu.vector_store %arg23[%c0_25, %c0_26, %c0_27], %38 {strides = array<i32>} : memref<8x8x8xf32, #tpu.memory_space<vmem>>, vector<2x8x8xf32>,
    %40 = vector.extract_strided_slice %30 {offsets = [0, 8], sizes = [16, 8], strides = [1, 1]} : vector<16x96xf32> to vector<16x8xf32>
    %41 = vector.shape_cast %40 : vector<16x8xf32> to vector<2x8x8xf32>
    %c2 = arith.constant 2 : index
    %c0_28 = arith.constant 0 : index
    %c0_29 = arith.constant 0 : index
    %42 = vector.load %arg21[%c2, %c0_28, %c0_29] : memref<8x8x8xf32, #tpu.memory_space<vmem>>, vector<2x8x8xf32>
    tpu.vector_store %arg21[%c2, %c0_28, %c0_29], %41 {strides = array<i32>} : memref<8x8x8xf32, #tpu.memory_space<vmem>>, vector<2x8x8xf32>,
    %43 = vector.extract_strided_slice %30 {offsets = [0, 40], sizes = [16, 8], strides = [1, 1]} : vector<16x96xf32> to vector<16x8xf32>
    %44 = vector.shape_cast %43 : vector<16x8xf32> to vector<2x8x8xf32>
    %c2_30 = arith.constant 2 : index
    %c0_31 = arith.constant 0 : index
    %c0_32 = arith.constant 0 : index
    %45 = vector.load %arg22[%c2_30, %c0_31, %c0_32] : memref<8x8x8xf32, #tpu.memory_space<vmem>>, vector<2x8x8xf32>
    tpu.vector_store %arg22[%c2_30, %c0_31, %c0_32], %44 {strides = array<i32>} : memref<8x8x8xf32, #tpu.memory_space<vmem>>, vector<2x8x8xf32>,
    %46 = vector.extract_strided_slice %30 {offsets = [0, 72], sizes = [16, 8], strides = [1, 1]} : vector<16x96xf32> to vector<16x8xf32>
    %47 = vector.shape_cast %46 : vector<16x8xf32> to vector<2x8x8xf32>
    %c2_33 = arith.constant 2 : index
    %c0_34 = arith.constant 0 : index
    %c0_35 = arith.constant 0 : index
    %48 = vector.load %arg23[%c2_33, %c0_34, %c0_35] : memref<8x8x8xf32, #tpu.memory_space<vmem>>, vector<2x8x8xf32>
    tpu.vector_store %arg23[%c2_33, %c0_34, %c0_35], %47 {strides = array<i32>} : memref<8x8x8xf32, #tpu.memory_space<vmem>>, vector<2x8x8xf32>,
    %49 = vector.extract_strided_slice %30 {offsets = [0, 16], sizes = [16, 8], strides = [1, 1]} : vector<16x96xf32> to vector<16x8xf32>
    %50 = vector.shape_cast %49 : vector<16x8xf32> to vector<2x8x8xf32>
    %c4 = arith.constant 4 : index
    %c0_36 = arith.constant 0 : index
    %c0_37 = arith.constant 0 : index
    %51 = vector.load %arg21[%c4, %c0_36, %c0_37] : memref<8x8x8xf32, #tpu.memory_space<vmem>>, vector<2x8x8xf32>
    tpu.vector_store %arg21[%c4, %c0_36, %c0_37], %50 {strides = array<i32>} : memref<8x8x8xf32, #tpu.memory_space<vmem>>, vector<2x8x8xf32>,
    %52 = vector.extract_strided_slice %30 {offsets = [0, 48], sizes = [16, 8], strides = [1, 1]} : vector<16x96xf32> to vector<16x8xf32>
    %53 = vector.shape_cast %52 : vector<16x8xf32> to vector<2x8x8xf32>
    %c4_38 = arith.constant 4 : index
    %c0_39 = arith.constant 0 : index
    %c0_40 = arith.constant 0 : index
    %54 = vector.load %arg22[%c4_38, %c0_39, %c0_40] : memref<8x8x8xf32, #tpu.memory_space<vmem>>, vector<2x8x8xf32>
    tpu.vector_store %arg22[%c4_38, %c0_39, %c0_40], %53 {strides = array<i32>} : memref<8x8x8xf32, #tpu.memory_space<vmem>>, vector<2x8x8xf32>,
    %55 = vector.extract_strided_slice %30 {offsets = [0, 80], sizes = [16, 8], strides = [1, 1]} : vector<16x96xf32> to vector<16x8xf32>
    %56 = vector.shape_cast %55 : vector<16x8xf32> to vector<2x8x8xf32>
    %c4_41 = arith.constant 4 : index
    %c0_42 = arith.constant 0 : index
    %c0_43 = arith.constant 0 : index
    %57 = vector.load %arg23[%c4_41, %c0_42, %c0_43] : memref<8x8x8xf32, #tpu.memory_space<vmem>>, vector<2x8x8xf32>
    tpu.vector_store %arg23[%c4_41, %c0_42, %c0_43], %56 {strides = array<i32>} : memref<8x8x8xf32, #tpu.memory_space<vmem>>, vector<2x8x8xf32>,
    %58 = vector.extract_strided_slice %30 {offsets = [0, 24], sizes = [16, 8], strides = [1, 1]} : vector<16x96xf32> to vector<16x8xf32>
    %59 = vector.shape_cast %58 : vector<16x8xf32> to vector<2x8x8xf32>
    %c6 = arith.constant 6 : index
    %c0_44 = arith.constant 0 : index
    %c0_45 = arith.constant 0 : index
    %60 = vector.load %arg21[%c6, %c0_44, %c0_45] : memref<8x8x8xf32, #tpu.memory_space<vmem>>, vector<2x8x8xf32>
    tpu.vector_store %arg21[%c6, %c0_44, %c0_45], %59 {strides = array<i32>} : memref<8x8x8xf32, #tpu.memory_space<vmem>>, vector<2x8x8xf32>,
    %61 = vector.extract_strided_slice %30 {offsets = [0, 56], sizes = [16, 8], strides = [1, 1]} : vector<16x96xf32> to vector<16x8xf32>
    %62 = vector.shape_cast %61 : vector<16x8xf32> to vector<2x8x8xf32>
    %c6_46 = arith.constant 6 : index
    %c0_47 = arith.constant 0 : index
    %c0_48 = arith.constant 0 : index
    %63 = vector.load %arg22[%c6_46, %c0_47, %c0_48] : memref<8x8x8xf32, #tpu.memory_space<vmem>>, vector<2x8x8xf32>
    tpu.vector_store %arg22[%c6_46, %c0_47, %c0_48], %62 {strides = array<i32>} : memref<8x8x8xf32, #tpu.memory_space<vmem>>, vector<2x8x8xf32>,
    %64 = vector.extract_strided_slice %30 {offsets = [0, 88], sizes = [16, 8], strides = [1, 1]} : vector<16x96xf32> to vector<16x8xf32>
    %65 = vector.shape_cast %64 : vector<16x8xf32> to vector<2x8x8xf32>
    %c6_49 = arith.constant 6 : index
    %c0_50 = arith.constant 0 : index
    %c0_51 = arith.constant 0 : index
    %66 = vector.load %arg23[%c6_49, %c0_50, %c0_51] : memref<8x8x8xf32, #tpu.memory_space<vmem>>, vector<2x8x8xf32>
    tpu.vector_store %arg23[%c6_49, %c0_50, %c0_51], %65 {strides = array<i32>} : memref<8x8x8xf32, #tpu.memory_space<vmem>>, vector<2x8x8xf32>,
    %c0_52 = arith.constant 0 : index
    %c0_53 = arith.constant 0 : index
    %c0_54 = arith.constant 0 : index
    %67 = vector.load %arg21[%c0_52, %c0_53, %c0_54] : memref<8x8x8xf32, #tpu.memory_space<vmem>>, vector<8x8x8xf32>
    %c0_55 = arith.constant 0 : index
    %c0_56 = arith.constant 0 : index
    %c0_57 = arith.constant 0 : index
    %68 = vector.load %arg22[%c0_55, %c0_56, %c0_57] : memref<8x8x8xf32, #tpu.memory_space<vmem>>, vector<8x8x8xf32>
    "tpu.trace_start"() <{level = 10 : i32, message = "bqd,bkd->bqk"}> : () -> ()
    %cst_58 = arith.constant dense<0.000000e+00> : vector<8x8x8xf32>
    %69 = tpu.matmul %67, %68, %cst_58 {dimension_numbers = #tpu.dot_dimension_numbers<[2], [2], [1], [1], [0, 0, 0, 1, 1, 1], [0], [0]>} : vector<8x8x8xf32>, vector<8x8x8xf32>, vector<8x8x8xf32> -> vector<8x8x8xf32>
    "tpu.trace_stop"() : () -> ()
    %cst_59 = arith.constant 0.353553385 : f32
    %70 = vector.broadcast %cst_59 : f32 to vector<8x8x8xf32>
    %71 = arith.mulf %69, %70 : vector<8x8x8xf32>
    %72 = vector.broadcast %23 : vector<8x1x8xf32> to vector<8x8x8xf32>
    %73 = arith.addf %71, %72 : vector<8x8x8xf32>
    %cst_60 = arith.constant dense<0xFF800000> : vector<8x8xf32>
    %74 = vector.multi_reduction <maximumf>, %73, %cst_60 [2] : vector<8x8x8xf32> to vector<8x8xf32>
    %75 = vector.shape_cast %74 : vector<8x8xf32> to vector<8x8x1xf32>
    %76 = vector.broadcast %75 : vector<8x8x1xf32> to vector<8x8x8xf32>
    %77 = arith.subf %73, %76 : vector<8x8x8xf32>
    %78 = math.exp %77 : vector<8x8x8xf32>
    %cst_61 = arith.constant dense<0.000000e+00> : vector<8x8xf32>
    %79 = vector.multi_reduction <add>, %78, %cst_61 [2] : vector<8x8x8xf32> to vector<8x8xf32>
    %80 = vector.shape_cast %79 : vector<8x8xf32> to vector<8x8x1xf32>
    %81 = tpu.reciprocal %80 {approx = true} : vector<8x8x1xf32> -> vector<8x8x1xf32>
    %82 = vector.broadcast %81 : vector<8x8x1xf32> to vector<8x8x8xf32>
    %83 = arith.mulf %78, %82 : vector<8x8x8xf32>
    %c0_62 = arith.constant 0 : index
    %c0_63 = arith.constant 0 : index
    %c0_64 = arith.constant 0 : index
    %84 = vector.load %arg23[%c0_62, %c0_63, %c0_64] : memref<8x8x8xf32, #tpu.memory_space<vmem>>, vector<8x8x8xf32>
    "tpu.trace_start"() <{level = 10 : i32, message = "bqk,bkd->bqd"}> : () -> ()
    %cst_65 = arith.constant dense<0.000000e+00> : vector<8x8x8xf32>
    %85 = tpu.matmul %83, %84, %cst_65 {dimension_numbers = #tpu.dot_dimension_numbers<[2], [1], [1], [2], [0, 0, 0, 1, 1, 2], [0], [0]>} : vector<8x8x8xf32>, vector<8x8x8xf32>, vector<8x8x8xf32> -> vector<8x8x8xf32>
    "tpu.trace_stop"() : () -> ()
    %86 = vector.extract_strided_slice %85 {offsets = [0, 0, 0], sizes = [2, 8, 8], strides = [1, 1, 1]} : vector<8x8x8xf32> to vector<2x8x8xf32>
    %87 = vector.shape_cast %86 : vector<2x8x8xf32> to vector<16x8xf32>
    %c0_66 = arith.constant 0 : index
    %c0_67 = arith.constant 0 : index
    %88 = vector.load %arg24[%c0_66, %c0_67] : memref<16x32xf32, #tpu.memory_space<vmem>>, vector<16x8xf32>
    tpu.vector_store %arg24[%c0_66, %c0_67], %87 {strides = array<i32>} : memref<16x32xf32, #tpu.memory_space<vmem>>, vector<16x8xf32>,
    %89 = vector.extract_strided_slice %85 {offsets = [2, 0, 0], sizes = [2, 8, 8], strides = [1, 1, 1]} : vector<8x8x8xf32> to vector<2x8x8xf32>
    %90 = vector.shape_cast %89 : vector<2x8x8xf32> to vector<16x8xf32>
    %c0_68 = arith.constant 0 : index
    %c8 = arith.constant 8 : index
    %91 = vector.load %arg24[%c0_68, %c8] : memref<16x32xf32, #tpu.memory_space<vmem>>, vector<16x8xf32>
    tpu.vector_store %arg24[%c0_68, %c8], %90 {strides = array<i32>} : memref<16x32xf32, #tpu.memory_space<vmem>>, vector<16x8xf32>,
    %92 = vector.extract_strided_slice %85 {offsets = [4, 0, 0], sizes = [2, 8, 8], strides = [1, 1, 1]} : vector<8x8x8xf32> to vector<2x8x8xf32>
    %93 = vector.shape_cast %92 : vector<2x8x8xf32> to vector<16x8xf32>
    %c0_69 = arith.constant 0 : index
    %c16 = arith.constant 16 : index
    %94 = vector.load %arg24[%c0_69, %c16] : memref<16x32xf32, #tpu.memory_space<vmem>>, vector<16x8xf32>
    tpu.vector_store %arg24[%c0_69, %c16], %93 {strides = array<i32>} : memref<16x32xf32, #tpu.memory_space<vmem>>, vector<16x8xf32>,
    %95 = vector.extract_strided_slice %85 {offsets = [6, 0, 0], sizes = [2, 8, 8], strides = [1, 1, 1]} : vector<8x8x8xf32> to vector<2x8x8xf32>
    %96 = vector.shape_cast %95 : vector<2x8x8xf32> to vector<16x8xf32>
    %c0_70 = arith.constant 0 : index
    %c24 = arith.constant 24 : index
    %97 = vector.load %arg24[%c0_70, %c24] : memref<16x32xf32, #tpu.memory_space<vmem>>, vector<16x8xf32>
    tpu.vector_store %arg24[%c0_70, %c24], %96 {strides = array<i32>} : memref<16x32xf32, #tpu.memory_space<vmem>>, vector<16x8xf32>,
    %c0_71 = arith.constant 0 : index
    %c0_72 = arith.constant 0 : index
    %98 = vector.load %arg24[%c0_71, %c0_72] : memref<16x32xf32, #tpu.memory_space<vmem>>, vector<16x32xf32>
    %c0_73 = arith.constant 0 : index
    %c0_74 = arith.constant 0 : index
    %c0_75 = arith.constant 0 : index
    %99 = vector.load %arg8[%c0_73, %c0_74, %c0_75] : memref<2x32x32xf32, #tpu.memory_space<vmem>>, vector<1x32x32xf32>
    %100 = vector.shape_cast %99 : vector<1x32x32xf32> to vector<32x32xf32>
    %cst_76 = arith.constant dense<0.000000e+00> : vector<16x32xf32>
    %101 = tpu.matmul %98, %100, %cst_76 {dimension_numbers = #tpu.dot_dimension_numbers<[1], [0], [0], [1], [0, 0, 1, 1], [], []>} : vector<16x32xf32>, vector<32x32xf32>, vector<16x32xf32> -> vector<16x32xf32>
    %c0_77 = arith.constant 0 : index
    %c0_78 = arith.constant 0 : index
    %c0_79 = arith.constant 0 : index
    %102 = vector.load %arg9[%c0_77, %c0_78, %c0_79] : memref<2x1x32xf32, #tpu.memory_space<vmem>>, vector<1x1x32xf32>
    %103 = vector.shape_cast %102 : vector<1x1x32xf32> to vector<1x32xf32>
    %104 = vector.broadcast %103 : vector<1x32xf32> to vector<16x32xf32>
    %105 = arith.addf %101, %104 : vector<16x32xf32>
    %106 = arith.addf %22, %105 : vector<16x32xf32>
    %c0_80 = arith.constant 0 : index
    %c0_81 = arith.constant 0 : index
    %c0_82 = arith.constant 0 : index
    %107 = vector.load %arg10[%c0_80, %c0_81, %c0_82] : memref<2x1x32xf32, #tpu.memory_space<vmem>>, vector<1x1x32xf32>
    %108 = vector.shape_cast %107 : vector<1x1x32xf32> to vector<1x32xf32>
    %c0_83 = arith.constant 0 : index
    %c0_84 = arith.constant 0 : index
    %c0_85 = arith.constant 0 : index
    %109 = vector.load %arg11[%c0_83, %c0_84, %c0_85] : memref<2x1x32xf32, #tpu.memory_space<vmem>>, vector<1x1x32xf32>
    %110 = vector.shape_cast %109 : vector<1x1x32xf32> to vector<1x32xf32>
    %cst_86 = arith.constant dense<0.000000e+00> : vector<16xf32>
    %111 = vector.multi_reduction <add>, %106, %cst_86 [1] : vector<16x32xf32> to vector<16xf32>
    %112 = vector.shape_cast %111 : vector<16xf32> to vector<16x1xf32>
    %cst_87 = arith.constant 3.125000e-02 : f32
    %113 = vector.broadcast %cst_87 : f32 to vector<16x1xf32>
    %114 = arith.mulf %112, %113 : vector<16x1xf32>
    %115 = vector.broadcast %114 : vector<16x1xf32> to vector<16x32xf32>
    %116 = arith.subf %106, %115 : vector<16x32xf32>
    %117 = arith.mulf %116, %116 : vector<16x32xf32>
    %cst_88 = arith.constant dense<0.000000e+00> : vector<16xf32>
    %118 = vector.multi_reduction <add>, %117, %cst_88 [1] : vector<16x32xf32> to vector<16xf32>
    %119 = vector.shape_cast %118 : vector<16xf32> to vector<16x1xf32>
    %cst_89 = arith.constant 3.125000e-02 : f32
    %120 = vector.broadcast %cst_89 : f32 to vector<16x1xf32>
    %121 = arith.mulf %119, %120 : vector<16x1xf32>
    %cst_90 = arith.constant 9.99999974E-6 : f32
    %122 = vector.broadcast %cst_90 : f32 to vector<16x1xf32>
    %123 = arith.addf %121, %122 : vector<16x1xf32>
    %124 = math.rsqrt %123 : vector<16x1xf32>
    %125 = vector.broadcast %124 : vector<16x1xf32> to vector<16x32xf32>
    %126 = arith.mulf %116, %125 : vector<16x32xf32>
    %127 = vector.broadcast %108 : vector<1x32xf32> to vector<16x32xf32>
    %128 = arith.mulf %126, %127 : vector<16x32xf32>
    %129 = vector.broadcast %110 : vector<1x32xf32> to vector<16x32xf32>
    %130 = arith.addf %128, %129 : vector<16x32xf32>
    %c0_91 = arith.constant 0 : index
    %c0_92 = arith.constant 0 : index
    %c0_93 = arith.constant 0 : index
    %131 = vector.load %arg12[%c0_91, %c0_92, %c0_93] : memref<2x32x128xf32, #tpu.memory_space<vmem>>, vector<1x32x128xf32>
    %132 = vector.shape_cast %131 : vector<1x32x128xf32> to vector<32x128xf32>
    %cst_94 = arith.constant dense<0.000000e+00> : vector<16x128xf32>
    %133 = tpu.matmul %130, %132, %cst_94 {dimension_numbers = #tpu.dot_dimension_numbers<[1], [0], [0], [1], [0, 0, 1, 1], [], []>} : vector<16x32xf32>, vector<32x128xf32>, vector<16x128xf32> -> vector<16x128xf32>
    %c0_95 = arith.constant 0 : index
    %c0_96 = arith.constant 0 : index
    %c0_97 = arith.constant 0 : index
    %134 = vector.load %arg13[%c0_95, %c0_96, %c0_97] : memref<2x1x128xf32, #tpu.memory_space<vmem>>, vector<1x1x128xf32>
    %135 = vector.shape_cast %134 : vector<1x1x128xf32> to vector<1x128xf32>
    %136 = vector.broadcast %135 : vector<1x128xf32> to vector<16x128xf32>
    %137 = arith.addf %133, %136 : vector<16x128xf32>
    %cst_98 = arith.constant 5.000000e-01 : f32
    %138 = vector.broadcast %cst_98 : f32 to vector<16x128xf32>
    %139 = arith.mulf %138, %137 : vector<16x128xf32>
    %cst_99 = arith.constant 4.471500e-02 : f32
    %140 = vector.broadcast %cst_99 : f32 to vector<16x128xf32>
    %141 = arith.mulf %140, %137 : vector<16x128xf32>
    %142 = arith.mulf %141, %137 : vector<16x128xf32>
    %143 = arith.mulf %142, %137 : vector<16x128xf32>
    %144 = arith.addf %137, %143 : vector<16x128xf32>
    %cst_100 = arith.constant 0.797884583 : f32
    %145 = vector.broadcast %cst_100 : f32 to vector<16x128xf32>
    %146 = arith.mulf %145, %144 : vector<16x128xf32>
    %147 = math.tanh %146 : vector<16x128xf32>
    %cst_101 = arith.constant 1.000000e+00 : f32
    %148 = vector.broadcast %cst_101 : f32 to vector<16x128xf32>
    %149 = arith.addf %148, %147 : vector<16x128xf32>
    %150 = arith.mulf %139, %149 : vector<16x128xf32>
    %c0_102 = arith.constant 0 : index
    %c0_103 = arith.constant 0 : index
    %c0_104 = arith.constant 0 : index
    %151 = vector.load %arg14[%c0_102, %c0_103, %c0_104] : memref<2x128x32xf32, #tpu.memory_space<vmem>>, vector<1x128x32xf32>
    %152 = vector.shape_cast %151 : vector<1x128x32xf32> to vector<128x32xf32>
    %cst_105 = arith.constant dense<0.000000e+00> : vector<16x32xf32>
    %153 = tpu.matmul %150, %152, %cst_105 {dimension_numbers = #tpu.dot_dimension_numbers<[1], [0], [0], [1], [0, 0, 1, 1], [], []>} : vector<16x128xf32>, vector<128x32xf32>, vector<16x32xf32> -> vector<16x32xf32>
    %c0_106 = arith.constant 0 : index
    %c0_107 = arith.constant 0 : index
    %c0_108 = arith.constant 0 : index
    %154 = vector.load %arg15[%c0_106, %c0_107, %c0_108] : memref<2x1x32xf32, #tpu.memory_space<vmem>>, vector<1x1x32xf32>
    %155 = vector.shape_cast %154 : vector<1x1x32xf32> to vector<1x32xf32>
    %156 = vector.broadcast %155 : vector<1x32xf32> to vector<16x32xf32>
    %157 = arith.addf %153, %156 : vector<16x32xf32>
    %158 = arith.addf %130, %157 : vector<16x32xf32>
    %c0_109 = arith.constant 0 : index
    %c0_110 = arith.constant 0 : index
    %c0_111 = arith.constant 0 : index
    %159 = vector.load %arg16[%c0_109, %c0_110, %c0_111] : memref<2x1x32xf32, #tpu.memory_space<vmem>>, vector<1x1x32xf32>
    %160 = vector.shape_cast %159 : vector<1x1x32xf32> to vector<1x32xf32>
    %c0_112 = arith.constant 0 : index
    %c0_113 = arith.constant 0 : index
    %c0_114 = arith.constant 0 : index
    %161 = vector.load %arg17[%c0_112, %c0_113, %c0_114] : memref<2x1x32xf32, #tpu.memory_space<vmem>>, vector<1x1x32xf32>
    %162 = vector.shape_cast %161 : vector<1x1x32xf32> to vector<1x32xf32>
    %cst_115 = arith.constant dense<0.000000e+00> : vector<16xf32>
    %163 = vector.multi_reduction <add>, %158, %cst_115 [1] : vector<16x32xf32> to vector<16xf32>
    %164 = vector.shape_cast %163 : vector<16xf32> to vector<16x1xf32>
    %cst_116 = arith.constant 3.125000e-02 : f32
    %165 = vector.broadcast %cst_116 : f32 to vector<16x1xf32>
    %166 = arith.mulf %164, %165 : vector<16x1xf32>
    %167 = vector.broadcast %166 : vector<16x1xf32> to vector<16x32xf32>
    %168 = arith.subf %158, %167 : vector<16x32xf32>
    %169 = arith.mulf %168, %168 : vector<16x32xf32>
    %cst_117 = arith.constant dense<0.000000e+00> : vector<16xf32>
    %170 = vector.multi_reduction <add>, %169, %cst_117 [1] : vector<16x32xf32> to vector<16xf32>
    %171 = vector.shape_cast %170 : vector<16xf32> to vector<16x1xf32>
    %cst_118 = arith.constant 3.125000e-02 : f32
    %172 = vector.broadcast %cst_118 : f32 to vector<16x1xf32>
    %173 = arith.mulf %171, %172 : vector<16x1xf32>
    %cst_119 = arith.constant 9.99999974E-6 : f32
    %174 = vector.broadcast %cst_119 : f32 to vector<16x1xf32>
    %175 = arith.addf %173, %174 : vector<16x1xf32>
    %176 = math.rsqrt %175 : vector<16x1xf32>
    %177 = vector.broadcast %176 : vector<16x1xf32> to vector<16x32xf32>
    %178 = arith.mulf %168, %177 : vector<16x32xf32>
    %179 = vector.broadcast %160 : vector<1x32xf32> to vector<16x32xf32>
    %180 = arith.mulf %178, %179 : vector<16x32xf32>
    %181 = vector.broadcast %162 : vector<1x32xf32> to vector<16x32xf32>
    %182 = arith.addf %180, %181 : vector<16x32xf32>
    %c1 = arith.constant 1 : index
    %c0_120 = arith.constant 0 : index
    %c0_121 = arith.constant 0 : index
    %183 = vector.load %arg6[%c1, %c0_120, %c0_121] : memref<2x32x96xf32, #tpu.memory_space<vmem>>, vector<1x32x96xf32>
    %184 = vector.shape_cast %183 : vector<1x32x96xf32> to vector<32x96xf32>
    %cst_122 = arith.constant dense<0.000000e+00> : vector<16x96xf32>
    %185 = tpu.matmul %182, %184, %cst_122 {dimension_numbers = #tpu.dot_dimension_numbers<[1], [0], [0], [1], [0, 0, 1, 1], [], []>} : vector<16x32xf32>, vector<32x96xf32>, vector<16x96xf32> -> vector<16x96xf32>
    %c1_123 = arith.constant 1 : index
    %c0_124 = arith.constant 0 : index
    %c0_125 = arith.constant 0 : index
    %186 = vector.load %arg7[%c1_123, %c0_124, %c0_125] : memref<2x1x96xf32, #tpu.memory_space<vmem>>, vector<1x1x96xf32>
    %187 = vector.shape_cast %186 : vector<1x1x96xf32> to vector<1x96xf32>
    %188 = vector.broadcast %187 : vector<1x96xf32> to vector<16x96xf32>
    %189 = arith.addf %185, %188 : vector<16x96xf32>
    %190 = vector.extract_strided_slice %189 {offsets = [0, 0], sizes = [16, 8], strides = [1, 1]} : vector<16x96xf32> to vector<16x8xf32>
    %191 = vector.shape_cast %190 : vector<16x8xf32> to vector<2x8x8xf32>
    %c0_126 = arith.constant 0 : index
    %c0_127 = arith.constant 0 : index
    %c0_128 = arith.constant 0 : index
    %192 = vector.load %arg21[%c0_126, %c0_127, %c0_128] : memref<8x8x8xf32, #tpu.memory_space<vmem>>, vector<2x8x8xf32>
    tpu.vector_store %arg21[%c0_126, %c0_127, %c0_128], %191 {strides = array<i32>} : memref<8x8x8xf32, #tpu.memory_space<vmem>>, vector<2x8x8xf32>,
    %193 = vector.extract_strided_slice %189 {offsets = [0, 32], sizes = [16, 8], strides = [1, 1]} : vector<16x96xf32> to vector<16x8xf32>
    %194 = vector.shape_cast %193 : vector<16x8xf32> to vector<2x8x8xf32>
    %c0_129 = arith.constant 0 : index
    %c0_130 = arith.constant 0 : index
    %c0_131 = arith.constant 0 : index
    %195 = vector.load %arg22[%c0_129, %c0_130, %c0_131] : memref<8x8x8xf32, #tpu.memory_space<vmem>>, vector<2x8x8xf32>
    tpu.vector_store %arg22[%c0_129, %c0_130, %c0_131], %194 {strides = array<i32>} : memref<8x8x8xf32, #tpu.memory_space<vmem>>, vector<2x8x8xf32>,
    %196 = vector.extract_strided_slice %189 {offsets = [0, 64], sizes = [16, 8], strides = [1, 1]} : vector<16x96xf32> to vector<16x8xf32>
    %197 = vector.shape_cast %196 : vector<16x8xf32> to vector<2x8x8xf32>
    %c0_132 = arith.constant 0 : index
    %c0_133 = arith.constant 0 : index
    %c0_134 = arith.constant 0 : index
    %198 = vector.load %arg23[%c0_132, %c0_133, %c0_134] : memref<8x8x8xf32, #tpu.memory_space<vmem>>, vector<2x8x8xf32>
    tpu.vector_store %arg23[%c0_132, %c0_133, %c0_134], %197 {strides = array<i32>} : memref<8x8x8xf32, #tpu.memory_space<vmem>>, vector<2x8x8xf32>,
    %199 = vector.extract_strided_slice %189 {offsets = [0, 8], sizes = [16, 8], strides = [1, 1]} : vector<16x96xf32> to vector<16x8xf32>
    %200 = vector.shape_cast %199 : vector<16x8xf32> to vector<2x8x8xf32>
    %c2_135 = arith.constant 2 : index
    %c0_136 = arith.constant 0 : index
    %c0_137 = arith.constant 0 : index
    %201 = vector.load %arg21[%c2_135, %c0_136, %c0_137] : memref<8x8x8xf32, #tpu.memory_space<vmem>>, vector<2x8x8xf32>
    tpu.vector_store %arg21[%c2_135, %c0_136, %c0_137], %200 {strides = array<i32>} : memref<8x8x8xf32, #tpu.memory_space<vmem>>, vector<2x8x8xf32>,
    %202 = vector.extract_strided_slice %189 {offsets = [0, 40], sizes = [16, 8], strides = [1, 1]} : vector<16x96xf32> to vector<16x8xf32>
    %203 = vector.shape_cast %202 : vector<16x8xf32> to vector<2x8x8xf32>
    %c2_138 = arith.constant 2 : index
    %c0_139 = arith.constant 0 : index
    %c0_140 = arith.constant 0 : index
    %204 = vector.load %arg22[%c2_138, %c0_139, %c0_140] : memref<8x8x8xf32, #tpu.memory_space<vmem>>, vector<2x8x8xf32>
    tpu.vector_store %arg22[%c2_138, %c0_139, %c0_140], %203 {strides = array<i32>} : memref<8x8x8xf32, #tpu.memory_space<vmem>>, vector<2x8x8xf32>,
    %205 = vector.extract_strided_slice %189 {offsets = [0, 72], sizes = [16, 8], strides = [1, 1]} : vector<16x96xf32> to vector<16x8xf32>
    %206 = vector.shape_cast %205 : vector<16x8xf32> to vector<2x8x8xf32>
    %c2_141 = arith.constant 2 : index
    %c0_142 = arith.constant 0 : index
    %c0_143 = arith.constant 0 : index
    %207 = vector.load %arg23[%c2_141, %c0_142, %c0_143] : memref<8x8x8xf32, #tpu.memory_space<vmem>>, vector<2x8x8xf32>
    tpu.vector_store %arg23[%c2_141, %c0_142, %c0_143], %206 {strides = array<i32>} : memref<8x8x8xf32, #tpu.memory_space<vmem>>, vector<2x8x8xf32>,
    %208 = vector.extract_strided_slice %189 {offsets = [0, 16], sizes = [16, 8], strides = [1, 1]} : vector<16x96xf32> to vector<16x8xf32>
    %209 = vector.shape_cast %208 : vector<16x8xf32> to vector<2x8x8xf32>
    %c4_144 = arith.constant 4 : index
    %c0_145 = arith.constant 0 : index
    %c0_146 = arith.constant 0 : index
    %210 = vector.load %arg21[%c4_144, %c0_145, %c0_146] : memref<8x8x8xf32, #tpu.memory_space<vmem>>, vector<2x8x8xf32>
    tpu.vector_store %arg21[%c4_144, %c0_145, %c0_146], %209 {strides = array<i32>} : memref<8x8x8xf32, #tpu.memory_space<vmem>>, vector<2x8x8xf32>,
    %211 = vector.extract_strided_slice %189 {offsets = [0, 48], sizes = [16, 8], strides = [1, 1]} : vector<16x96xf32> to vector<16x8xf32>
    %212 = vector.shape_cast %211 : vector<16x8xf32> to vector<2x8x8xf32>
    %c4_147 = arith.constant 4 : index
    %c0_148 = arith.constant 0 : index
    %c0_149 = arith.constant 0 : index
    %213 = vector.load %arg22[%c4_147, %c0_148, %c0_149] : memref<8x8x8xf32, #tpu.memory_space<vmem>>, vector<2x8x8xf32>
    tpu.vector_store %arg22[%c4_147, %c0_148, %c0_149], %212 {strides = array<i32>} : memref<8x8x8xf32, #tpu.memory_space<vmem>>, vector<2x8x8xf32>,
    %214 = vector.extract_strided_slice %189 {offsets = [0, 80], sizes = [16, 8], strides = [1, 1]} : vector<16x96xf32> to vector<16x8xf32>
    %215 = vector.shape_cast %214 : vector<16x8xf32> to vector<2x8x8xf32>
    %c4_150 = arith.constant 4 : index
    %c0_151 = arith.constant 0 : index
    %c0_152 = arith.constant 0 : index
    %216 = vector.load %arg23[%c4_150, %c0_151, %c0_152] : memref<8x8x8xf32, #tpu.memory_space<vmem>>, vector<2x8x8xf32>
    tpu.vector_store %arg23[%c4_150, %c0_151, %c0_152], %215 {strides = array<i32>} : memref<8x8x8xf32, #tpu.memory_space<vmem>>, vector<2x8x8xf32>,
    %217 = vector.extract_strided_slice %189 {offsets = [0, 24], sizes = [16, 8], strides = [1, 1]} : vector<16x96xf32> to vector<16x8xf32>
    %218 = vector.shape_cast %217 : vector<16x8xf32> to vector<2x8x8xf32>
    %c6_153 = arith.constant 6 : index
    %c0_154 = arith.constant 0 : index
    %c0_155 = arith.constant 0 : index
    %219 = vector.load %arg21[%c6_153, %c0_154, %c0_155] : memref<8x8x8xf32, #tpu.memory_space<vmem>>, vector<2x8x8xf32>
    tpu.vector_store %arg21[%c6_153, %c0_154, %c0_155], %218 {strides = array<i32>} : memref<8x8x8xf32, #tpu.memory_space<vmem>>, vector<2x8x8xf32>,
    %220 = vector.extract_strided_slice %189 {offsets = [0, 56], sizes = [16, 8], strides = [1, 1]} : vector<16x96xf32> to vector<16x8xf32>
    %221 = vector.shape_cast %220 : vector<16x8xf32> to vector<2x8x8xf32>
    %c6_156 = arith.constant 6 : index
    %c0_157 = arith.constant 0 : index
    %c0_158 = arith.constant 0 : index
    %222 = vector.load %arg22[%c6_156, %c0_157, %c0_158] : memref<8x8x8xf32, #tpu.memory_space<vmem>>, vector<2x8x8xf32>
    tpu.vector_store %arg22[%c6_156, %c0_157, %c0_158], %221 {strides = array<i32>} : memref<8x8x8xf32, #tpu.memory_space<vmem>>, vector<2x8x8xf32>,
    %223 = vector.extract_strided_slice %189 {offsets = [0, 88], sizes = [16, 8], strides = [1, 1]} : vector<16x96xf32> to vector<16x8xf32>
    %224 = vector.shape_cast %223 : vector<16x8xf32> to vector<2x8x8xf32>
    %c6_159 = arith.constant 6 : index
    %c0_160 = arith.constant 0 : index
    %c0_161 = arith.constant 0 : index
    %225 = vector.load %arg23[%c6_159, %c0_160, %c0_161] : memref<8x8x8xf32, #tpu.memory_space<vmem>>, vector<2x8x8xf32>
    tpu.vector_store %arg23[%c6_159, %c0_160, %c0_161], %224 {strides = array<i32>} : memref<8x8x8xf32, #tpu.memory_space<vmem>>, vector<2x8x8xf32>,
    %c0_162 = arith.constant 0 : index
    %c0_163 = arith.constant 0 : index
    %c0_164 = arith.constant 0 : index
    %226 = vector.load %arg21[%c0_162, %c0_163, %c0_164] : memref<8x8x8xf32, #tpu.memory_space<vmem>>, vector<8x8x8xf32>
    %c0_165 = arith.constant 0 : index
    %c0_166 = arith.constant 0 : index
    %c0_167 = arith.constant 0 : index
    %227 = vector.load %arg22[%c0_165, %c0_166, %c0_167] : memref<8x8x8xf32, #tpu.memory_space<vmem>>, vector<8x8x8xf32>
    "tpu.trace_start"() <{level = 10 : i32, message = "bqd,bkd->bqk"}> : () -> ()
    %cst_168 = arith.constant dense<0.000000e+00> : vector<8x8x8xf32>
    %228 = tpu.matmul %226, %227, %cst_168 {dimension_numbers = #tpu.dot_dimension_numbers<[2], [2], [1], [1], [0, 0, 0, 1, 1, 1], [0], [0]>} : vector<8x8x8xf32>, vector<8x8x8xf32>, vector<8x8x8xf32> -> vector<8x8x8xf32>
    "tpu.trace_stop"() : () -> ()
    %cst_169 = arith.constant 0.353553385 : f32
    %229 = vector.broadcast %cst_169 : f32 to vector<8x8x8xf32>
    %230 = arith.mulf %228, %229 : vector<8x8x8xf32>
    %231 = vector.broadcast %23 : vector<8x1x8xf32> to vector<8x8x8xf32>
    %232 = arith.addf %230, %231 : vector<8x8x8xf32>
    %cst_170 = arith.constant dense<0xFF800000> : vector<8x8xf32>
    %233 = vector.multi_reduction <maximumf>, %232, %cst_170 [2] : vector<8x8x8xf32> to vector<8x8xf32>
    %234 = vector.shape_cast %233 : vector<8x8xf32> to vector<8x8x1xf32>
    %235 = vector.broadcast %234 : vector<8x8x1xf32> to vector<8x8x8xf32>
    %236 = arith.subf %232, %235 : vector<8x8x8xf32>
    %237 = math.exp %236 : vector<8x8x8xf32>
    %cst_171 = arith.constant dense<0.000000e+00> : vector<8x8xf32>
    %238 = vector.multi_reduction <add>, %237, %cst_171 [2] : vector<8x8x8xf32> to vector<8x8xf32>
    %239 = vector.shape_cast %238 : vector<8x8xf32> to vector<8x8x1xf32>
    %240 = tpu.reciprocal %239 {approx = true} : vector<8x8x1xf32> -> vector<8x8x1xf32>
    %241 = vector.broadcast %240 : vector<8x8x1xf32> to vector<8x8x8xf32>
    %242 = arith.mulf %237, %241 : vector<8x8x8xf32>
    %c0_172 = arith.constant 0 : index
    %c0_173 = arith.constant 0 : index
    %c0_174 = arith.constant 0 : index
    %243 = vector.load %arg23[%c0_172, %c0_173, %c0_174] : memref<8x8x8xf32, #tpu.memory_space<vmem>>, vector<8x8x8xf32>
    "tpu.trace_start"() <{level = 10 : i32, message = "bqk,bkd->bqd"}> : () -> ()
    %cst_175 = arith.constant dense<0.000000e+00> : vector<8x8x8xf32>
    %244 = tpu.matmul %242, %243, %cst_175 {dimension_numbers = #tpu.dot_dimension_numbers<[2], [1], [1], [2], [0, 0, 0, 1, 1, 2], [0], [0]>} : vector<8x8x8xf32>, vector<8x8x8xf32>, vector<8x8x8xf32> -> vector<8x8x8xf32>
    "tpu.trace_stop"() : () -> ()
    %245 = vector.extract_strided_slice %244 {offsets = [0, 0, 0], sizes = [2, 8, 8], strides = [1, 1, 1]} : vector<8x8x8xf32> to vector<2x8x8xf32>
    %246 = vector.shape_cast %245 : vector<2x8x8xf32> to vector<16x8xf32>
    %c0_176 = arith.constant 0 : index
    %c0_177 = arith.constant 0 : index
    %247 = vector.load %arg24[%c0_176, %c0_177] : memref<16x32xf32, #tpu.memory_space<vmem>>, vector<16x8xf32>
    tpu.vector_store %arg24[%c0_176, %c0_177], %246 {strides = array<i32>} : memref<16x32xf32, #tpu.memory_space<vmem>>, vector<16x8xf32>,
    %248 = vector.extract_strided_slice %244 {offsets = [2, 0, 0], sizes = [2, 8, 8], strides = [1, 1, 1]} : vector<8x8x8xf32> to vector<2x8x8xf32>
    %249 = vector.shape_cast %248 : vector<2x8x8xf32> to vector<16x8xf32>
    %c0_178 = arith.constant 0 : index
    %c8_179 = arith.constant 8 : index
    %250 = vector.load %arg24[%c0_178, %c8_179] : memref<16x32xf32, #tpu.memory_space<vmem>>, vector<16x8xf32>
    tpu.vector_store %arg24[%c0_178, %c8_179], %249 {strides = array<i32>} : memref<16x32xf32, #tpu.memory_space<vmem>>, vector<16x8xf32>,
    %251 = vector.extract_strided_slice %244 {offsets = [4, 0, 0], sizes = [2, 8, 8], strides = [1, 1, 1]} : vector<8x8x8xf32> to vector<2x8x8xf32>
    %252 = vector.shape_cast %251 : vector<2x8x8xf32> to vector<16x8xf32>
    %c0_180 = arith.constant 0 : index
    %c16_181 = arith.constant 16 : index
    %253 = vector.load %arg24[%c0_180, %c16_181] : memref<16x32xf32, #tpu.memory_space<vmem>>, vector<16x8xf32>
    tpu.vector_store %arg24[%c0_180, %c16_181], %252 {strides = array<i32>} : memref<16x32xf32, #tpu.memory_space<vmem>>, vector<16x8xf32>,
    %254 = vector.extract_strided_slice %244 {offsets = [6, 0, 0], sizes = [2, 8, 8], strides = [1, 1, 1]} : vector<8x8x8xf32> to vector<2x8x8xf32>
    %255 = vector.shape_cast %254 : vector<2x8x8xf32> to vector<16x8xf32>
    %c0_182 = arith.constant 0 : index
    %c24_183 = arith.constant 24 : index
    %256 = vector.load %arg24[%c0_182, %c24_183] : memref<16x32xf32, #tpu.memory_space<vmem>>, vector<16x8xf32>
    tpu.vector_store %arg24[%c0_182, %c24_183], %255 {strides = array<i32>} : memref<16x32xf32, #tpu.memory_space<vmem>>, vector<16x8xf32>,
    %c0_184 = arith.constant 0 : index
    %c0_185 = arith.constant 0 : index
    %257 = vector.load %arg24[%c0_184, %c0_185] : memref<16x32xf32, #tpu.memory_space<vmem>>, vector<16x32xf32>
    %c1_186 = arith.constant 1 : index
    %c0_187 = arith.constant 0 : index
    %c0_188 = arith.constant 0 : index
    %258 = vector.load %arg8[%c1_186, %c0_187, %c0_188] : memref<2x32x32xf32, #tpu.memory_space<vmem>>, vector<1x32x32xf32>
    %259 = vector.shape_cast %258 : vector<1x32x32xf32> to vector<32x32xf32>
    %cst_189 = arith.constant dense<0.000000e+00> : vector<16x32xf32>
    %260 = tpu.matmul %257, %259, %cst_189 {dimension_numbers = #tpu.dot_dimension_numbers<[1], [0], [0], [1], [0, 0, 1, 1], [], []>} : vector<16x32xf32>, vector<32x32xf32>, vector<16x32xf32> -> vector<16x32xf32>
    %c1_190 = arith.constant 1 : index
    %c0_191 = arith.constant 0 : index
    %c0_192 = arith.constant 0 : index
    %261 = vector.load %arg9[%c1_190, %c0_191, %c0_192] : memref<2x1x32xf32, #tpu.memory_space<vmem>>, vector<1x1x32xf32>
    %262 = vector.shape_cast %261 : vector<1x1x32xf32> to vector<1x32xf32>
    %263 = vector.broadcast %262 : vector<1x32xf32> to vector<16x32xf32>
    %264 = arith.addf %260, %263 : vector<16x32xf32>
    %265 = arith.addf %182, %264 : vector<16x32xf32>
    %c1_193 = arith.constant 1 : index
    %c0_194 = arith.constant 0 : index
    %c0_195 = arith.constant 0 : index
    %266 = vector.load %arg10[%c1_193, %c0_194, %c0_195] : memref<2x1x32xf32, #tpu.memory_space<vmem>>, vector<1x1x32xf32>
    %267 = vector.shape_cast %266 : vector<1x1x32xf32> to vector<1x32xf32>
    %c1_196 = arith.constant 1 : index
    %c0_197 = arith.constant 0 : index
    %c0_198 = arith.constant 0 : index
    %268 = vector.load %arg11[%c1_196, %c0_197, %c0_198] : memref<2x1x32xf32, #tpu.memory_space<vmem>>, vector<1x1x32xf32>
    %269 = vector.shape_cast %268 : vector<1x1x32xf32> to vector<1x32xf32>
    %cst_199 = arith.constant dense<0.000000e+00> : vector<16xf32>
    %270 = vector.multi_reduction <add>, %265, %cst_199 [1] : vector<16x32xf32> to vector<16xf32>
    %271 = vector.shape_cast %270 : vector<16xf32> to vector<16x1xf32>
    %cst_200 = arith.constant 3.125000e-02 : f32
    %272 = vector.broadcast %cst_200 : f32 to vector<16x1xf32>
    %273 = arith.mulf %271, %272 : vector<16x1xf32>
    %274 = vector.broadcast %273 : vector<16x1xf32> to vector<16x32xf32>
    %275 = arith.subf %265, %274 : vector<16x32xf32>
    %276 = arith.mulf %275, %275 : vector<16x32xf32>
    %cst_201 = arith.constant dense<0.000000e+00> : vector<16xf32>
    %277 = vector.multi_reduction <add>, %276, %cst_201 [1] : vector<16x32xf32> to vector<16xf32>
    %278 = vector.shape_cast %277 : vector<16xf32> to vector<16x1xf32>
    %cst_202 = arith.constant 3.125000e-02 : f32
    %279 = vector.broadcast %cst_202 : f32 to vector<16x1xf32>
    %280 = arith.mulf %278, %279 : vector<16x1xf32>
    %cst_203 = arith.constant 9.99999974E-6 : f32
    %281 = vector.broadcast %cst_203 : f32 to vector<16x1xf32>
    %282 = arith.addf %280, %281 : vector<16x1xf32>
    %283 = math.rsqrt %282 : vector<16x1xf32>
    %284 = vector.broadcast %283 : vector<16x1xf32> to vector<16x32xf32>
    %285 = arith.mulf %275, %284 : vector<16x32xf32>
    %286 = vector.broadcast %267 : vector<1x32xf32> to vector<16x32xf32>
    %287 = arith.mulf %285, %286 : vector<16x32xf32>
    %288 = vector.broadcast %269 : vector<1x32xf32> to vector<16x32xf32>
    %289 = arith.addf %287, %288 : vector<16x32xf32>
    %c1_204 = arith.constant 1 : index
    %c0_205 = arith.constant 0 : index
    %c0_206 = arith.constant 0 : index
    %290 = vector.load %arg12[%c1_204, %c0_205, %c0_206] : memref<2x32x128xf32, #tpu.memory_space<vmem>>, vector<1x32x128xf32>
    %291 = vector.shape_cast %290 : vector<1x32x128xf32> to vector<32x128xf32>
    %cst_207 = arith.constant dense<0.000000e+00> : vector<16x128xf32>
    %292 = tpu.matmul %289, %291, %cst_207 {dimension_numbers = #tpu.dot_dimension_numbers<[1], [0], [0], [1], [0, 0, 1, 1], [], []>} : vector<16x32xf32>, vector<32x128xf32>, vector<16x128xf32> -> vector<16x128xf32>
    %c1_208 = arith.constant 1 : index
    %c0_209 = arith.constant 0 : index
    %c0_210 = arith.constant 0 : index
    %293 = vector.load %arg13[%c1_208, %c0_209, %c0_210] : memref<2x1x128xf32, #tpu.memory_space<vmem>>, vector<1x1x128xf32>
    %294 = vector.shape_cast %293 : vector<1x1x128xf32> to vector<1x128xf32>
    %295 = vector.broadcast %294 : vector<1x128xf32> to vector<16x128xf32>
    %296 = arith.addf %292, %295 : vector<16x128xf32>
    %cst_211 = arith.constant 5.000000e-01 : f32
    %297 = vector.broadcast %cst_211 : f32 to vector<16x128xf32>
    %298 = arith.mulf %297, %296 : vector<16x128xf32>
    %cst_212 = arith.constant 4.471500e-02 : f32
    %299 = vector.broadcast %cst_212 : f32 to vector<16x128xf32>
    %300 = arith.mulf %299, %296 : vector<16x128xf32>
    %301 = arith.mulf %300, %296 : vector<16x128xf32>
    %302 = arith.mulf %301, %296 : vector<16x128xf32>
    %303 = arith.addf %296, %302 : vector<16x128xf32>
    %cst_213 = arith.constant 0.797884583 : f32
    %304 = vector.broadcast %cst_213 : f32 to vector<16x128xf32>
    %305 = arith.mulf %304, %303 : vector<16x128xf32>
    %306 = math.tanh %305 : vector<16x128xf32>
    %cst_214 = arith.constant 1.000000e+00 : f32
    %307 = vector.broadcast %cst_214 : f32 to vector<16x128xf32>
    %308 = arith.addf %307, %306 : vector<16x128xf32>
    %309 = arith.mulf %298, %308 : vector<16x128xf32>
    %c1_215 = arith.constant 1 : index
    %c0_216 = arith.constant 0 : index
    %c0_217 = arith.constant 0 : index
    %310 = vector.load %arg14[%c1_215, %c0_216, %c0_217] : memref<2x128x32xf32, #tpu.memory_space<vmem>>, vector<1x128x32xf32>
    %311 = vector.shape_cast %310 : vector<1x128x32xf32> to vector<128x32xf32>
    %cst_218 = arith.constant dense<0.000000e+00> : vector<16x32xf32>
    %312 = tpu.matmul %309, %311, %cst_218 {dimension_numbers = #tpu.dot_dimension_numbers<[1], [0], [0], [1], [0, 0, 1, 1], [], []>} : vector<16x128xf32>, vector<128x32xf32>, vector<16x32xf32> -> vector<16x32xf32>
    %c1_219 = arith.constant 1 : index
    %c0_220 = arith.constant 0 : index
    %c0_221 = arith.constant 0 : index
    %313 = vector.load %arg15[%c1_219, %c0_220, %c0_221] : memref<2x1x32xf32, #tpu.memory_space<vmem>>, vector<1x1x32xf32>
    %314 = vector.shape_cast %313 : vector<1x1x32xf32> to vector<1x32xf32>
    %315 = vector.broadcast %314 : vector<1x32xf32> to vector<16x32xf32>
    %316 = arith.addf %312, %315 : vector<16x32xf32>
    %317 = arith.addf %289, %316 : vector<16x32xf32>
    %c1_222 = arith.constant 1 : index
    %c0_223 = arith.constant 0 : index
    %c0_224 = arith.constant 0 : index
    %318 = vector.load %arg16[%c1_222, %c0_223, %c0_224] : memref<2x1x32xf32, #tpu.memory_space<vmem>>, vector<1x1x32xf32>
    %319 = vector.shape_cast %318 : vector<1x1x32xf32> to vector<1x32xf32>
    %c1_225 = arith.constant 1 : index
    %c0_226 = arith.constant 0 : index
    %c0_227 = arith.constant 0 : index
    %320 = vector.load %arg17[%c1_225, %c0_226, %c0_227] : memref<2x1x32xf32, #tpu.memory_space<vmem>>, vector<1x1x32xf32>
    %321 = vector.shape_cast %320 : vector<1x1x32xf32> to vector<1x32xf32>
    %cst_228 = arith.constant dense<0.000000e+00> : vector<16xf32>
    %322 = vector.multi_reduction <add>, %317, %cst_228 [1] : vector<16x32xf32> to vector<16xf32>
    %323 = vector.shape_cast %322 : vector<16xf32> to vector<16x1xf32>
    %cst_229 = arith.constant 3.125000e-02 : f32
    %324 = vector.broadcast %cst_229 : f32 to vector<16x1xf32>
    %325 = arith.mulf %323, %324 : vector<16x1xf32>
    %326 = vector.broadcast %325 : vector<16x1xf32> to vector<16x32xf32>
    %327 = arith.subf %317, %326 : vector<16x32xf32>
    %328 = arith.mulf %327, %327 : vector<16x32xf32>
    %cst_230 = arith.constant dense<0.000000e+00> : vector<16xf32>
    %329 = vector.multi_reduction <add>, %328, %cst_230 [1] : vector<16x32xf32> to vector<16xf32>
    %330 = vector.shape_cast %329 : vector<16xf32> to vector<16x1xf32>
    %cst_231 = arith.constant 3.125000e-02 : f32
    %331 = vector.broadcast %cst_231 : f32 to vector<16x1xf32>
    %332 = arith.mulf %330, %331 : vector<16x1xf32>
    %cst_232 = arith.constant 9.99999974E-6 : f32
    %333 = vector.broadcast %cst_232 : f32 to vector<16x1xf32>
    %334 = arith.addf %332, %333 : vector<16x1xf32>
    %335 = math.rsqrt %334 : vector<16x1xf32>
    %336 = vector.broadcast %335 : vector<16x1xf32> to vector<16x32xf32>
    %337 = arith.mulf %327, %336 : vector<16x32xf32>
    %338 = vector.broadcast %319 : vector<1x32xf32> to vector<16x32xf32>
    %339 = arith.mulf %337, %338 : vector<16x32xf32>
    %340 = vector.broadcast %321 : vector<1x32xf32> to vector<16x32xf32>
    %341 = arith.addf %339, %340 : vector<16x32xf32>
    %c0_233 = arith.constant 0 : index
    %c0_234 = arith.constant 0 : index
    %342 = vector.load %arg18[%c0_233, %c0_234] : memref<32x128xf32, #tpu.memory_space<vmem>>, vector<32x128xf32>
    %cst_235 = arith.constant dense<0.000000e+00> : vector<16x128xf32>
    %343 = tpu.matmul %341, %342, %cst_235 {dimension_numbers = #tpu.dot_dimension_numbers<[1], [0], [0], [1], [0, 0, 1, 1], [], []>} : vector<16x32xf32>, vector<32x128xf32>, vector<16x128xf32> -> vector<16x128xf32>
    %c0_236 = arith.constant 0 : index
    %c0_237 = arith.constant 0 : index
    %344 = vector.load %arg19[%c0_236, %c0_237] : memref<1x128xf32, #tpu.memory_space<vmem>>, vector<1x128xf32>
    %345 = vector.broadcast %344 : vector<1x128xf32> to vector<16x128xf32>
    %346 = arith.addf %343, %345 : vector<16x128xf32>
    %c0_238 = arith.constant 0 : index
    %c0_239 = arith.constant 0 : index
    %347 = vector.load %arg3[%c0_238, %c0_239] : memref<16x1xf32, #tpu.memory_space<vmem>>, vector<16x1xf32>
    %cst_240 = arith.constant 0.000000e+00 : f32
    %348 = vector.broadcast %cst_240 : f32 to vector<16x1xf32>
    %349 = arith.cmpf oeq, %347, %348 : vector<16x1xf32>
    %cst_241 = arith.constant -1.000000e+00 : f32
    %350 = vector.shape_cast %349 : vector<16x1xi1> to vector<16x1xi1>
    %351 = vector.broadcast %350 : vector<16x1xi1> to vector<16x128xi1>
    %352 = vector.broadcast %cst_241 : f32 to vector<16x128xf32>
    %353 = arith.select %351, %352, %346 : vector<16x128xi1>, vector<16x128xf32>
    %c0_242 = arith.constant 0 : index
    %c0_243 = arith.constant 0 : index
    %354 = vector.load %arg20[%c0_242, %c0_243] : memref<16x128xf32, #tpu.memory_space<vmem>>, vector<16x128xf32>
    tpu.vector_store %arg20[%c0_242, %c0_243], %353 {strides = array<i32>} : memref<16x128xf32, #tpu.memory_space<vmem>>, vector<16x128xf32>,
    return
  }
  func.func @transform_0(%arg0: i32) -> (i32, i32) {
    %c0_i32 = arith.constant 0 : i32
    %c0_i32_0 = arith.constant 0 : i32
    %c0_i32_1 = arith.constant 0 : i32
    return %c0_i32, %c0_i32_0 : i32, i32
  }
  func.func @transform_1(%arg0: i32) -> (i32, i32, i32) {
    %c0_i32 = arith.constant 0 : i32
    %c0_i32_0 = arith.constant 0 : i32
    %c0_i32_1 = arith.constant 0 : i32
    %c0_i32_2 = arith.constant 0 : i32
    return %c0_i32, %c0_i32_0, %c0_i32_1 : i32, i32, i32
  }
  func.func @transform_2(%arg0: i32) -> (i32, i32) {
    %c0_i32 = arith.constant 0 : i32
    %c0_i32_0 = arith.constant 0 : i32
    %c0_i32_1 = arith.constant 0 : i32
    return %c0_i32, %c0_i32_0 : i32, i32
  }
  func.func @transform_3(%arg0: i32) -> (i32, i32) {
    %c0_i32 = arith.constant 0 : i32
    %c0_i32_0 = arith.constant 0 : i32
    %c0_i32_1 = arith.constant 0 : i32
    return %c0_i32, %c0_i32_0 : i32, i32
  }
  func.func @transform_4(%arg0: i32) -> (i32, i32) {
    %c0_i32 = arith.constant 0 : i32
    %c0_i32_0 = arith.constant 0 : i32
    %c0_i32_1 = arith.constant 0 : i32
    return %c0_i32, %c0_i32_0 : i32, i32
  }
  func.func @transform_5(%arg0: i32) -> (i32, i32, i32) {
    %c0_i32 = arith.constant 0 : i32
    %c0_i32_0 = arith.constant 0 : i32
    %c0_i32_1 = arith.constant 0 : i32
    %c0_i32_2 = arith.constant 0 : i32
    return %c0_i32, %c0_i32_0, %c0_i32_1 : i32, i32, i32
  }
  func.func @transform_6(%arg0: i32) -> (i32, i32, i32) {
    %c0_i32 = arith.constant 0 : i32
    %c0_i32_0 = arith.constant 0 : i32
    %c0_i32_1 = arith.constant 0 : i32
    %c0_i32_2 = arith.constant 0 : i32
    return %c0_i32, %c0_i32_0, %c0_i32_1 : i32, i32, i32
  }
  func.func @transform_7(%arg0: i32) -> (i32, i32, i32) {
    %c0_i32 = arith.constant 0 : i32
    %c0_i32_0 = arith.constant 0 : i32
    %c0_i32_1 = arith.constant 0 : i32
    %c0_i32_2 = arith.constant 0 : i32
    return %c0_i32, %c0_i32_0, %c0_i32_1 : i32, i32, i32
  }
  func.func @transform_8(%arg0: i32) -> (i32, i32, i32) {
    %c0_i32 = arith.constant 0 : i32
    %c0_i32_0 = arith.constant 0 : i32
    %c0_i32_1 = arith.constant 0 : i32
    %c0_i32_2 = arith.constant 0 : i32
    return %c0_i32, %c0_i32_0, %c0_i32_1 : i32, i32, i32
  }
  func.func @transform_9(%arg0: i32) -> (i32, i32, i32) {
    %c0_i32 = arith.constant 0 : i32
    %c0_i32_0 = arith.constant 0 : i32
    %c0_i32_1 = arith.constant 0 : i32
    %c0_i32_2 = arith.constant 0 : i32
    return %c0_i32, %c0_i32_0, %c0_i32_1 : i32, i32, i32
  }
  func.func @transform_10(%arg0: i32) -> (i32, i32, i32) {
    %c0_i32 = arith.constant 0 : i32
    %c0_i32_0 = arith.constant 0 : i32
    %c0_i32_1 = arith.constant 0 : i32
    %c0_i32_2 = arith.constant 0 : i32
    return %c0_i32, %c0_i32_0, %c0_i32_1 : i32, i32, i32
  }
  func.func @transform_11(%arg0: i32) -> (i32, i32, i32) {
    %c0_i32 = arith.constant 0 : i32
    %c0_i32_0 = arith.constant 0 : i32
    %c0_i32_1 = arith.constant 0 : i32
    %c0_i32_2 = arith.constant 0 : i32
    return %c0_i32, %c0_i32_0, %c0_i32_1 : i32, i32, i32
  }
  func.func @transform_12(%arg0: i32) -> (i32, i32, i32) {
    %c0_i32 = arith.constant 0 : i32
    %c0_i32_0 = arith.constant 0 : i32
    %c0_i32_1 = arith.constant 0 : i32
    %c0_i32_2 = arith.constant 0 : i32
    return %c0_i32, %c0_i32_0, %c0_i32_1 : i32, i32, i32
  }
  func.func @transform_13(%arg0: i32) -> (i32, i32, i32) {
    %c0_i32 = arith.constant 0 : i32
    %c0_i32_0 = arith.constant 0 : i32
    %c0_i32_1 = arith.constant 0 : i32
    %c0_i32_2 = arith.constant 0 : i32
    return %c0_i32, %c0_i32_0, %c0_i32_1 : i32, i32, i32
  }
  func.func @transform_14(%arg0: i32) -> (i32, i32, i32) {
    %c0_i32 = arith.constant 0 : i32
    %c0_i32_0 = arith.constant 0 : i32
    %c0_i32_1 = arith.constant 0 : i32
    %c0_i32_2 = arith.constant 0 : i32
    return %c0_i32, %c0_i32_0, %c0_i32_1 : i32, i32, i32
  }
  func.func @transform_15(%arg0: i32) -> (i32, i32, i32) {
    %c0_i32 = arith.constant 0 : i32
    %c0_i32_0 = arith.constant 0 : i32
    %c0_i32_1 = arith.constant 0 : i32
    %c0_i32_2 = arith.constant 0 : i32
    return %c0_i32, %c0_i32_0, %c0_i32_1 : i32, i32, i32
  }
  func.func @transform_16(%arg0: i32) -> (i32, i32, i32) {
    %c0_i32 = arith.constant 0 : i32
    %c0_i32_0 = arith.constant 0 : i32
    %c0_i32_1 = arith.constant 0 : i32
    %c0_i32_2 = arith.constant 0 : i32
    return %c0_i32, %c0_i32_0, %c0_i32_1 : i32, i32, i32
  }
  func.func @transform_17(%arg0: i32) -> (i32, i32) {
    %c0_i32 = arith.constant 0 : i32
    %c0_i32_0 = arith.constant 0 : i32
    %c0_i32_1 = arith.constant 0 : i32
    return %c0_i32, %c0_i32_0 : i32, i32
  }
  func.func @transform_18(%arg0: i32) -> (i32, i32) {
    %c0_i32 = arith.constant 0 : i32
    %c0_i32_0 = arith.constant 0 : i32
    %c0_i32_1 = arith.constant 0 : i32
    return %c0_i32, %c0_i32_0 : i32, i32
  }
  func.func @transform_19(%arg0: i32) -> (i32, i32) {
    %c0_i32 = arith.constant 0 : i32
    %c0_i32_0 = arith.constant 0 : i32
    %c0_i32_1 = arith.constant 0 : i32
    return %c0_i32, %c0_i32_0 : i32, i32
  }
}

</mosaic_0001>

<llo_original>
// kernel: tpu_custom_call.1
$region0: #{tpu_custom_call.1}
  #allocation0 [shape = 'u32[]', space=smem, size = 0x4, offset = 0x4, fixed_abs, tag = 'smem constant byte address 0x4 - core index']
  #allocation1 [shape = 'u32[144,128]{1,0:T(1,128)}', space=vmem, size = 0x12000, scoped, tag = 'internal scratch']
  #allocation2 [shape = 'f32[8,8,8]{2,1,0:T(8,128)}', space=vmem, size = 0x8000, scoped, tag = 'scratch operand']
  #allocation3 [shape = 'f32[8,8,8]{2,1,0:T(8,128)}', space=vmem, size = 0x8000, scoped, tag = 'scratch operand']
  #allocation4 [shape = 'f32[8,8,8]{2,1,0:T(8,128)}', space=vmem, size = 0x8000, scoped, tag = 'scratch operand']
  #allocation5 [shape = 'f32[16,32]{1,0:T(8,128)}', space=vmem, size = 0x2000, scoped, tag = 'scratch operand']
  %s0 = inlined_call_operand.vmem [shape: f32[16,32], index: 0, kind: input, shape index: {}]
  %s1 = inlined_call_operand.vmem [shape: f32[8,1,8], index: 1, kind: input, shape index: {}]
  %s2 = inlined_call_operand.vmem [shape: f32[16,1], index: 2, kind: input, shape index: {}]
  %s3 = inlined_call_operand.vmem [shape: f32[1,32], index: 3, kind: input, shape index: {}]
  %s4 = inlined_call_operand.vmem [shape: f32[1,32], index: 4, kind: input, shape index: {}]
  %s5 = inlined_call_operand.vmem [shape: f32[2,32,96], index: 5, kind: input, shape index: {}]
  %s6 = inlined_call_operand.vmem [shape: f32[2,1,96], index: 6, kind: input, shape index: {}]
  %s7 = inlined_call_operand.vmem [shape: f32[2,32,32], index: 7, kind: input, shape index: {}]
  %s8 = inlined_call_operand.vmem [shape: f32[2,1,32], index: 8, kind: input, shape index: {}]
  %s9 = inlined_call_operand.vmem [shape: f32[2,1,32], index: 9, kind: input, shape index: {}]
  %s10 = inlined_call_operand.vmem [shape: f32[2,1,32], index: 10, kind: input, shape index: {}]
  %s11 = inlined_call_operand.vmem [shape: f32[2,32,128], index: 11, kind: input, shape index: {}]
  %s12 = inlined_call_operand.vmem [shape: f32[2,1,128], index: 12, kind: input, shape index: {}]
  %s13 = inlined_call_operand.vmem [shape: f32[2,128,32], index: 13, kind: input, shape index: {}]
  %s14 = inlined_call_operand.vmem [shape: f32[2,1,32], index: 14, kind: input, shape index: {}]
  %s15 = inlined_call_operand.vmem [shape: f32[2,1,32], index: 15, kind: input, shape index: {}]
  %s16 = inlined_call_operand.vmem [shape: f32[2,1,32], index: 16, kind: input, shape index: {}]
  %s17 = inlined_call_operand.vmem [shape: f32[32,128], index: 17, kind: input, shape index: {}]
  %s18 = inlined_call_operand.vmem [shape: f32[1,128], index: 18, kind: input, shape index: {}]
  %s19 = inlined_call_operand.hbm [shape: f32[16,128], index: 19, kind: output, shape index: {}]
  %s20 = sld [smem:[#allocation0]]
  $region86: #{tpu_custom_call.1} parent=0
    _
  %s22 = ssub.s32 1, %s20
  %s23 = scalar_select 0, %s22, %s20
  $region1: #{tpu_custom_call.1} parent=0
    #allocation6 [shape = 'u8[8192]{0}', space=vmem, size = 0x2000, scoped, tag = 'output window, operand 0, single buffered']
    #allocation7 [shape = 's32[1]{0}', space=sflag, size = 0x4, scoped, tag = 'scoped memory for tpu_custom_call.1']
    %24 = vsyncpa [#allocation7], 0
    // Predicated region
    $region2: #{tpu_custom_call.1} parent=1 // pred_check
      _
    $region3: #{tpu_custom_call.1} parent=1 // pred_check_branch
      %26 = sbr.rel (0) target = $region5
    $region4: #{tpu_custom_call.1} parent=1 // pred_region
      _
    $region5: #{tpu_custom_call.1} parent=1 // pred_fallthru
      _
    // Predicated region
    $region6: #{tpu_custom_call.1} parent=1 // pred_check
      _
    $region7: #{tpu_custom_call.1} parent=1 // pred_check_branch
      %28 = sbr.rel (0) target = $region9
    $region8: #{tpu_custom_call.1} parent=1 // pred_region
      _
    $region9: #{tpu_custom_call.1} parent=1 // pred_fallthru
      _
    // Predicated region
    $region10: #{tpu_custom_call.1} parent=1 // pred_check
      _
    $region11: #{tpu_custom_call.1} parent=1 // pred_check_branch
      %30 = sbr.rel (0) target = $region13
    $region12: #{tpu_custom_call.1} parent=1 // pred_region
      _
    $region13: #{tpu_custom_call.1} parent=1 // pred_fallthru
      _
    // Predicated region
    $region14: #{tpu_custom_call.1} parent=1 // pred_check
      _
    $region15: #{tpu_custom_call.1} parent=1 // pred_check_branch
      %32 = sbr.rel (0) target = $region17
    $region16: #{tpu_custom_call.1} parent=1 // pred_region
      _
    $region17: #{tpu_custom_call.1} parent=1 // pred_fallthru
      _
    // Predicated region
    $region18: #{tpu_custom_call.1} parent=1 // pred_check
      _
    $region19: #{tpu_custom_call.1} parent=1 // pred_check_branch
      %34 = sbr.rel (0) target = $region21
    $region20: #{tpu_custom_call.1} parent=1 // pred_region
      _
    $region21: #{tpu_custom_call.1} parent=1 // pred_fallthru
      _
    // Predicated region
    $region22: #{tpu_custom_call.1} parent=1 // pred_check
      _
    $region23: #{tpu_custom_call.1} parent=1 // pred_check_branch
      %36 = sbr.rel (0) target = $region25
    $region24: #{tpu_custom_call.1} parent=1 // pred_region
      _
    $region25: #{tpu_custom_call.1} parent=1 // pred_fallthru
      _
    // Predicated region
    $region26: #{tpu_custom_call.1} parent=1 // pred_check
      _
    $region27: #{tpu_custom_call.1} parent=1 // pred_check_branch
      %38 = sbr.rel (0) target = $region29
    $region28: #{tpu_custom_call.1} parent=1 // pred_region
      _
    $region29: #{tpu_custom_call.1} parent=1 // pred_fallthru
      _
    // Predicated region
    $region30: #{tpu_custom_call.1} parent=1 // pred_check
      _
    $region31: #{tpu_custom_call.1} parent=1 // pred_check_branch
      %40 = sbr.rel (0) target = $region33
    $region32: #{tpu_custom_call.1} parent=1 // pred_region
      _
    $region33: #{tpu_custom_call.1} parent=1 // pred_fallthru
      _
    // Predicated region
    $region34: #{tpu_custom_call.1} parent=1 // pred_check
      _
    $region35: #{tpu_custom_call.1} parent=1 // pred_check_branch
      %42 = sbr.rel (0) target = $region37
    $region36: #{tpu_custom_call.1} parent=1 // pred_region
      _
    $region37: #{tpu_custom_call.1} parent=1 // pred_fallthru
      _
    // Predicated region
    $region38: #{tpu_custom_call.1} parent=1 // pred_check
      _
    $region39: #{tpu_custom_call.1} parent=1 // pred_check_branch
      %44 = sbr.rel (0) target = $region41
    $region40: #{tpu_custom_call.1} parent=1 // pred_region
      _
    $region41: #{tpu_custom_call.1} parent=1 // pred_fallthru
      _
    // Predicated region
    $region42: #{tpu_custom_call.1} parent=1 // pred_check
      _
    $region43: #{tpu_custom_call.1} parent=1 // pred_check_branch
      %46 = sbr.rel (0) target = $region45
    $region44: #{tpu_custom_call.1} parent=1 // pred_region
      _
    $region45: #{tpu_custom_call.1} parent=1 // pred_fallthru
      _
    // Predicated region
    $region46: #{tpu_custom_call.1} parent=1 // pred_check
      _
    $region47: #{tpu_custom_call.1} parent=1 // pred_check_branch
      %48 = sbr.rel (0) target = $region49
    $region48: #{tpu_custom_call.1} parent=1 // pred_region
      _
    $region49: #{tpu_custom_call.1} parent=1 // pred_fallthru
      _
    // Predicated region
    $region50: #{tpu_custom_call.1} parent=1 // pred_check
      _
    $region51: #{tpu_custom_call.1} parent=1 // pred_check_branch
      %50 = sbr.rel (0) target = $region53
    $region52: #{tpu_custom_call.1} parent=1 // pred_region
      _
    $region53: #{tpu_custom_call.1} parent=1 // pred_fallthru
      _
    // Predicated region
    $region54: #{tpu_custom_call.1} parent=1 // pred_check
      _
    $region55: #{tpu_custom_call.1} parent=1 // pred_check_branch
      %52 = sbr.rel (0) target = $region57
    $region56: #{tpu_custom_call.1} parent=1 // pred_region
      _
    $region57: #{tpu_custom_call.1} parent=1 // pred_fallthru
      _
    // Predicated region
    $region58: #{tpu_custom_call.1} parent=1 // pred_check
      _
    $region59: #{tpu_custom_call.1} parent=1 // pred_check_branch
      %54 = sbr.rel (0) target = $region61
    $region60: #{tpu_custom_call.1} parent=1 // pred_region
      _
    $region61: #{tpu_custom_call.1} parent=1 // pred_fallthru
      _
    // Predicated region
    $region62: #{tpu_custom_call.1} parent=1 // pred_check
      _
    $region63: #{tpu_custom_call.1} parent=1 // pred_check_branch
      %56 = sbr.rel (0) target = $region65
    $region64: #{tpu_custom_call.1} parent=1 // pred_region
      _
    $region65: #{tpu_custom_call.1} parent=1 // pred_fallthru
      _
    // Predicated region
    $region66: #{tpu_custom_call.1} parent=1 // pred_check
      _
    $region67: #{tpu_custom_call.1} parent=1 // pred_check_branch
      %58 = sbr.rel (0) target = $region69
    $region68: #{tpu_custom_call.1} parent=1 // pred_region
      _
    $region69: #{tpu_custom_call.1} parent=1 // pred_fallthru
      _
    // Predicated region
    $region70: #{tpu_custom_call.1} parent=1 // pred_check
      _
    $region71: #{tpu_custom_call.1} parent=1 // pred_check_branch
      %60 = sbr.rel (0) target = $region73
    $region72: #{tpu_custom_call.1} parent=1 // pred_region
      _
    $region73: #{tpu_custom_call.1} parent=1 // pred_fallthru
      _
    // Predicated region
    $region74: #{tpu_custom_call.1} parent=1 // pred_check
      _
    $region75: #{tpu_custom_call.1} parent=1 // pred_check_branch
      %62 = sbr.rel (0) target = $region77
    $region76: #{tpu_custom_call.1} parent=1 // pred_region
      _
    $region77: #{tpu_custom_call.1} parent=1 // pred_fallthru
      _
    %v63 = vld [vmem:[%s0] sm:$0xff]
    %v64 = vld [vmem:[%s0 + $0x8] sm:$0xff]
    %v65 = vld [vmem:[%s3] sm:$0x1]
    %v66 = vld [vmem:[%s4] sm:$0x1]
    %vm67 = vcmask 261120
    %v68 = vsel %vm67, %v63, 0.0
    %69 = vadd.xlane.f32.xlu0 %v68
    %v70 = vpop.xlane.xlu0 %69
    %v71 = vsel %vm67, %v64, 0.0
    %72 = vadd.xlane.f32.xlu0 %v71
    %v73 = vpop.xlane.xlu0 %72
    %v74 = vmul.f32 %v70, 0.03125
    %v75 = vmul.f32 %v73, 0.03125
    %v76 = vsub.f32 %v63, %v74
    %v77 = vsub.f32 %v64, %v75
    %v78 = vmul.f32 %v76, %v76
    %v79 = vmul.f32 %v77, %v77
    %v80 = vsel %vm67, %v78, 0.0
    %81 = vadd.xlane.f32.xlu0 %v80
    %v82 = vpop.xlane.xlu0 %81
    %v83 = vsel %vm67, %v79, 0.0
    %84 = vadd.xlane.f32.xlu0 %v83
    %v85 = vpop.xlane.xlu0 %84
    %v86 = vmul.f32 %v82, 0.03125
    %v87 = vmul.f32 %v85, 0.03125
    %v88 = vadd.f32 %v86, 1e-05
    %v89 = vadd.f32 %v87, 1e-05
    %v90 = vrsqrt.pop %v88
    %v91 = vrsqrt.pop %v89
    %v92 = vmul.f32 %v76, %v90
    %v93 = vmul.f32 %v77, %v91
    %v95 = vlaneseq
    %v96 = vshrl.u32 %v95, 7
    %v97 = vsub.s32 0, %v96
    %v98 = vrot.slane %v65, %v97
    %v100 = vmul.f32 %v92, %v98
    %v101 = vmul.f32 %v93, %v98
    %v103 = vlaneseq
    %v104 = vshrl.u32 %v103, 7
    %v105 = vsub.s32 0, %v104
    %v106 = vrot.slane %v66, %v105
    %v108 = vadd.f32 %v100, %v106
    %v109 = vadd.f32 %v101, %v106
    %v110 = vld [vmem:[%s1] sm:$0x1]
    %v111 = vld [vmem:[%s1 + $0x1] sm:$0x1]
    %v112 = vld [vmem:[%s1 + $0x2] sm:$0x1]
    %v113 = vld [vmem:[%s1 + $0x3] sm:$0x1]
    %v114 = vld [vmem:[%s1 + $0x4] sm:$0x1]
    %v115 = vld [vmem:[%s1 + $0x5] sm:$0x1]
    %v116 = vld [vmem:[%s1 + $0x6] sm:$0x1]
    %v117 = vld [vmem:[%s1 + $0x7] sm:$0x1]
    %v118 = vld [vmem:[%s5] sm:$0xff]
    %v119 = vld [vmem:[%s5 + $0x8] sm:$0xff]
    %v120 = vld [vmem:[%s5 + $0x10] sm:$0xff]
    %v121 = vld [vmem:[%s5 + $0x18] sm:$0xff]
    %v122 = vld [vmem:[%s6] sm:$0x1]
    %v124 = vlaneseq
    %v125 = vshrl.u32 %v124, 7
    %v126 = vsub.s32 0, %v125
    %v127 = vrot.slane %v122, %v126
    %v130 = vsel %vm67, %v108, 0
    %v133 = vsel %vm67, %v109, 0
    %135 = vmatprep.subr.mxu0 0.0
    %136 = vmatpush1.msra.mxu0 %v118
    %137 = vmatprep.subr.mxu0 0.0
    %138 = vmatpush1.msra.mxu0 %v119
    %139 = vmatprep.subr.mxu0 0.0
    %140 = vmatpush1.msra.mxu0 %v120
    %141 = vmatprep.subr.mxu0 0.0
    %142 = vmatpush1.msra.mxu0 %v121
    %143 = vmatprep.subr.mxu0 0.0
    %144 = vmatpush1.msra.mxu0 0.0
    %145 = vmatprep.subr.mxu0 0.0
    %146 = vmatpush1.msra.mxu0 0.0
    %147 = vmatprep.subr.mxu0 0.0
    %148 = vmatpush1.msra.mxu0 0.0
    %149 = vmatprep.subr.mxu0 0.0
    %150 = vmatpush1.msra.mxu0 0.0
    %151 = vmatprep.subr.mxu0 0.0
    %152 = vmatpush1.msra.mxu0 0.0
    %153 = vmatprep.subr.mxu0 0.0
    %154 = vmatpush1.msra.mxu0 0.0
    %155 = vmatprep.subr.mxu0 0.0
    %156 = vmatpush1.msra.mxu0 0.0
    %157 = vmatprep.subr.mxu0 0.0
    %158 = vmatpush1.msra.mxu0 0.0
    %159 = vmatprep.subr.mxu0 0.0
    %160 = vmatpush1.msra.mxu0 0.0
    %161 = vmatprep.subr.mxu0 0.0
    %162 = vmatpush1.msra.mxu0 0.0
    %163 = vmatprep.subr.mxu0 0.0
    %164 = vmatpush1.msra.mxu0 0.0
    %165 = vmatprep.subr.mxu0 0.0
    %166 = vmatpush1.msra.mxu0 0.0
    %167 = vmatprep.subr.mxu0 0.0
    %168 = vmatpush1.msra.mxu0 0.0
    %169 = vmatprep.subr.mxu0 0.0
    %170 = vmatpush1.msra.mxu0 0.0
    %171 = vmatprep.subr.mxu0 0.0
    %172 = vmatpush1.msra.mxu0 0.0
    %173 = vmatprep.subr.mxu0 0.0
    %174 = vmatpush1.msra.mxu0 0.0
    %175 = vmatprep.subr.mxu0 0.0
    %176 = vmatpush1.msra.mxu0 0.0
    %177 = vmatprep.subr.mxu0 0.0
    %178 = vmatpush1.msra.mxu0 0.0
    %179 = vmatprep.subr.mxu0 0.0
    %180 = vmatpush1.msra.mxu0 0.0
    %181 = vmatprep.subr.mxu0 0.0
    %182 = vmatpush1.msra.mxu0 0.0
    %183 = vmatprep.subr.mxu0 0.0
    %184 = vmatpush1.msra.mxu0 0.0
    %185 = vmatprep.subr.mxu0 0.0
    %186 = vmatpush1.msra.mxu0 0.0
    %187 = vmatprep.subr.mxu0 0.0
    %188 = vmatpush1.msra.mxu0 0.0
    %189 = vmatprep.subr.mxu0 0.0
    %190 = vmatpush1.msra.mxu0 0.0
    %191 = vmatprep.subr.mxu0 0.0
    %192 = vmatpush1.msra.mxu0 0.0
    %193 = vmatprep.subr.mxu0 0.0
    %194 = vmatpush1.msra.mxu0 0.0
    %195 = vmatprep.subr.mxu0 0.0
    %196 = vmatpush1.msra.mxu0 0.0
    %197 = vmatprep.subr.mxu0 0.0
    %198 = vmatpush1.msra.mxu0 0.0
    %199 = vmatprep.mubr.f32.mxu0 0.0
    %200 = vmatmul.mubr.f32.gmra.mrb[0].mxu0 %v130
    %v201 = vpop.f32.mrb[0].mxu0
    %v202 = vadd.f32 %v127, %v201
    %v203 = vpop.f32.mrb[0].mxu0
    %204 = vmatprep.mubr.f32.mxu0 0.0
    %205 = vmatmul.mubr.f32.gmra.mrb[0].mxu0 %v133
    %v206 = vpop.f32.mrb[0].mxu0
    %v207 = vadd.f32 %v127, %v206
    %v208 = vpop.f32.mrb[0].mxu0
    %209 = vdwg.mxu0
    %vm210 = vcmask 64512
    %211 = vst.msk [vmem:[#allocation2] sm:$0xff] %vm210, %v202
    %212 = vst.msk [vmem:[#allocation2 + $0x8] sm:$0xff] %vm210, %v207
    %215 = vrot.lane.b32.xlu0 %v202, 96
    %v216 = vpop.permute.xlu0 %215
    %217 = vrot.lane.b32.xlu0 %v207, 96
    %v218 = vpop.permute.xlu0 %217
    %221 = vst.msk [vmem:[#allocation3] sm:$0xff] %vm210, %v216
    %222 = vst.msk [vmem:[#allocation3 + $0x8] sm:$0xff] %vm210, %v218
    %223 = vrot.lane.b32.xlu0 %v202, 64
    %v224 = vpop.permute.xlu0 %223
    %225 = vrot.lane.b32.xlu0 %v207, 64
    %v226 = vpop.permute.xlu0 %225
    %229 = vst.msk [vmem:[#allocation4] sm:$0xff] %vm210, %v224
    %230 = vst.msk [vmem:[#allocation4 + $0x8] sm:$0xff] %vm210, %v226
    %231 = vrot.lane.b32.xlu0 %v202, 120
    %v232 = vpop.permute.xlu0 %231
    %233 = vrot.lane.b32.xlu0 %v207, 120
    %v234 = vpop.permute.xlu0 %233
    %s237 = scalar_lea.vmem [#allocation2], 16
    %238 = vst.msk [vmem:[%s237] sm:$0xff] %vm210, %v232
    %239 = vst.msk [vmem:[%s237 + $0x8] sm:$0xff] %vm210, %v234
    %240 = vrot.lane.b32.xlu0 %v202, 88
    %v241 = vpop.permute.xlu0 %240
    %242 = vrot.lane.b32.xlu0 %v207, 88
    %v243 = vpop.permute.xlu0 %242
    %s246 = scalar_lea.vmem [#allocation3], 16
    %247 = vst.msk [vmem:[%s246] sm:$0xff] %vm210, %v241
    %248 = vst.msk [vmem:[%s246 + $0x8] sm:$0xff] %vm210, %v243
    %249 = vrot.lane.b32.xlu0 %v202, 56
    %v250 = vpop.permute.xlu0 %249
    %251 = vrot.lane.b32.xlu0 %v207, 56
    %v252 = vpop.permute.xlu0 %251
    %s255 = scalar_lea.vmem [#allocation4], 16
    %256 = vst.msk [vmem:[%s255] sm:$0xff] %vm210, %v250
    %257 = vst.msk [vmem:[%s255 + $0x8] sm:$0xff] %vm210, %v252
    %258 = vrot.lane.b32.xlu0 %v202, 112
    %v259 = vpop.permute.xlu0 %258
    %260 = vrot.lane.b32.xlu0 %v207, 112
    %v261 = vpop.permute.xlu0 %260
    %s264 = scalar_lea.vmem [#allocation2], 32
    %265 = vst.msk [vmem:[%s264] sm:$0xff] %vm210, %v259
    %266 = vst.msk [vmem:[%s264 + $0x8] sm:$0xff] %vm210, %v261
    %267 = vrot.lane.b32.xlu0 %v202, 80
    %v268 = vpop.permute.xlu0 %267
    %269 = vrot.lane.b32.xlu0 %v207, 80
    %v270 = vpop.permute.xlu0 %269
    %s273 = scalar_lea.vmem [#allocation3], 32
    %274 = vst.msk [vmem:[%s273] sm:$0xff] %vm210, %v268
    %275 = vst.msk [vmem:[%s273 + $0x8] sm:$0xff] %vm210, %v270
    %276 = vrot.lane.b32.xlu0 %v202, 48
    %v277 = vpop.permute.xlu0 %276
    %278 = vrot.lane.b32.xlu0 %v207, 48
    %v279 = vpop.permute.xlu0 %278
    %s282 = scalar_lea.vmem [#allocation4], 32
    %283 = vst.msk [vmem:[%s282] sm:$0xff] %vm210, %v277
    %284 = vst.msk [vmem:[%s282 + $0x8] sm:$0xff] %vm210, %v279
    %285 = vrot.lane.b32.xlu0 %v202, 104
    %v286 = vpop.permute.xlu0 %285
    %287 = vrot.lane.b32.xlu0 %v207, 104
    %v288 = vpop.permute.xlu0 %287
    %s291 = scalar_lea.vmem [#allocation2], 48
    %292 = vst.msk [vmem:[%s291] sm:$0xff] %vm210, %v286
    %293 = vst.msk [vmem:[%s291 + $0x8] sm:$0xff] %vm210, %v288
    %294 = vrot.lane.b32.xlu0 %v202, 72
    %v295 = vpop.permute.xlu0 %294
    %296 = vrot.lane.b32.xlu0 %v207, 72
    %v297 = vpop.permute.xlu0 %296
    %s300 = scalar_lea.vmem [#allocation3], 48
    %301 = vst.msk [vmem:[%s300] sm:$0xff] %vm210, %v295
    %302 = vst.msk [vmem:[%s300 + $0x8] sm:$0xff] %vm210, %v297
    %303 = vrot.lane.b32.xlu0 %v202, 40
    %v304 = vpop.permute.xlu0 %303
    %305 = vrot.lane.b32.xlu0 %v207, 40
    %v306 = vpop.permute.xlu0 %305
    %s309 = scalar_lea.vmem [#allocation4], 48
    %310 = vst.msk [vmem:[%s309] sm:$0xff] %vm210, %v304
    %311 = vst.msk [vmem:[%s309 + $0x8] sm:$0xff] %vm210, %v306
    %v312 = vld [vmem:[#allocation2] sm:$0xff]
    %v313 = vld [vmem:[#allocation2 + $0x8] sm:$0xff]
    %v314 = vld [vmem:[#allocation2 + $0x10] sm:$0xff]
    %v315 = vld [vmem:[#allocation2 + $0x18] sm:$0xff]
    %v316 = vld [vmem:[#allocation2 + $0x20] sm:$0xff]
    %v317 = vld [vmem:[#allocation2 + $0x28] sm:$0xff]
    %v318 = vld [vmem:[#allocation2 + $0x30] sm:$0xff]
    %v319 = vld [vmem:[#allocation2 + $0x38] sm:$0xff]
    %v320 = vld [vmem:[#allocation3] sm:$0xff]
    %v321 = vld [vmem:[#allocation3 + $0x8] sm:$0xff]
    %v322 = vld [vmem:[#allocation3 + $0x10] sm:$0xff]
    %v323 = vld [vmem:[#allocation3 + $0x18] sm:$0xff]
    %v324 = vld [vmem:[#allocation3 + $0x20] sm:$0xff]
    %v325 = vld [vmem:[#allocation3 + $0x28] sm:$0xff]
    %v326 = vld [vmem:[#allocation3 + $0x30] sm:$0xff]
    %v327 = vld [vmem:[#allocation3 + $0x38] sm:$0xff]
    %v329 = vsel %vm210, %v312, 0
    %v332 = vsel %vm210, %v320, 0
    %334 = vmatprep.subr.mxu0 0.0
    %335 = vmatpush1.xpose.msra.mxu0 %v332
    %336 = vmatprep.subr.mxu0 0.0
    %337 = vmatpush1.xpose.msra.mxu0 0.0
    %338 = vmatprep.subr.mxu0 0.0
    %339 = vmatpush1.xpose.msra.mxu0 0.0
    %340 = vmatprep.subr.mxu0 0.0
    %341 = vmatpush1.xpose.msra.mxu0 0.0
    %342 = vmatprep.subr.mxu0 0.0
    %343 = vmatpush1.xpose.msra.mxu0 0.0
    %344 = vmatprep.subr.mxu0 0.0
    %345 = vmatpush1.xpose.msra.mxu0 0.0
    %346 = vmatprep.subr.mxu0 0.0
    %347 = vmatpush1.xpose.msra.mxu0 0.0
    %348 = vmatprep.subr.mxu0 0.0
    %349 = vmatpush1.xpose.msra.mxu0 0.0
    %350 = vmatprep.subr.mxu0 0.0
    %351 = vmatpush1.xpose.msra.mxu0 0.0
    %352 = vmatprep.subr.mxu0 0.0
    %353 = vmatpush1.xpose.msra.mxu0 0.0
    %354 = vmatprep.subr.mxu0 0.0
    %355 = vmatpush1.xpose.msra.mxu0 0.0
    %356 = vmatprep.subr.mxu0 0.0
    %357 = vmatpush1.xpose.msra.mxu0 0.0
    %358 = vmatprep.subr.mxu0 0.0
    %359 = vmatpush1.xpose.msra.mxu0 0.0
    %360 = vmatprep.subr.mxu0 0.0
    %361 = vmatpush1.xpose.msra.mxu0 0.0
    %362 = vmatprep.subr.mxu0 0.0
    %363 = vmatpush1.xpose.msra.mxu0 0.0
    %364 = vmatprep.subr.mxu0 0.0
    %365 = vmatpush1.xpose.msra.mxu0 0.0
    %366 = vmatprep.subr.mxu0 0.0
    %367 = vmatpush1.xpose.msra.mxu0 0.0
    %368 = vmatprep.subr.mxu0 0.0
    %369 = vmatpush1.xpose.msra.mxu0 0.0
    %370 = vmatprep.subr.mxu0 0.0
    %371 = vmatpush1.xpose.msra.mxu0 0.0
    %372 = vmatprep.subr.mxu0 0.0
    %373 = vmatpush1.xpose.msra.mxu0 0.0
    %374 = vmatprep.subr.mxu0 0.0
    %375 = vmatpush1.xpose.msra.mxu0 0.0
    %376 = vmatprep.subr.mxu0 0.0
    %377 = vmatpush1.xpose.msra.mxu0 0.0
    %378 = vmatprep.subr.mxu0 0.0
    %379 = vmatpush1.xpose.msra.mxu0 0.0
    %380 = vmatprep.subr.mxu0 0.0
    %381 = vmatpush1.xpose.msra.mxu0 0.0
    %382 = vmatprep.subr.mxu0 0.0
    %383 = vmatpush1.xpose.msra.mxu0 0.0
    %384 = vmatprep.subr.mxu0 0.0
    %385 = vmatpush1.xpose.msra.mxu0 0.0
    %386 = vmatprep.subr.mxu0 0.0
    %387 = vmatpush1.xpose.msra.mxu0 0.0
    %388 = vmatprep.subr.mxu0 0.0
    %389 = vmatpush1.xpose.msra.mxu0 0.0
    %390 = vmatprep.subr.mxu0 0.0
    %391 = vmatpush1.xpose.msra.mxu0 0.0
    %392 = vmatprep.subr.mxu0 0.0
    %393 = vmatpush1.xpose.msra.mxu0 0.0
    %394 = vmatprep.subr.mxu0 0.0
    %395 = vmatpush1.xpose.msra.mxu0 0.0
    %396 = vmatprep.subr.mxu0 0.0
    %397 = vmatpush1.xpose.msra.mxu0 0.0
    %398 = vmatprep.mubr.f32.mxu0 0.0
    %399 = vmatmul.mubr.f32.gmra.mrb[0].mxu0 %v329
    %v400 = vpop.f32.mrb[0].mxu0
    %v401 = vadd.f32 0.0, %v400
    %v402 = vpop.f32.mrb[0].mxu0
    %403 = vdwg.mxu0
    %v405 = vsel %vm210, %v313, 0
    %v408 = vsel %vm210, %v321, 0
    %410 = vmatprep.subr.mxu0 0.0
    %411 = vmatpush1.xpose.msra.mxu0 %v408
    %412 = vmatprep.subr.mxu0 0.0
    %413 = vmatpush1.xpose.msra.mxu0 0.0
    %414 = vmatprep.subr.mxu0 0.0
    %415 = vmatpush1.xpose.msra.mxu0 0.0
    %416 = vmatprep.subr.mxu0 0.0
    %417 = vmatpush1.xpose.msra.mxu0 0.0
    %418 = vmatprep.subr.mxu0 0.0
    %419 = vmatpush1.xpose.msra.mxu0 0.0
    %420 = vmatprep.subr.mxu0 0.0
    %421 = vmatpush1.xpose.msra.mxu0 0.0
    %422 = vmatprep.subr.mxu0 0.0
    %423 = vmatpush1.xpose.msra.mxu0 0.0
    %424 = vmatprep.subr.mxu0 0.0
    %425 = vmatpush1.xpose.msra.mxu0 0.0
    %426 = vmatprep.subr.mxu0 0.0
    %427 = vmatpush1.xpose.msra.mxu0 0.0
    %428 = vmatprep.subr.mxu0 0.0
    %429 = vmatpush1.xpose.msra.mxu0 0.0
    %430 = vmatprep.subr.mxu0 0.0
    %431 = vmatpush1.xpose.msra.mxu0 0.0
    %432 = vmatprep.subr.mxu0 0.0
    %433 = vmatpush1.xpose.msra.mxu0 0.0
    %434 = vmatprep.subr.mxu0 0.0
    %435 = vmatpush1.xpose.msra.mxu0 0.0
    %436 = vmatprep.subr.mxu0 0.0
    %437 = vmatpush1.xpose.msra.mxu0 0.0
    %438 = vmatprep.subr.mxu0 0.0
    %439 = vmatpush1.xpose.msra.mxu0 0.0
    %440 = vmatprep.subr.mxu0 0.0
    %441 = vmatpush1.xpose.msra.mxu0 0.0
    %442 = vmatprep.subr.mxu0 0.0
    %443 = vmatpush1.xpose.msra.mxu0 0.0
    %444 = vmatprep.subr.mxu0 0.0
    %445 = vmatpush1.xpose.msra.mxu0 0.0
    %446 = vmatprep.subr.mxu0 0.0
    %447 = vmatpush1.xpose.msra.mxu0 0.0
    %448 = vmatprep.subr.mxu0 0.0
    %449 = vmatpush1.xpose.msra.mxu0 0.0
    %450 = vmatprep.subr.mxu0 0.0
    %451 = vmatpush1.xpose.msra.mxu0 0.0
    %452 = vmatprep.subr.mxu0 0.0
    %453 = vmatpush1.xpose.msra.mxu0 0.0
    %454 = vmatprep.subr.mxu0 0.0
    %455 = vmatpush1.xpose.msra.mxu0 0.0
    %456 = vmatprep.subr.mxu0 0.0
    %457 = vmatpush1.xpose.msra.mxu0 0.0
    %458 = vmatprep.subr.mxu0 0.0
    %459 = vmatpush1.xpose.msra.mxu0 0.0
    %460 = vmatprep.subr.mxu0 0.0
    %461 = vmatpush1.xpose.msra.mxu0 0.0
    %462 = vmatprep.subr.mxu0 0.0
    %463 = vmatpush1.xpose.msra.mxu0 0.0
    %464 = vmatprep.subr.mxu0 0.0
    %465 = vmatpush1.xpose.msra.mxu0 0.0
    %466 = vmatprep.subr.mxu0 0.0
    %467 = vmatpush1.xpose.msra.mxu0 0.0
    %468 = vmatprep.subr.mxu0 0.0
    %469 = vmatpush1.xpose.msra.mxu0 0.0
    %470 = vmatprep.subr.mxu0 0.0
    %471 = vmatpush1.xpose.msra.mxu0 0.0
    %472 = vmatprep.subr.mxu0 0.0
    %473 = vmatpush1.xpose.msra.mxu0 0.0
    %474 = vmatprep.mubr.f32.mxu0 0.0
    %475 = vmatmul.mubr.f32.gmra.mrb[0].mxu0 %v405
    %v476 = vpop.f32.mrb[0].mxu0
    %v477 = vadd.f32 0.0, %v476
    %v478 = vpop.f32.mrb[0].mxu0
    %479 = vdwg.mxu0
    %v481 = vsel %vm210, %v314, 0
    %v484 = vsel %vm210, %v322, 0
    %486 = vmatprep.subr.mxu0 0.0
    %487 = vmatpush1.xpose.msra.mxu0 %v484
    %488 = vmatprep.subr.mxu0 0.0
    %489 = vmatpush1.xpose.msra.mxu0 0.0
    %490 = vmatprep.subr.mxu0 0.0
    %491 = vmatpush1.xpose.msra.mxu0 0.0
    %492 = vmatprep.subr.mxu0 0.0
    %493 = vmatpush1.xpose.msra.mxu0 0.0
    %494 = vmatprep.subr.mxu0 0.0
    %495 = vmatpush1.xpose.msra.mxu0 0.0
    %496 = vmatprep.subr.mxu0 0.0
    %497 = vmatpush1.xpose.msra.mxu0 0.0
    %498 = vmatprep.subr.mxu0 0.0
    %499 = vmatpush1.xpose.msra.mxu0 0.0
    %500 = vmatprep.subr.mxu0 0.0
    %501 = vmatpush1.xpose.msra.mxu0 0.0
    %502 = vmatprep.subr.mxu0 0.0
    %503 = vmatpush1.xpose.msra.mxu0 0.0
    %504 = vmatprep.subr.mxu0 0.0
    %505 = vmatpush1.xpose.msra.mxu0 0.0
    %506 = vmatprep.subr.mxu0 0.0
    %507 = vmatpush1.xpose.msra.mxu0 0.0
    %508 = vmatprep.subr.mxu0 0.0
    %509 = vmatpush1.xpose.msra.mxu0 0.0
    %510 = vmatprep.subr.mxu0 0.0
    %511 = vmatpush1.xpose.msra.mxu0 0.0
    %512 = vmatprep.subr.mxu0 0.0
    %513 = vmatpush1.xpose.msra.mxu0 0.0
    %514 = vmatprep.subr.mxu0 0.0
    %515 = vmatpush1.xpose.msra.mxu0 0.0
    %516 = vmatprep.subr.mxu0 0.0
    %517 = vmatpush1.xpose.msra.mxu0 0.0
    %518 = vmatprep.subr.mxu0 0.0
    %519 = vmatpush1.xpose.msra.mxu0 0.0
    %520 = vmatprep.subr.mxu0 0.0
    %521 = vmatpush1.xpose.msra.mxu0 0.0
    %522 = vmatprep.subr.mxu0 0.0
    %523 = vmatpush1.xpose.msra.mxu0 0.0
    %524 = vmatprep.subr.mxu0 0.0
    %525 = vmatpush1.xpose.msra.mxu0 0.0
    %526 = vmatprep.subr.mxu0 0.0
    %527 = vmatpush1.xpose.msra.mxu0 0.0
    %528 = vmatprep.subr.mxu0 0.0
    %529 = vmatpush1.xpose.msra.mxu0 0.0
    %530 = vmatprep.subr.mxu0 0.0
    %531 = vmatpush1.xpose.msra.mxu0 0.0
    %532 = vmatprep.subr.mxu0 0.0
    %533 = vmatpush1.xpose.msra.mxu0 0.0
    %534 = vmatprep.subr.mxu0 0.0
    %535 = vmatpush1.xpose.msra.mxu0 0.0
    %536 = vmatprep.subr.mxu0 0.0
    %537 = vmatpush1.xpose.msra.mxu0 0.0
    %538 = vmatprep.subr.mxu0 0.0
    %539 = vmatpush1.xpose.msra.mxu0 0.0
    %540 = vmatprep.subr.mxu0 0.0
    %541 = vmatpush1.xpose.msra.mxu0 0.0
    %542 = vmatprep.subr.mxu0 0.0
    %543 = vmatpush1.xpose.msra.mxu0 0.0
    %544 = vmatprep.subr.mxu0 0.0
    %545 = vmatpush1.xpose.msra.mxu0 0.0
    %546 = vmatprep.subr.mxu0 0.0
    %547 = vmatpush1.xpose.msra.mxu0 0.0
    %548 = vmatprep.subr.mxu0 0.0
    %549 = vmatpush1.xpose.msra.mxu0 0.0
    %550 = vmatprep.mubr.f32.mxu0 0.0
    %551 = vmatmul.mubr.f32.gmra.mrb[0].mxu0 %v481
    %v552 = vpop.f32.mrb[0].mxu0
    %v553 = vadd.f32 0.0, %v552
    %v554 = vpop.f32.mrb[0].mxu0
    %555 = vdwg.mxu0
    %v557 = vsel %vm210, %v315, 0
    %v560 = vsel %vm210, %v323, 0
    %562 = vmatprep.subr.mxu0 0.0
    %563 = vmatpush1.xpose.msra.mxu0 %v560
    %564 = vmatprep.subr.mxu0 0.0
    %565 = vmatpush1.xpose.msra.mxu0 0.0
    %566 = vmatprep.subr.mxu0 0.0
    %567 = vmatpush1.xpose.msra.mxu0 0.0
    %568 = vmatprep.subr.mxu0 0.0
    %569 = vmatpush1.xpose.msra.mxu0 0.0
    %570 = vmatprep.subr.mxu0 0.0
    %571 = vmatpush1.xpose.msra.mxu0 0.0
    %572 = vmatprep.subr.mxu0 0.0
    %573 = vmatpush1.xpose.msra.mxu0 0.0
    %574 = vmatprep.subr.mxu0 0.0
    %575 = vmatpush1.xpose.msra.mxu0 0.0
    %576 = vmatprep.subr.mxu0 0.0
    %577 = vmatpush1.xpose.msra.mxu0 0.0
    %578 = vmatprep.subr.mxu0 0.0
    %579 = vmatpush1.xpose.msra.mxu0 0.0
    %580 = vmatprep.subr.mxu0 0.0
    %581 = vmatpush1.xpose.msra.mxu0 0.0
    %582 = vmatprep.subr.mxu0 0.0
    %583 = vmatpush1.xpose.msra.mxu0 0.0
    %584 = vmatprep.subr.mxu0 0.0
    %585 = vmatpush1.xpose.msra.mxu0 0.0
    %586 = vmatprep.subr.mxu0 0.0
    %587 = vmatpush1.xpose.msra.mxu0 0.0
    %588 = vmatprep.subr.mxu0 0.0
    %589 = vmatpush1.xpose.msra.mxu0 0.0
    %590 = vmatprep.subr.mxu0 0.0
    %591 = vmatpush1.xpose.msra.mxu0 0.0
    %592 = vmatprep.subr.mxu0 0.0
    %593 = vmatpush1.xpose.msra.mxu0 0.0
    %594 = vmatprep.subr.mxu0 0.0
    %595 = vmatpush1.xpose.msra.mxu0 0.0
    %596 = vmatprep.subr.mxu0 0.0
    %597 = vmatpush1.xpose.msra.mxu0 0.0
    %598 = vmatprep.subr.mxu0 0.0
    %599 = vmatpush1.xpose.msra.mxu0 0.0
    %600 = vmatprep.subr.mxu0 0.0
    %601 = vmatpush1.xpose.msra.mxu0 0.0
    %602 = vmatprep.subr.mxu0 0.0
    %603 = vmatpush1.xpose.msra.mxu0 0.0
    %604 = vmatprep.subr.mxu0 0.0
    %605 = vmatpush1.xpose.msra.mxu0 0.0
    %606 = vmatprep.subr.mxu0 0.0
    %607 = vmatpush1.xpose.msra.mxu0 0.0
    %608 = vmatprep.subr.mxu0 0.0
    %609 = vmatpush1.xpose.msra.mxu0 0.0
    %610 = vmatprep.subr.mxu0 0.0
    %611 = vmatpush1.xpose.msra.mxu0 0.0
    %612 = vmatprep.subr.mxu0 0.0
    %613 = vmatpush1.xpose.msra.mxu0 0.0
    %614 = vmatprep.subr.mxu0 0.0
    %615 = vmatpush1.xpose.msra.mxu0 0.0
    %616 = vmatprep.subr.mxu0 0.0
    %617 = vmatpush1.xpose.msra.mxu0 0.0
    %618 = vmatprep.subr.mxu0 0.0
    %619 = vmatpush1.xpose.msra.mxu0 0.0
    %620 = vmatprep.subr.mxu0 0.0
    %621 = vmatpush1.xpose.msra.mxu0 0.0
    %622 = vmatprep.subr.mxu0 0.0
    %623 = vmatpush1.xpose.msra.mxu0 0.0
    %624 = vmatprep.subr.mxu0 0.0
    %625 = vmatpush1.xpose.msra.mxu0 0.0
    %626 = vmatprep.mubr.f32.mxu0 0.0
    %627 = vmatmul.mubr.f32.gmra.mrb[0].mxu0 %v557
    %v628 = vpop.f32.mrb[0].mxu0
    %v629 = vadd.f32 0.0, %v628
    %v630 = vpop.f32.mrb[0].mxu0
    %631 = vdwg.mxu0
    %v633 = vsel %vm210, %v316, 0
    %v636 = vsel %vm210, %v324, 0
    %638 = vmatprep.subr.mxu0 0.0
    %639 = vmatpush1.xpose.msra.mxu0 %v636
    %640 = vmatprep.subr.mxu0 0.0
    %641 = vmatpush1.xpose.msra.mxu0 0.0
    %642 = vmatprep.subr.mxu0 0.0
    %643 = vmatpush1.xpose.msra.mxu0 0.0
    %644 = vmatprep.subr.mxu0 0.0
    %645 = vmatpush1.xpose.msra.mxu0 0.0
    %646 = vmatprep.subr.mxu0 0.0
    %647 = vmatpush1.xpose.msra.mxu0 0.0
    %648 = vmatprep.subr.mxu0 0.0
    %649 = vmatpush1.xpose.msra.mxu0 0.0
    %650 = vmatprep.subr.mxu0 0.0
    %651 = vmatpush1.xpose.msra.mxu0 0.0
    %652 = vmatprep.subr.mxu0 0.0
    %653 = vmatpush1.xpose.msra.mxu0 0.0
    %654 = vmatprep.subr.mxu0 0.0
    %655 = vmatpush1.xpose.msra.mxu0 0.0
    %656 = vmatprep.subr.mxu0 0.0
    %657 = vmatpush1.xpose.msra.mxu0 0.0
    %658 = vmatprep.subr.mxu0 0.0
    %659 = vmatpush1.xpose.msra.mxu0 0.0
    %660 = vmatprep.subr.mxu0 0.0
    %661 = vmatpush1.xpose.msra.mxu0 0.0
    %662 = vmatprep.subr.mxu0 0.0
    %663 = vmatpush1.xpose.msra.mxu0 0.0
    %664 = vmatprep.subr.mxu0 0.0
    %665 = vmatpush1.xpose.msra.mxu0 0.0
    %666 = vmatprep.subr.mxu0 0.0
    %667 = vmatpush1.xpose.msra.mxu0 0.0
    %668 = vmatprep.subr.mxu0 0.0
    %669 = vmatpush1.xpose.msra.mxu0 0.0
    %670 = vmatprep.subr.mxu0 0.0
    %671 = vmatpush1.xpose.msra.mxu0 0.0
    %672 = vmatprep.subr.mxu0 0.0
    %673 = vmatpush1.xpose.msra.mxu0 0.0
    %674 = vmatprep.subr.mxu0 0.0
    %675 = vmatpush1.xpose.msra.mxu0 0.0
    %676 = vmatprep.subr.mxu0 0.0
    %677 = vmatpush1.xpose.msra.mxu0 0.0
    %678 = vmatprep.subr.mxu0 0.0
    %679 = vmatpush1.xpose.msra.mxu0 0.0
    %680 = vmatprep.subr.mxu0 0.0
    %681 = vmatpush1.xpose.msra.mxu0 0.0
    %682 = vmatprep.subr.mxu0 0.0
    %683 = vmatpush1.xpose.msra.mxu0 0.0
    %684 = vmatprep.subr.mxu0 0.0
    %685 = vmatpush1.xpose.msra.mxu0 0.0
    %686 = vmatprep.subr.mxu0 0.0
    %687 = vmatpush1.xpose.msra.mxu0 0.0
    %688 = vmatprep.subr.mxu0 0.0
    %689 = vmatpush1.xpose.msra.mxu0 0.0
    %690 = vmatprep.subr.mxu0 0.0
    %691 = vmatpush1.xpose.msra.mxu0 0.0
    %692 = vmatprep.subr.mxu0 0.0
    %693 = vmatpush1.xpose.msra.mxu0 0.0
    %694 = vmatprep.subr.mxu0 0.0
    %695 = vmatpush1.xpose.msra.mxu0 0.0
    %696 = vmatprep.subr.mxu0 0.0
    %697 = vmatpush1.xpose.msra.mxu0 0.0
    %698 = vmatprep.subr.mxu0 0.0
    %699 = vmatpush1.xpose.msra.mxu0 0.0
    %700 = vmatprep.subr.mxu0 0.0
    %701 = vmatpush1.xpose.msra.mxu0 0.0
    %702 = vmatprep.mubr.f32.mxu0 0.0
    %703 = vmatmul.mubr.f32.gmra.mrb[0].mxu0 %v633
    %v704 = vpop.f32.mrb[0].mxu0
    %v705 = vadd.f32 0.0, %v704
    %v706 = vpop.f32.mrb[0].mxu0
    %707 = vdwg.mxu0
    %v709 = vsel %vm210, %v317, 0
    %v712 = vsel %vm210, %v325, 0
    %714 = vmatprep.subr.mxu0 0.0
    %715 = vmatpush1.xpose.msra.mxu0 %v712
    %716 = vmatprep.subr.mxu0 0.0
    %717 = vmatpush1.xpose.msra.mxu0 0.0
    %718 = vmatprep.subr.mxu0 0.0
    %719 = vmatpush1.xpose.msra.mxu0 0.0
    %720 = vmatprep.subr.mxu0 0.0
    %721 = vmatpush1.xpose.msra.mxu0 0.0
    %722 = vmatprep.subr.mxu0 0.0
    %723 = vmatpush1.xpose.msra.mxu0 0.0
    %724 = vmatprep.subr.mxu0 0.0
    %725 = vmatpush1.xpose.msra.mxu0 0.0
    %726 = vmatprep.subr.mxu0 0.0
    %727 = vmatpush1.xpose.msra.mxu0 0.0
    %728 = vmatprep.subr.mxu0 0.0
    %729 = vmatpush1.xpose.msra.mxu0 0.0
    %730 = vmatprep.subr.mxu0 0.0
    %731 = vmatpush1.xpose.msra.mxu0 0.0
    %732 = vmatprep.subr.mxu0 0.0
    %733 = vmatpush1.xpose.msra.mxu0 0.0
    %734 = vmatprep.subr.mxu0 0.0
    %735 = vmatpush1.xpose.msra.mxu0 0.0
    %736 = vmatprep.subr.mxu0 0.0
    %737 = vmatpush1.xpose.msra.mxu0 0.0
    %738 = vmatprep.subr.mxu0 0.0
    %739 = vmatpush1.xpose.msra.mxu0 0.0
    %740 = vmatprep.subr.mxu0 0.0
    %741 = vmatpush1.xpose.msra.mxu0 0.0
    %742 = vmatprep.subr.mxu0 0.0
    %743 = vmatpush1.xpose.msra.mxu0 0.0
    %744 = vmatprep.subr.mxu0 0.0
    %745 = vmatpush1.xpose.msra.mxu0 0.0
    %746 = vmatprep.subr.mxu0 0.0
    %747 = vmatpush1.xpose.msra.mxu0 0.0
    %748 = vmatprep.subr.mxu0 0.0
    %749 = vmatpush1.xpose.msra.mxu0 0.0
    %750 = vmatprep.subr.mxu0 0.0
    %751 = vmatpush1.xpose.msra.mxu0 0.0
    %752 = vmatprep.subr.mxu0 0.0
    %753 = vmatpush1.xpose.msra.mxu0 0.0
    %754 = vmatprep.subr.mxu0 0.0
    %755 = vmatpush1.xpose.msra.mxu0 0.0
    %756 = vmatprep.subr.mxu0 0.0
    %757 = vmatpush1.xpose.msra.mxu0 0.0
    %758 = vmatprep.subr.mxu0 0.0
    %759 = vmatpush1.xpose.msra.mxu0 0.0
    %760 = vmatprep.subr.mxu0 0.0
    %761 = vmatpush1.xpose.msra.mxu0 0.0
    %762 = vmatprep.subr.mxu0 0.0
    %763 = vmatpush1.xpose.msra.mxu0 0.0
    %764 = vmatprep.subr.mxu0 0.0
    %765 = vmatpush1.xpose.msra.mxu0 0.0
    %766 = vmatprep.subr.mxu0 0.0
    %767 = vmatpush1.xpose.msra.mxu0 0.0
    %768 = vmatprep.subr.mxu0 0.0
    %769 = vmatpush1.xpose.msra.mxu0 0.0
    %770 = vmatprep.subr.mxu0 0.0
    %771 = vmatpush1.xpose.msra.mxu0 0.0
    %772 = vmatprep.subr.mxu0 0.0
    %773 = vmatpush1.xpose.msra.mxu0 0.0
    %774 = vmatprep.subr.mxu0 0.0
    %775 = vmatpush1.xpose.msra.mxu0 0.0
    %776 = vmatprep.subr.mxu0 0.0
    %777 = vmatpush1.xpose.msra.mxu0 0.0
    %778 = vmatprep.mubr.f32.mxu0 0.0
    %779 = vmatmul.mubr.f32.gmra.mrb[0].mxu0 %v709
    %v780 = vpop.f32.mrb[0].mxu0
    %v781 = vadd.f32 0.0, %v780
    %v782 = vpop.f32.mrb[0].mxu0
    %783 = vdwg.mxu0
    %v785 = vsel %vm210, %v318, 0
    %v788 = vsel %vm210, %v326, 0
    %790 = vmatprep.subr.mxu0 0.0
    %791 = vmatpush1.xpose.msra.mxu0 %v788
    %792 = vmatprep.subr.mxu0 0.0
    %793 = vmatpush1.xpose.msra.mxu0 0.0
    %794 = vmatprep.subr.mxu0 0.0
    %795 = vmatpush1.xpose.msra.mxu0 0.0
    %796 = vmatprep.subr.mxu0 0.0
    %797 = vmatpush1.xpose.msra.mxu0 0.0
    %798 = vmatprep.subr.mxu0 0.0
    %799 = vmatpush1.xpose.msra.mxu0 0.0
    %800 = vmatprep.subr.mxu0 0.0
    %801 = vmatpush1.xpose.msra.mxu0 0.0
    %802 = vmatprep.subr.mxu0 0.0
    %803 = vmatpush1.xpose.msra.mxu0 0.0
    %804 = vmatprep.subr.mxu0 0.0
    %805 = vmatpush1.xpose.msra.mxu0 0.0
    %806 = vmatprep.subr.mxu0 0.0
    %807 = vmatpush1.xpose.msra.mxu0 0.0
    %808 = vmatprep.subr.mxu0 0.0
    %809 = vmatpush1.xpose.msra.mxu0 0.0
    %810 = vmatprep.subr.mxu0 0.0
    %811 = vmatpush1.xpose.msra.mxu0 0.0
    %812 = vmatprep.subr.mxu0 0.0
    %813 = vmatpush1.xpose.msra.mxu0 0.0
    %814 = vmatprep.subr.mxu0 0.0
    %815 = vmatpush1.xpose.msra.mxu0 0.0
    %816 = vmatprep.subr.mxu0 0.0
    %817 = vmatpush1.xpose.msra.mxu0 0.0
    %818 = vmatprep.subr.mxu0 0.0
    %819 = vmatpush1.xpose.msra.mxu0 0.0
    %820 = vmatprep.subr.mxu0 0.0
    %821 = vmatpush1.xpose.msra.mxu0 0.0
    %822 = vmatprep.subr.mxu0 0.0
    %823 = vmatpush1.xpose.msra.mxu0 0.0
    %824 = vmatprep.subr.mxu0 0.0
    %825 = vmatpush1.xpose.msra.mxu0 0.0
    %826 = vmatprep.subr.mxu0 0.0
    %827 = vmatpush1.xpose.msra.mxu0 0.0
    %828 = vmatprep.subr.mxu0 0.0
    %829 = vmatpush1.xpose.msra.mxu0 0.0
    %830 = vmatprep.subr.mxu0 0.0
    %831 = vmatpush1.xpose.msra.mxu0 0.0
    %832 = vmatprep.subr.mxu0 0.0
    %833 = vmatpush1.xpose.msra.mxu0 0.0
    %834 = vmatprep.subr.mxu0 0.0
    %835 = vmatpush1.xpose.msra.mxu0 0.0
    %836 = vmatprep.subr.mxu0 0.0
    %837 = vmatpush1.xpose.msra.mxu0 0.0
    %838 = vmatprep.subr.mxu0 0.0
    %839 = vmatpush1.xpose.msra.mxu0 0.0
    %840 = vmatprep.subr.mxu0 0.0
    %841 = vmatpush1.xpose.msra.mxu0 0.0
    %842 = vmatprep.subr.mxu0 0.0
    %843 = vmatpush1.xpose.msra.mxu0 0.0
    %844 = vmatprep.subr.mxu0 0.0
    %845 = vmatpush1.xpose.msra.mxu0 0.0
    %846 = vmatprep.subr.mxu0 0.0
    %847 = vmatpush1.xpose.msra.mxu0 0.0
    %848 = vmatprep.subr.mxu0 0.0
    %849 = vmatpush1.xpose.msra.mxu0 0.0
    %850 = vmatprep.subr.mxu0 0.0
    %851 = vmatpush1.xpose.msra.mxu0 0.0
    %852 = vmatprep.subr.mxu0 0.0
    %853 = vmatpush1.xpose.msra.mxu0 0.0
    %854 = vmatprep.mubr.f32.mxu0 0.0
    %855 = vmatmul.mubr.f32.gmra.mrb[0].mxu0 %v785
    %v856 = vpop.f32.mrb[0].mxu0
    %v857 = vadd.f32 0.0, %v856
    %v858 = vpop.f32.mrb[0].mxu0
    %859 = vdwg.mxu0
    %v861 = vsel %vm210, %v319, 0
    %v864 = vsel %vm210, %v327, 0
    %866 = vmatprep.subr.mxu0 0.0
    %867 = vmatpush1.xpose.msra.mxu0 %v864
    %868 = vmatprep.subr.mxu0 0.0
    %869 = vmatpush1.xpose.msra.mxu0 0.0
    %870 = vmatprep.subr.mxu0 0.0
    %871 = vmatpush1.xpose.msra.mxu0 0.0
    %872 = vmatprep.subr.mxu0 0.0
    %873 = vmatpush1.xpose.msra.mxu0 0.0
    %874 = vmatprep.subr.mxu0 0.0
    %875 = vmatpush1.xpose.msra.mxu0 0.0
    %876 = vmatprep.subr.mxu0 0.0
    %877 = vmatpush1.xpose.msra.mxu0 0.0
    %878 = vmatprep.subr.mxu0 0.0
    %879 = vmatpush1.xpose.msra.mxu0 0.0
    %880 = vmatprep.subr.mxu0 0.0
    %881 = vmatpush1.xpose.msra.mxu0 0.0
    %882 = vmatprep.subr.mxu0 0.0
    %883 = vmatpush1.xpose.msra.mxu0 0.0
    %884 = vmatprep.subr.mxu0 0.0
    %885 = vmatpush1.xpose.msra.mxu0 0.0
    %886 = vmatprep.subr.mxu0 0.0
    %887 = vmatpush1.xpose.msra.mxu0 0.0
    %888 = vmatprep.subr.mxu0 0.0
    %889 = vmatpush1.xpose.msra.mxu0 0.0
    %890 = vmatprep.subr.mxu0 0.0
    %891 = vmatpush1.xpose.msra.mxu0 0.0
    %892 = vmatprep.subr.mxu0 0.0
    %893 = vmatpush1.xpose.msra.mxu0 0.0
    %894 = vmatprep.subr.mxu0 0.0
    %895 = vmatpush1.xpose.msra.mxu0 0.0
    %896 = vmatprep.subr.mxu0 0.0
    %897 = vmatpush1.xpose.msra.mxu0 0.0
    %898 = vmatprep.subr.mxu0 0.0
    %899 = vmatpush1.xpose.msra.mxu0 0.0
    %900 = vmatprep.subr.mxu0 0.0
    %901 = vmatpush1.xpose.msra.mxu0 0.0
    %902 = vmatprep.subr.mxu0 0.0
    %903 = vmatpush1.xpose.msra.mxu0 0.0
    %904 = vmatprep.subr.mxu0 0.0
    %905 = vmatpush1.xpose.msra.mxu0 0.0
    %906 = vmatprep.subr.mxu0 0.0
    %907 = vmatpush1.xpose.msra.mxu0 0.0
    %908 = vmatprep.subr.mxu0 0.0
    %909 = vmatpush1.xpose.msra.mxu0 0.0
    %910 = vmatprep.subr.mxu0 0.0
    %911 = vmatpush1.xpose.msra.mxu0 0.0
    %912 = vmatprep.subr.mxu0 0.0
    %913 = vmatpush1.xpose.msra.mxu0 0.0
    %914 = vmatprep.subr.mxu0 0.0
    %915 = vmatpush1.xpose.msra.mxu0 0.0
    %916 = vmatprep.subr.mxu0 0.0
    %917 = vmatpush1.xpose.msra.mxu0 0.0
    %918 = vmatprep.subr.mxu0 0.0
    %919 = vmatpush1.xpose.msra.mxu0 0.0
    %920 = vmatprep.subr.mxu0 0.0
    %921 = vmatpush1.xpose.msra.mxu0 0.0
    %922 = vmatprep.subr.mxu0 0.0
    %923 = vmatpush1.xpose.msra.mxu0 0.0
    %924 = vmatprep.subr.mxu0 0.0
    %925 = vmatpush1.xpose.msra.mxu0 0.0
    %926 = vmatprep.subr.mxu0 0.0
    %927 = vmatpush1.xpose.msra.mxu0 0.0
    %928 = vmatprep.subr.mxu0 0.0
    %929 = vmatpush1.xpose.msra.mxu0 0.0
    %930 = vmatprep.mubr.f32.mxu0 0.0
    %931 = vmatmul.mubr.f32.gmra.mrb[0].mxu0 %v861
    %v932 = vpop.f32.mrb[0].mxu0
    %v933 = vadd.f32 0.0, %v932
    %v934 = vpop.f32.mrb[0].mxu0
    %935 = vdwg.mxu0
    %v936 = vmul.f32 %v401, 0.35355338
    %v937 = vmul.f32 %v477, 0.35355338
    %v938 = vmul.f32 %v553, 0.35355338
    %v939 = vmul.f32 %v629, 0.35355338
    %v940 = vmul.f32 %v705, 0.35355338
    %v941 = vmul.f32 %v781, 0.35355338
    %v942 = vmul.f32 %v857, 0.35355338
    %v943 = vmul.f32 %v933, 0.35355338
    %v952 = vlaneseq
    %v953 = vshrl.u32 %v952, 7
    %v954 = vsub.s32 0, %v953
    %v955 = vrot.slane %v110, %v954
    %v956 = vlaneseq
    %v957 = vshrl.u32 %v956, 7
    %v958 = vsub.s32 0, %v957
    %v959 = vrot.slane %v111, %v958
    %v960 = vlaneseq
    %v961 = vshrl.u32 %v960, 7
    %v962 = vsub.s32 0, %v961
    %v963 = vrot.slane %v112, %v962
    %v964 = vlaneseq
    %v965 = vshrl.u32 %v964, 7
    %v966 = vsub.s32 0, %v965
    %v967 = vrot.slane %v113, %v966
    %v968 = vlaneseq
    %v969 = vshrl.u32 %v968, 7
    %v970 = vsub.s32 0, %v969
    %v971 = vrot.slane %v114, %v970
    %v972 = vlaneseq
    %v973 = vshrl.u32 %v972, 7
    %v974 = vsub.s32 0, %v973
    %v975 = vrot.slane %v115, %v974
    %v976 = vlaneseq
    %v977 = vshrl.u32 %v976, 7
    %v978 = vsub.s32 0, %v977
    %v979 = vrot.slane %v116, %v978
    %v980 = vlaneseq
    %v981 = vshrl.u32 %v980, 7
    %v982 = vsub.s32 0, %v981
    %v983 = vrot.slane %v117, %v982
    %v992 = vadd.f32 %v936, %v955
    %v993 = vadd.f32 %v937, %v959
    %v994 = vadd.f32 %v938, %v963
    %v995 = vadd.f32 %v939, %v967
    %v996 = vadd.f32 %v940, %v971
    %v997 = vadd.f32 %v941, %v975
    %v998 = vadd.f32 %v942, %v979
    %v999 = vadd.f32 %v943, %v983
    %v1000 = vsel %vm210, %v992, -inf
    %1001 = vmax.xlane.f32.xlu0 %v1000
    %v1002 = vpop.xlane.xlu0 %1001
    %v1003 = vsel %vm210, %v993, -inf
    %1004 = vmax.xlane.f32.xlu0 %v1003
    %v1005 = vpop.xlane.xlu0 %1004
    %v1006 = vsel %vm210, %v994, -inf
    %1007 = vmax.xlane.f32.xlu0 %v1006
    %v1008 = vpop.xlane.xlu0 %1007
    %v1009 = vsel %vm210, %v995, -inf
    %1010 = vmax.xlane.f32.xlu0 %v1009
    %v1011 = vpop.xlane.xlu0 %1010
    %v1012 = vsel %vm210, %v996, -inf
    %1013 = vmax.xlane.f32.xlu0 %v1012
    %v1014 = vpop.xlane.xlu0 %1013
    %v1015 = vsel %vm210, %v997, -inf
    %1016 = vmax.xlane.f32.xlu0 %v1015
    %v1017 = vpop.xlane.xlu0 %1016
    %v1018 = vsel %vm210, %v998, -inf
    %1019 = vmax.xlane.f32.xlu0 %v1018
    %v1020 = vpop.xlane.xlu0 %1019
    %v1021 = vsel %vm210, %v999, -inf
    %1022 = vmax.xlane.f32.xlu0 %v1021
    %v1023 = vpop.xlane.xlu0 %1022
    %v1024 = vsub.f32 %v992, %v1002
    %v1025 = vsub.f32 %v993, %v1005
    %v1026 = vsub.f32 %v994, %v1008
    %v1027 = vsub.f32 %v995, %v1011
    %v1028 = vsub.f32 %v996, %v1014
    %v1029 = vsub.f32 %v997, %v1017
    %v1030 = vsub.f32 %v998, %v1020
    %v1031 = vsub.f32 %v999, %v1023
    %v1032 = vmul.f32 %v1024, 1.442695
    %v1033 = vpow.pop %v1032
    %v1034 = vmul.f32 %v1025, 1.442695
    %v1035 = vpow.pop %v1034
    %v1036 = vmul.f32 %v1026, 1.442695
    %v1037 = vpow.pop %v1036
    %v1038 = vmul.f32 %v1027, 1.442695
    %v1039 = vpow.pop %v1038
    %v1040 = vmul.f32 %v1028, 1.442695
    %v1041 = vpow.pop %v1040
    %v1042 = vmul.f32 %v1029, 1.442695
    %v1043 = vpow.pop %v1042
    %v1044 = vmul.f32 %v1030, 1.442695
    %v1045 = vpow.pop %v1044
    %v1046 = vmul.f32 %v1031, 1.442695
    %v1047 = vpow.pop %v1046
    %v1048 = vsel %vm210, %v1033, 0.0
    %1049 = vadd.xlane.f32.xlu0 %v1048
    %v1050 = vpop.xlane.xlu0 %1049
    %v1051 = vsel %vm210, %v1035, 0.0
    %1052 = vadd.xlane.f32.xlu0 %v1051
    %v1053 = vpop.xlane.xlu0 %1052
    %v1054 = vsel %vm210, %v1037, 0.0
    %1055 = vadd.xlane.f32.xlu0 %v1054
    %v1056 = vpop.xlane.xlu0 %1055
    %v1057 = vsel %vm210, %v1039, 0.0
    %1058 = vadd.xlane.f32.xlu0 %v1057
    %v1059 = vpop.xlane.xlu0 %1058
    %v1060 = vsel %vm210, %v1041, 0.0
    %1061 = vadd.xlane.f32.xlu0 %v1060
    %v1062 = vpop.xlane.xlu0 %1061
    %v1063 = vsel %vm210, %v1043, 0.0
    %1064 = vadd.xlane.f32.xlu0 %v1063
    %v1065 = vpop.xlane.xlu0 %1064
    %v1066 = vsel %vm210, %v1045, 0.0
    %1067 = vadd.xlane.f32.xlu0 %v1066
    %v1068 = vpop.xlane.xlu0 %1067
    %v1069 = vsel %vm210, %v1047, 0.0
    %1070 = vadd.xlane.f32.xlu0 %v1069
    %v1071 = vpop.xlane.xlu0 %1070
    %v1072 = vrcp.pop %v1050
    %v1073 = vrcp.pop %v1053
    %v1074 = vrcp.pop %v1056
    %v1075 = vrcp.pop %v1059
    %v1076 = vrcp.pop %v1062
    %v1077 = vrcp.pop %v1065
    %v1078 = vrcp.pop %v1068
    %v1079 = vrcp.pop %v1071
    %v1080 = vmul.f32 %v1033, %v1072
    %v1081 = vmul.f32 %v1035, %v1073
    %v1082 = vmul.f32 %v1037, %v1074
    %v1083 = vmul.f32 %v1039, %v1075
    %v1084 = vmul.f32 %v1041, %v1076
    %v1085 = vmul.f32 %v1043, %v1077
    %v1086 = vmul.f32 %v1045, %v1078
    %v1087 = vmul.f32 %v1047, %v1079
    %v1088 = vld [vmem:[#allocation4] sm:$0xff]
    %v1089 = vld [vmem:[#allocation4 + $0x8] sm:$0xff]
    %v1090 = vld [vmem:[#allocation4 + $0x10] sm:$0xff]
    %v1091 = vld [vmem:[#allocation4 + $0x18] sm:$0xff]
    %v1092 = vld [vmem:[#allocation4 + $0x20] sm:$0xff]
    %v1093 = vld [vmem:[#allocation4 + $0x28] sm:$0xff]
    %v1094 = vld [vmem:[#allocation4 + $0x30] sm:$0xff]
    %v1095 = vld [vmem:[#allocation4 + $0x38] sm:$0xff]
    %v1097 = vsel %vm210, %v1080, 0
    %1099 = vmatprep.subr.mxu0 0.0
    %1100 = vmatpush1.msra.mxu0 %v1088
    %1101 = vmatprep.subr.mxu0 0.0
    %1102 = vmatpush1.msra.mxu0 0.0
    %1103 = vmatprep.subr.mxu0 0.0
    %1104 = vmatpush1.msra.mxu0 0.0
    %1105 = vmatprep.subr.mxu0 0.0
    %1106 = vmatpush1.msra.mxu0 0.0
    %1107 = vmatprep.subr.mxu0 0.0
    %1108 = vmatpush1.msra.mxu0 0.0
    %1109 = vmatprep.subr.mxu0 0.0
    %1110 = vmatpush1.msra.mxu0 0.0
    %1111 = vmatprep.subr.mxu0 0.0
    %1112 = vmatpush1.msra.mxu0 0.0
    %1113 = vmatprep.subr.mxu0 0.0
    %1114 = vmatpush1.msra.mxu0 0.0
    %1115 = vmatprep.subr.mxu0 0.0
    %1116 = vmatpush1.msra.mxu0 0.0
    %1117 = vmatprep.subr.mxu0 0.0
    %1118 = vmatpush1.msra.mxu0 0.0
    %1119 = vmatprep.subr.mxu0 0.0
    %1120 = vmatpush1.msra.mxu0 0.0
    %1121 = vmatprep.subr.mxu0 0.0
    %1122 = vmatpush1.msra.mxu0 0.0
    %1123 = vmatprep.subr.mxu0 0.0
    %1124 = vmatpush1.msra.mxu0 0.0
    %1125 = vmatprep.subr.mxu0 0.0
    %1126 = vmatpush1.msra.mxu0 0.0
    %1127 = vmatprep.subr.mxu0 0.0
    %1128 = vmatpush1.msra.mxu0 0.0
    %1129 = vmatprep.subr.mxu0 0.0
    %1130 = vmatpush1.msra.mxu0 0.0
    %1131 = vmatprep.subr.mxu0 0.0
    %1132 = vmatpush1.msra.mxu0 0.0
    %1133 = vmatprep.subr.mxu0 0.0
    %1134 = vmatpush1.msra.mxu0 0.0
    %1135 = vmatprep.subr.mxu0 0.0
    %1136 = vmatpush1.msra.mxu0 0.0
    %1137 = vmatprep.subr.mxu0 0.0
    %1138 = vmatpush1.msra.mxu0 0.0
    %1139 = vmatprep.subr.mxu0 0.0
    %1140 = vmatpush1.msra.mxu0 0.0
    %1141 = vmatprep.subr.mxu0 0.0
    %1142 = vmatpush1.msra.mxu0 0.0
    %1143 = vmatprep.subr.mxu0 0.0
    %1144 = vmatpush1.msra.mxu0 0.0
    %1145 = vmatprep.subr.mxu0 0.0
    %1146 = vmatpush1.msra.mxu0 0.0
    %1147 = vmatprep.subr.mxu0 0.0
    %1148 = vmatpush1.msra.mxu0 0.0
    %1149 = vmatprep.subr.mxu0 0.0
    %1150 = vmatpush1.msra.mxu0 0.0
    %1151 = vmatprep.subr.mxu0 0.0
    %1152 = vmatpush1.msra.mxu0 0.0
    %1153 = vmatprep.subr.mxu0 0.0
    %1154 = vmatpush1.msra.mxu0 0.0
    %1155 = vmatprep.subr.mxu0 0.0
    %1156 = vmatpush1.msra.mxu0 0.0
    %1157 = vmatprep.subr.mxu0 0.0
    %1158 = vmatpush1.msra.mxu0 0.0
    %1159 = vmatprep.subr.mxu0 0.0
    %1160 = vmatpush1.msra.mxu0 0.0
    %1161 = vmatprep.subr.mxu0 0.0
    %1162 = vmatpush1.msra.mxu0 0.0
    %1163 = vmatprep.mubr.f32.mxu0 0.0
    %1164 = vmatmul.mubr.f32.gmra.mrb[0].mxu0 %v1097
    %v1165 = vpop.f32.mrb[0].mxu0
    %v1166 = vadd.f32 0.0, %v1165
    %v1167 = vpop.f32.mrb[0].mxu0
    %1168 = vdwg.mxu0
    %v1170 = vsel %vm210, %v1081, 0
    %1172 = vmatprep.subr.mxu0 0.0
    %1173 = vmatpush1.msra.mxu0 %v1089
    %1174 = vmatprep.subr.mxu0 0.0
    %1175 = vmatpush1.msra.mxu0 0.0
    %1176 = vmatprep.subr.mxu0 0.0
    %1177 = vmatpush1.msra.mxu0 0.0
    %1178 = vmatprep.subr.mxu0 0.0
    %1179 = vmatpush1.msra.mxu0 0.0
    %1180 = vmatprep.subr.mxu0 0.0
    %1181 = vmatpush1.msra.mxu0 0.0
    %1182 = vmatprep.subr.mxu0 0.0
    %1183 = vmatpush1.msra.mxu0 0.0
    %1184 = vmatprep.subr.mxu0 0.0
    %1185 = vmatpush1.msra.mxu0 0.0
    %1186 = vmatprep.subr.mxu0 0.0
    %1187 = vmatpush1.msra.mxu0 0.0
    %1188 = vmatprep.subr.mxu0 0.0
    %1189 = vmatpush1.msra.mxu0 0.0
    %1190 = vmatprep.subr.mxu0 0.0
    %1191 = vmatpush1.msra.mxu0 0.0
    %1192 = vmatprep.subr.mxu0 0.0
    %1193 = vmatpush1.msra.mxu0 0.0
    %1194 = vmatprep.subr.mxu0 0.0
    %1195 = vmatpush1.msra.mxu0 0.0
    %1196 = vmatprep.subr.mxu0 0.0
    %1197 = vmatpush1.msra.mxu0 0.0
    %1198 = vmatprep.subr.mxu0 0.0
    %1199 = vmatpush1.msra.mxu0 0.0
    %1200 = vmatprep.subr.mxu0 0.0
    %1201 = vmatpush1.msra.mxu0 0.0
    %1202 = vmatprep.subr.mxu0 0.0
    %1203 = vmatpush1.msra.mxu0 0.0
    %1204 = vmatprep.subr.mxu0 0.0
    %1205 = vmatpush1.msra.mxu0 0.0
    %1206 = vmatprep.subr.mxu0 0.0
    %1207 = vmatpush1.msra.mxu0 0.0
    %1208 = vmatprep.subr.mxu0 0.0
    %1209 = vmatpush1.msra.mxu0 0.0
    %1210 = vmatprep.subr.mxu0 0.0
    %1211 = vmatpush1.msra.mxu0 0.0
    %1212 = vmatprep.subr.mxu0 0.0
    %1213 = vmatpush1.msra.mxu0 0.0
    %1214 = vmatprep.subr.mxu0 0.0
    %1215 = vmatpush1.msra.mxu0 0.0
    %1216 = vmatprep.subr.mxu0 0.0
    %1217 = vmatpush1.msra.mxu0 0.0
    %1218 = vmatprep.subr.mxu0 0.0
    %1219 = vmatpush1.msra.mxu0 0.0
    %1220 = vmatprep.subr.mxu0 0.0
    %1221 = vmatpush1.msra.mxu0 0.0
    %1222 = vmatprep.subr.mxu0 0.0
    %1223 = vmatpush1.msra.mxu0 0.0
    %1224 = vmatprep.subr.mxu0 0.0
    %1225 = vmatpush1.msra.mxu0 0.0
    %1226 = vmatprep.subr.mxu0 0.0
    %1227 = vmatpush1.msra.mxu0 0.0
    %1228 = vmatprep.subr.mxu0 0.0
    %1229 = vmatpush1.msra.mxu0 0.0
    %1230 = vmatprep.subr.mxu0 0.0
    %1231 = vmatpush1.msra.mxu0 0.0
    %1232 = vmatprep.subr.mxu0 0.0
    %1233 = vmatpush1.msra.mxu0 0.0
    %1234 = vmatprep.subr.mxu0 0.0
    %1235 = vmatpush1.msra.mxu0 0.0
    %1236 = vmatprep.mubr.f32.mxu0 0.0
    %1237 = vmatmul.mubr.f32.gmra.mrb[0].mxu0 %v1170
    %v1238 = vpop.f32.mrb[0].mxu0
    %v1239 = vadd.f32 0.0, %v1238
    %v1240 = vpop.f32.mrb[0].mxu0
    %1241 = vdwg.mxu0
    %v1243 = vsel %vm210, %v1082, 0
    %1245 = vmatprep.subr.mxu0 0.0
    %1246 = vmatpush1.msra.mxu0 %v1090
    %1247 = vmatprep.subr.mxu0 0.0
    %1248 = vmatpush1.msra.mxu0 0.0
    %1249 = vmatprep.subr.mxu0 0.0
    %1250 = vmatpush1.msra.mxu0 0.0
    %1251 = vmatprep.subr.mxu0 0.0
    %1252 = vmatpush1.msra.mxu0 0.0
    %1253 = vmatprep.subr.mxu0 0.0
    %1254 = vmatpush1.msra.mxu0 0.0
    %1255 = vmatprep.subr.mxu0 0.0
    %1256 = vmatpush1.msra.mxu0 0.0
    %1257 = vmatprep.subr.mxu0 0.0
    %1258 = vmatpush1.msra.mxu0 0.0
    %1259 = vmatprep.subr.mxu0 0.0
    %1260 = vmatpush1.msra.mxu0 0.0
    %1261 = vmatprep.subr.mxu0 0.0
    %1262 = vmatpush1.msra.mxu0 0.0
    %1263 = vmatprep.subr.mxu0 0.0
    %1264 = vmatpush1.msra.mxu0 0.0
    %1265 = vmatprep.subr.mxu0 0.0
    %1266 = vmatpush1.msra.mxu0 0.0
    %1267 = vmatprep.subr.mxu0 0.0
    %1268 = vmatpush1.msra.mxu0 0.0
    %1269 = vmatprep.subr.mxu0 0.0
    %1270 = vmatpush1.msra.mxu0 0.0
    %1271 = vmatprep.subr.mxu0 0.0
    %1272 = vmatpush1.msra.mxu0 0.0
    %1273 = vmatprep.subr.mxu0 0.0
    %1274 = vmatpush1.msra.mxu0 0.0
    %1275 = vmatprep.subr.mxu0 0.0
    %1276 = vmatpush1.msra.mxu0 0.0
    %1277 = vmatprep.subr.mxu0 0.0
    %1278 = vmatpush1.msra.mxu0 0.0
    %1279 = vmatprep.subr.mxu0 0.0
    %1280 = vmatpush1.msra.mxu0 0.0
    %1281 = vmatprep.subr.mxu0 0.0
    %1282 = vmatpush1.msra.mxu0 0.0
    %1283 = vmatprep.subr.mxu0 0.0
    %1284 = vmatpush1.msra.mxu0 0.0
    %1285 = vmatprep.subr.mxu0 0.0
    %1286 = vmatpush1.msra.mxu0 0.0
    %1287 = vmatprep.subr.mxu0 0.0
    %1288 = vmatpush1.msra.mxu0 0.0
    %1289 = vmatprep.subr.mxu0 0.0
    %1290 = vmatpush1.msra.mxu0 0.0
    %1291 = vmatprep.subr.mxu0 0.0
    %1292 = vmatpush1.msra.mxu0 0.0
    %1293 = vmatprep.subr.mxu0 0.0
    %1294 = vmatpush1.msra.mxu0 0.0
    %1295 = vmatprep.subr.mxu0 0.0
    %1296 = vmatpush1.msra.mxu0 0.0
    %1297 = vmatprep.subr.mxu0 0.0
    %1298 = vmatpush1.msra.mxu0 0.0
    %1299 = vmatprep.subr.mxu0 0.0
    %1300 = vmatpush1.msra.mxu0 0.0
    %1301 = vmatprep.subr.mxu0 0.0
    %1302 = vmatpush1.msra.mxu0 0.0
    %1303 = vmatprep.subr.mxu0 0.0
    %1304 = vmatpush1.msra.mxu0 0.0
    %1305 = vmatprep.subr.mxu0 0.0
    %1306 = vmatpush1.msra.mxu0 0.0
    %1307 = vmatprep.subr.mxu0 0.0
    %1308 = vmatpush1.msra.mxu0 0.0
    %1309 = vmatprep.mubr.f32.mxu0 0.0
    %1310 = vmatmul.mubr.f32.gmra.mrb[0].mxu0 %v1243
    %v1311 = vpop.f32.mrb[0].mxu0
    %v1312 = vadd.f32 0.0, %v1311
    %v1313 = vpop.f32.mrb[0].mxu0
    %1314 = vdwg.mxu0
    %v1316 = vsel %vm210, %v1083, 0
    %1318 = vmatprep.subr.mxu0 0.0
    %1319 = vmatpush1.msra.mxu0 %v1091
    %1320 = vmatprep.subr.mxu0 0.0
    %1321 = vmatpush1.msra.mxu0 0.0
    %1322 = vmatprep.subr.mxu0 0.0
    %1323 = vmatpush1.msra.mxu0 0.0
    %1324 = vmatprep.subr.mxu0 0.0
    %1325 = vmatpush1.msra.mxu0 0.0
    %1326 = vmatprep.subr.mxu0 0.0
    %1327 = vmatpush1.msra.mxu0 0.0
    %1328 = vmatprep.subr.mxu0 0.0
    %1329 = vmatpush1.msra.mxu0 0.0
    %1330 = vmatprep.subr.mxu0 0.0
    %1331 = vmatpush1.msra.mxu0 0.0
    %1332 = vmatprep.subr.mxu0 0.0
    %1333 = vmatpush1.msra.mxu0 0.0
    %1334 = vmatprep.subr.mxu0 0.0
    %1335 = vmatpush1.msra.mxu0 0.0
    %1336 = vmatprep.subr.mxu0 0.0
    %1337 = vmatpush1.msra.mxu0 0.0
    %1338 = vmatprep.subr.mxu0 0.0
    %1339 = vmatpush1.msra.mxu0 0.0
    %1340 = vmatprep.subr.mxu0 0.0
    %1341 = vmatpush1.msra.mxu0 0.0
    %1342 = vmatprep.subr.mxu0 0.0
    %1343 = vmatpush1.msra.mxu0 0.0
    %1344 = vmatprep.subr.mxu0 0.0
    %1345 = vmatpush1.msra.mxu0 0.0
    %1346 = vmatprep.subr.mxu0 0.0
    %1347 = vmatpush1.msra.mxu0 0.0
    %1348 = vmatprep.subr.mxu0 0.0
    %1349 = vmatpush1.msra.mxu0 0.0
    %1350 = vmatprep.subr.mxu0 0.0
    %1351 = vmatpush1.msra.mxu0 0.0
    %1352 = vmatprep.subr.mxu0 0.0
    %1353 = vmatpush1.msra.mxu0 0.0
    %1354 = vmatprep.subr.mxu0 0.0
    %1355 = vmatpush1.msra.mxu0 0.0
    %1356 = vmatprep.subr.mxu0 0.0
    %1357 = vmatpush1.msra.mxu0 0.0
    %1358 = vmatprep.subr.mxu0 0.0
    %1359 = vmatpush1.msra.mxu0 0.0
    %1360 = vmatprep.subr.mxu0 0.0
    %1361 = vmatpush1.msra.mxu0 0.0
    %1362 = vmatprep.subr.mxu0 0.0
    %1363 = vmatpush1.msra.mxu0 0.0
    %1364 = vmatprep.subr.mxu0 0.0
    %1365 = vmatpush1.msra.mxu0 0.0
    %1366 = vmatprep.subr.mxu0 0.0
    %1367 = vmatpush1.msra.mxu0 0.0
    %1368 = vmatprep.subr.mxu0 0.0
    %1369 = vmatpush1.msra.mxu0 0.0
    %1370 = vmatprep.subr.mxu0 0.0
    %1371 = vmatpush1.msra.mxu0 0.0
    %1372 = vmatprep.subr.mxu0 0.0
    %1373 = vmatpush1.msra.mxu0 0.0
    %1374 = vmatprep.subr.mxu0 0.0
    %1375 = vmatpush1.msra.mxu0 0.0
    %1376 = vmatprep.subr.mxu0 0.0
    %1377 = vmatpush1.msra.mxu0 0.0
    %1378 = vmatprep.subr.mxu0 0.0
    %1379 = vmatpush1.msra.mxu0 0.0
    %1380 = vmatprep.subr.mxu0 0.0
    %1381 = vmatpush1.msra.mxu0 0.0
    %1382 = vmatprep.mubr.f32.mxu0 0.0
    %1383 = vmatmul.mubr.f32.gmra.mrb[0].mxu0 %v1316
    %v1384 = vpop.f32.mrb[0].mxu0
    %v1385 = vadd.f32 0.0, %v1384
    %v1386 = vpop.f32.mrb[0].mxu0
    %1387 = vdwg.mxu0
    %v1389 = vsel %vm210, %v1084, 0
    %1391 = vmatprep.subr.mxu0 0.0
    %1392 = vmatpush1.msra.mxu0 %v1092
    %1393 = vmatprep.subr.mxu0 0.0
    %1394 = vmatpush1.msra.mxu0 0.0
    %1395 = vmatprep.subr.mxu0 0.0
    %1396 = vmatpush1.msra.mxu0 0.0
    %1397 = vmatprep.subr.mxu0 0.0
    %1398 = vmatpush1.msra.mxu0 0.0
    %1399 = vmatprep.subr.mxu0 0.0
    %1400 = vmatpush1.msra.mxu0 0.0
    %1401 = vmatprep.subr.mxu0 0.0
    %1402 = vmatpush1.msra.mxu0 0.0
    %1403 = vmatprep.subr.mxu0 0.0
    %1404 = vmatpush1.msra.mxu0 0.0
    %1405 = vmatprep.subr.mxu0 0.0
    %1406 = vmatpush1.msra.mxu0 0.0
    %1407 = vmatprep.subr.mxu0 0.0
    %1408 = vmatpush1.msra.mxu0 0.0
    %1409 = vmatprep.subr.mxu0 0.0
    %1410 = vmatpush1.msra.mxu0 0.0
    %1411 = vmatprep.subr.mxu0 0.0
    %1412 = vmatpush1.msra.mxu0 0.0
    %1413 = vmatprep.subr.mxu0 0.0
    %1414 = vmatpush1.msra.mxu0 0.0
    %1415 = vmatprep.subr.mxu0 0.0
    %1416 = vmatpush1.msra.mxu0 0.0
    %1417 = vmatprep.subr.mxu0 0.0
    %1418 = vmatpush1.msra.mxu0 0.0
    %1419 = vmatprep.subr.mxu0 0.0
    %1420 = vmatpush1.msra.mxu0 0.0
    %1421 = vmatprep.subr.mxu0 0.0
    %1422 = vmatpush1.msra.mxu0 0.0
    %1423 = vmatprep.subr.mxu0 0.0
    %1424 = vmatpush1.msra.mxu0 0.0
    %1425 = vmatprep.subr.mxu0 0.0
    %1426 = vmatpush1.msra.mxu0 0.0
    %1427 = vmatprep.subr.mxu0 0.0
    %1428 = vmatpush1.msra.mxu0 0.0
    %1429 = vmatprep.subr.mxu0 0.0
    %1430 = vmatpush1.msra.mxu0 0.0
    %1431 = vmatprep.subr.mxu0 0.0
    %1432 = vmatpush1.msra.mxu0 0.0
    %1433 = vmatprep.subr.mxu0 0.0
    %1434 = vmatpush1.msra.mxu0 0.0
    %1435 = vmatprep.subr.mxu0 0.0
    %1436 = vmatpush1.msra.mxu0 0.0
    %1437 = vmatprep.subr.mxu0 0.0
    %1438 = vmatpush1.msra.mxu0 0.0
    %1439 = vmatprep.subr.mxu0 0.0
    %1440 = vmatpush1.msra.mxu0 0.0
    %1441 = vmatprep.subr.mxu0 0.0
    %1442 = vmatpush1.msra.mxu0 0.0
    %1443 = vmatprep.subr.mxu0 0.0
    %1444 = vmatpush1.msra.mxu0 0.0
    %1445 = vmatprep.subr.mxu0 0.0
    %1446 = vmatpush1.msra.mxu0 0.0
    %1447 = vmatprep.subr.mxu0 0.0
    %1448 = vmatpush1.msra.mxu0 0.0
    %1449 = vmatprep.subr.mxu0 0.0
    %1450 = vmatpush1.msra.mxu0 0.0
    %1451 = vmatprep.subr.mxu0 0.0
    %1452 = vmatpush1.msra.mxu0 0.0
    %1453 = vmatprep.subr.mxu0 0.0
    %1454 = vmatpush1.msra.mxu0 0.0
    %1455 = vmatprep.mubr.f32.mxu0 0.0
    %1456 = vmatmul.mubr.f32.gmra.mrb[0].mxu0 %v1389
    %v1457 = vpop.f32.mrb[0].mxu0
    %v1458 = vadd.f32 0.0, %v1457
    %v1459 = vpop.f32.mrb[0].mxu0
    %1460 = vdwg.mxu0
    %v1462 = vsel %vm210, %v1085, 0
    %1464 = vmatprep.subr.mxu0 0.0
    %1465 = vmatpush1.msra.mxu0 %v1093
    %1466 = vmatprep.subr.mxu0 0.0
    %1467 = vmatpush1.msra.mxu0 0.0
    %1468 = vmatprep.subr.mxu0 0.0
    %1469 = vmatpush1.msra.mxu0 0.0
    %1470 = vmatprep.subr.mxu0 0.0
    %1471 = vmatpush1.msra.mxu0 0.0
    %1472 = vmatprep.subr.mxu0 0.0
    %1473 = vmatpush1.msra.mxu0 0.0
    %1474 = vmatprep.subr.mxu0 0.0
    %1475 = vmatpush1.msra.mxu0 0.0
    %1476 = vmatprep.subr.mxu0 0.0
    %1477 = vmatpush1.msra.mxu0 0.0
    %1478 = vmatprep.subr.mxu0 0.0
    %1479 = vmatpush1.msra.mxu0 0.0
    %1480 = vmatprep.subr.mxu0 0.0
    %1481 = vmatpush1.msra.mxu0 0.0
    %1482 = vmatprep.subr.mxu0 0.0
    %1483 = vmatpush1.msra.mxu0 0.0
    %1484 = vmatprep.subr.mxu0 0.0
    %1485 = vmatpush1.msra.mxu0 0.0
    %1486 = vmatprep.subr.mxu0 0.0
    %1487 = vmatpush1.msra.mxu0 0.0
    %1488 = vmatprep.subr.mxu0 0.0
    %1489 = vmatpush1.msra.mxu0 0.0
    %1490 = vmatprep.subr.mxu0 0.0
    %1491 = vmatpush1.msra.mxu0 0.0
    %1492 = vmatprep.subr.mxu0 0.0
    %1493 = vmatpush1.msra.mxu0 0.0
    %1494 = vmatprep.subr.mxu0 0.0
    %1495 = vmatpush1.msra.mxu0 0.0
    %1496 = vmatprep.subr.mxu0 0.0
    %1497 = vmatpush1.msra.mxu0 0.0
    %1498 = vmatprep.subr.mxu0 0.0
    %1499 = vmatpush1.msra.mxu0 0.0
    %1500 = vmatprep.subr.mxu0 0.0
    %1501 = vmatpush1.msra.mxu0 0.0
    %1502 = vmatprep.subr.mxu0 0.0
    %1503 = vmatpush1.msra.mxu0 0.0
    %1504 = vmatprep.subr.mxu0 0.0
    %1505 = vmatpush1.msra.mxu0 0.0
    %1506 = vmatprep.subr.mxu0 0.0
    %1507 = vmatpush1.msra.mxu0 0.0
    %1508 = vmatprep.subr.mxu0 0.0
    %1509 = vmatpush1.msra.mxu0 0.0
    %1510 = vmatprep.subr.mxu0 0.0
    %1511 = vmatpush1.msra.mxu0 0.0
    %1512 = vmatprep.subr.mxu0 0.0
    %1513 = vmatpush1.msra.mxu0 0.0
    %1514 = vmatprep.subr.mxu0 0.0
    %1515 = vmatpush1.msra.mxu0 0.0
    %1516 = vmatprep.subr.mxu0 0.0
    %1517 = vmatpush1.msra.mxu0 0.0
    %1518 = vmatprep.subr.mxu0 0.0
    %1519 = vmatpush1.msra.mxu0 0.0
    %1520 = vmatprep.subr.mxu0 0.0
    %1521 = vmatpush1.msra.mxu0 0.0
    %1522 = vmatprep.subr.mxu0 0.0
    %1523 = vmatpush1.msra.mxu0 0.0
    %1524 = vmatprep.subr.mxu0 0.0
    %1525 = vmatpush1.msra.mxu0 0.0
    %1526 = vmatprep.subr.mxu0 0.0
    %1527 = vmatpush1.msra.mxu0 0.0
    %1528 = vmatprep.mubr.f32.mxu0 0.0
    %1529 = vmatmul.mubr.f32.gmra.mrb[0].mxu0 %v1462
    %v1530 = vpop.f32.mrb[0].mxu0
    %v1531 = vadd.f32 0.0, %v1530
    %v1532 = vpop.f32.mrb[0].mxu0
    %1533 = vdwg.mxu0
    %v1535 = vsel %vm210, %v1086, 0
    %1537 = vmatprep.subr.mxu0 0.0
    %1538 = vmatpush1.msra.mxu0 %v1094
    %1539 = vmatprep.subr.mxu0 0.0
    %1540 = vmatpush1.msra.mxu0 0.0
    %1541 = vmatprep.subr.mxu0 0.0
    %1542 = vmatpush1.msra.mxu0 0.0
    %1543 = vmatprep.subr.mxu0 0.0
    %1544 = vmatpush1.msra.mxu0 0.0
    %1545 = vmatprep.subr.mxu0 0.0
    %1546 = vmatpush1.msra.mxu0 0.0
    %1547 = vmatprep.subr.mxu0 0.0
    %1548 = vmatpush1.msra.mxu0 0.0
    %1549 = vmatprep.subr.mxu0 0.0
    %1550 = vmatpush1.msra.mxu0 0.0
    %1551 = vmatprep.subr.mxu0 0.0
    %1552 = vmatpush1.msra.mxu0 0.0
    %1553 = vmatprep.subr.mxu0 0.0
    %1554 = vmatpush1.msra.mxu0 0.0
    %1555 = vmatprep.subr.mxu0 0.0
    %1556 = vmatpush1.msra.mxu0 0.0
    %1557 = vmatprep.subr.mxu0 0.0
    %1558 = vmatpush1.msra.mxu0 0.0
    %1559 = vmatprep.subr.mxu0 0.0
    %1560 = vmatpush1.msra.mxu0 0.0
    %1561 = vmatprep.subr.mxu0 0.0
    %1562 = vmatpush1.msra.mxu0 0.0
    %1563 = vmatprep.subr.mxu0 0.0
    %1564 = vmatpush1.msra.mxu0 0.0
    %1565 = vmatprep.subr.mxu0 0.0
    %1566 = vmatpush1.msra.mxu0 0.0
    %1567 = vmatprep.subr.mxu0 0.0
    %1568 = vmatpush1.msra.mxu0 0.0
    %1569 = vmatprep.subr.mxu0 0.0
    %1570 = vmatpush1.msra.mxu0 0.0
    %1571 = vmatprep.subr.mxu0 0.0
    %1572 = vmatpush1.msra.mxu0 0.0
    %1573 = vmatprep.subr.mxu0 0.0
    %1574 = vmatpush1.msra.mxu0 0.0
    %1575 = vmatprep.subr.mxu0 0.0
    %1576 = vmatpush1.msra.mxu0 0.0
    %1577 = vmatprep.subr.mxu0 0.0
    %1578 = vmatpush1.msra.mxu0 0.0
    %1579 = vmatprep.subr.mxu0 0.0
    %1580 = vmatpush1.msra.mxu0 0.0
    %1581 = vmatprep.subr.mxu0 0.0
    %1582 = vmatpush1.msra.mxu0 0.0
    %1583 = vmatprep.subr.mxu0 0.0
    %1584 = vmatpush1.msra.mxu0 0.0
    %1585 = vmatprep.subr.mxu0 0.0
    %1586 = vmatpush1.msra.mxu0 0.0
    %1587 = vmatprep.subr.mxu0 0.0
    %1588 = vmatpush1.msra.mxu0 0.0
    %1589 = vmatprep.subr.mxu0 0.0
    %1590 = vmatpush1.msra.mxu0 0.0
    %1591 = vmatprep.subr.mxu0 0.0
    %1592 = vmatpush1.msra.mxu0 0.0
    %1593 = vmatprep.subr.mxu0 0.0
    %1594 = vmatpush1.msra.mxu0 0.0
    %1595 = vmatprep.subr.mxu0 0.0
    %1596 = vmatpush1.msra.mxu0 0.0
    %1597 = vmatprep.subr.mxu0 0.0
    %1598 = vmatpush1.msra.mxu0 0.0
    %1599 = vmatprep.subr.mxu0 0.0
    %1600 = vmatpush1.msra.mxu0 0.0
    %1601 = vmatprep.mubr.f32.mxu0 0.0
    %1602 = vmatmul.mubr.f32.gmra.mrb[0].mxu0 %v1535
    %v1603 = vpop.f32.mrb[0].mxu0
    %v1604 = vadd.f32 0.0, %v1603
    %v1605 = vpop.f32.mrb[0].mxu0
    %1606 = vdwg.mxu0
    %v1608 = vsel %vm210, %v1087, 0
    %1610 = vmatprep.subr.mxu0 0.0
    %1611 = vmatpush1.msra.mxu0 %v1095
    %1612 = vmatprep.subr.mxu0 0.0
    %1613 = vmatpush1.msra.mxu0 0.0
    %1614 = vmatprep.subr.mxu0 0.0
    %1615 = vmatpush1.msra.mxu0 0.0
    %1616 = vmatprep.subr.mxu0 0.0
    %1617 = vmatpush1.msra.mxu0 0.0
    %1618 = vmatprep.subr.mxu0 0.0
    %1619 = vmatpush1.msra.mxu0 0.0
    %1620 = vmatprep.subr.mxu0 0.0
    %1621 = vmatpush1.msra.mxu0 0.0
    %1622 = vmatprep.subr.mxu0 0.0
    %1623 = vmatpush1.msra.mxu0 0.0
    %1624 = vmatprep.subr.mxu0 0.0
    %1625 = vmatpush1.msra.mxu0 0.0
    %1626 = vmatprep.subr.mxu0 0.0
    %1627 = vmatpush1.msra.mxu0 0.0
    %1628 = vmatprep.subr.mxu0 0.0
    %1629 = vmatpush1.msra.mxu0 0.0
    %1630 = vmatprep.subr.mxu0 0.0
    %1631 = vmatpush1.msra.mxu0 0.0
    %1632 = vmatprep.subr.mxu0 0.0
    %1633 = vmatpush1.msra.mxu0 0.0
    %1634 = vmatprep.subr.mxu0 0.0
    %1635 = vmatpush1.msra.mxu0 0.0
    %1636 = vmatprep.subr.mxu0 0.0
    %1637 = vmatpush1.msra.mxu0 0.0
    %1638 = vmatprep.subr.mxu0 0.0
    %1639 = vmatpush1.msra.mxu0 0.0
    %1640 = vmatprep.subr.mxu0 0.0
    %1641 = vmatpush1.msra.mxu0 0.0
    %1642 = vmatprep.subr.mxu0 0.0
    %1643 = vmatpush1.msra.mxu0 0.0
    %1644 = vmatprep.subr.mxu0 0.0
    %1645 = vmatpush1.msra.mxu0 0.0
    %1646 = vmatprep.subr.mxu0 0.0
    %1647 = vmatpush1.msra.mxu0 0.0
    %1648 = vmatprep.subr.mxu0 0.0
    %1649 = vmatpush1.msra.mxu0 0.0
    %1650 = vmatprep.subr.mxu0 0.0
    %1651 = vmatpush1.msra.mxu0 0.0
    %1652 = vmatprep.subr.mxu0 0.0
    %1653 = vmatpush1.msra.mxu0 0.0
    %1654 = vmatprep.subr.mxu0 0.0
    %1655 = vmatpush1.msra.mxu0 0.0
    %1656 = vmatprep.subr.mxu0 0.0
    %1657 = vmatpush1.msra.mxu0 0.0
    %1658 = vmatprep.subr.mxu0 0.0
    %1659 = vmatpush1.msra.mxu0 0.0
    %1660 = vmatprep.subr.mxu0 0.0
    %1661 = vmatpush1.msra.mxu0 0.0
    %1662 = vmatprep.subr.mxu0 0.0
    %1663 = vmatpush1.msra.mxu0 0.0
    %1664 = vmatprep.subr.mxu0 0.0
    %1665 = vmatpush1.msra.mxu0 0.0
    %1666 = vmatprep.subr.mxu0 0.0
    %1667 = vmatpush1.msra.mxu0 0.0
    %1668 = vmatprep.subr.mxu0 0.0
    %1669 = vmatpush1.msra.mxu0 0.0
    %1670 = vmatprep.subr.mxu0 0.0
    %1671 = vmatpush1.msra.mxu0 0.0
    %1672 = vmatprep.subr.mxu0 0.0
    %1673 = vmatpush1.msra.mxu0 0.0
    %1674 = vmatprep.mubr.f32.mxu0 0.0
    %1675 = vmatmul.mubr.f32.gmra.mrb[0].mxu0 %v1608
    %v1676 = vpop.f32.mrb[0].mxu0
    %v1677 = vadd.f32 0.0, %v1676
    %v1678 = vpop.f32.mrb[0].mxu0
    %1679 = vdwg.mxu0
    %1680 = vst.msk [vmem:[#allocation5] sm:$0xff] %vm210, %v1166
    %1681 = vst.msk [vmem:[#allocation5 + $0x8] sm:$0xff] %vm210, %v1239
    %1684 = vrot.lane.b32.xlu0 %v1312, 8
    %v1685 = vpop.permute.xlu0 %1684
    %1686 = vrot.lane.b32.xlu0 %v1385, 8
    %v1687 = vpop.permute.xlu0 %1686
    %vm1690 = vcmask 130112
    %1691 = vst.msk [vmem:[#allocation5] sm:$0xff] %vm1690, %v1685
    %1692 = vst.msk [vmem:[#allocation5 + $0x8] sm:$0xff] %vm1690, %v1687
    %1695 = vrot.lane.b32.xlu0 %v1458, 16
    %v1696 = vpop.permute.xlu0 %1695
    %1697 = vrot.lane.b32.xlu0 %v1531, 16
    %v1698 = vpop.permute.xlu0 %1697
    %vm1701 = vcmask 195712
    %1702 = vst.msk [vmem:[#allocation5] sm:$0xff] %vm1701, %v1696
    %1703 = vst.msk [vmem:[#allocation5 + $0x8] sm:$0xff] %vm1701, %v1698
    %1706 = vrot.lane.b32.xlu0 %v1604, 24
    %v1707 = vpop.permute.xlu0 %1706
    %1708 = vrot.lane.b32.xlu0 %v1677, 24
    %v1709 = vpop.permute.xlu0 %1708
    %vm1712 = vcmask 261312
    %1713 = vst.msk [vmem:[#allocation5] sm:$0xff] %vm1712, %v1707
    %1714 = vst.msk [vmem:[#allocation5 + $0x8] sm:$0xff] %vm1712, %v1709
    %v1715 = vld [vmem:[#allocation5] sm:$0xff]
    %v1716 = vld [vmem:[#allocation5 + $0x8] sm:$0xff]
    %v1717 = vld [vmem:[%s7] sm:$0xff]
    %v1718 = vld [vmem:[%s7 + $0x8] sm:$0xff]
    %v1719 = vld [vmem:[%s7 + $0x10] sm:$0xff]
    %v1720 = vld [vmem:[%s7 + $0x18] sm:$0xff]
    %v1721 = vld [vmem:[%s8] sm:$0x1]
    %v1723 = vlaneseq
    %v1724 = vshrl.u32 %v1723, 7
    %v1725 = vsub.s32 0, %v1724
    %v1726 = vrot.slane %v1721, %v1725
    %v1729 = vsel %vm67, %v1715, 0
    %v1732 = vsel %vm67, %v1716, 0
    %1734 = vmatprep.subr.mxu0 0.0
    %1735 = vmatpush1.msra.mxu0 %v1717
    %1736 = vmatprep.subr.mxu0 0.0
    %1737 = vmatpush1.msra.mxu0 %v1718
    %1738 = vmatprep.subr.mxu0 0.0
    %1739 = vmatpush1.msra.mxu0 %v1719
    %1740 = vmatprep.subr.mxu0 0.0
    %1741 = vmatpush1.msra.mxu0 %v1720
    %1742 = vmatprep.subr.mxu0 0.0
    %1743 = vmatpush1.msra.mxu0 0.0
    %1744 = vmatprep.subr.mxu0 0.0
    %1745 = vmatpush1.msra.mxu0 0.0
    %1746 = vmatprep.subr.mxu0 0.0
    %1747 = vmatpush1.msra.mxu0 0.0
    %1748 = vmatprep.subr.mxu0 0.0
    %1749 = vmatpush1.msra.mxu0 0.0
    %1750 = vmatprep.subr.mxu0 0.0
    %1751 = vmatpush1.msra.mxu0 0.0
    %1752 = vmatprep.subr.mxu0 0.0
    %1753 = vmatpush1.msra.mxu0 0.0
    %1754 = vmatprep.subr.mxu0 0.0
    %1755 = vmatpush1.msra.mxu0 0.0
    %1756 = vmatprep.subr.mxu0 0.0
    %1757 = vmatpush1.msra.mxu0 0.0
    %1758 = vmatprep.subr.mxu0 0.0
    %1759 = vmatpush1.msra.mxu0 0.0
    %1760 = vmatprep.subr.mxu0 0.0
    %1761 = vmatpush1.msra.mxu0 0.0
    %1762 = vmatprep.subr.mxu0 0.0
    %1763 = vmatpush1.msra.mxu0 0.0
    %1764 = vmatprep.subr.mxu0 0.0
    %1765 = vmatpush1.msra.mxu0 0.0
    %1766 = vmatprep.subr.mxu0 0.0
    %1767 = vmatpush1.msra.mxu0 0.0
    %1768 = vmatprep.subr.mxu0 0.0
    %1769 = vmatpush1.msra.mxu0 0.0
    %1770 = vmatprep.subr.mxu0 0.0
    %1771 = vmatpush1.msra.mxu0 0.0
    %1772 = vmatprep.subr.mxu0 0.0
    %1773 = vmatpush1.msra.mxu0 0.0
    %1774 = vmatprep.subr.mxu0 0.0
    %1775 = vmatpush1.msra.mxu0 0.0
    %1776 = vmatprep.subr.mxu0 0.0
    %1777 = vmatpush1.msra.mxu0 0.0
    %1778 = vmatprep.subr.mxu0 0.0
    %1779 = vmatpush1.msra.mxu0 0.0
    %1780 = vmatprep.subr.mxu0 0.0
    %1781 = vmatpush1.msra.mxu0 0.0
    %1782 = vmatprep.subr.mxu0 0.0
    %1783 = vmatpush1.msra.mxu0 0.0
    %1784 = vmatprep.subr.mxu0 0.0
    %1785 = vmatpush1.msra.mxu0 0.0
    %1786 = vmatprep.subr.mxu0 0.0
    %1787 = vmatpush1.msra.mxu0 0.0
    %1788 = vmatprep.subr.mxu0 0.0
    %1789 = vmatpush1.msra.mxu0 0.0
    %1790 = vmatprep.subr.mxu0 0.0
    %1791 = vmatpush1.msra.mxu0 0.0
    %1792 = vmatprep.subr.mxu0 0.0
    %1793 = vmatpush1.msra.mxu0 0.0
    %1794 = vmatprep.subr.mxu0 0.0
    %1795 = vmatpush1.msra.mxu0 0.0
    %1796 = vmatprep.subr.mxu0 0.0
    %1797 = vmatpush1.msra.mxu0 0.0
    %1798 = vmatprep.mubr.f32.mxu0 0.0
    %1799 = vmatmul.mubr.f32.gmra.mrb[0].mxu0 %v1729
    %v1800 = vpop.f32.mrb[0].mxu0
    %v1801 = vadd.f32 %v1726, %v1800
    %v1802 = vpop.f32.mrb[0].mxu0
    %1803 = vmatprep.mubr.f32.mxu0 0.0
    %1804 = vmatmul.mubr.f32.gmra.mrb[0].mxu0 %v1732
    %v1805 = vpop.f32.mrb[0].mxu0
    %v1806 = vadd.f32 %v1726, %v1805
    %v1807 = vpop.f32.mrb[0].mxu0
    %1808 = vdwg.mxu0
    %v1809 = vadd.f32 %v108, %v1801
    %v1810 = vadd.f32 %v109, %v1806
    %v1811 = vld [vmem:[%s9] sm:$0x1]
    %v1812 = vld [vmem:[%s10] sm:$0x1]
    %v1813 = vsel %vm67, %v1809, 0.0
    %1814 = vadd.xlane.f32.xlu0 %v1813
    %v1815 = vpop.xlane.xlu0 %1814
    %v1816 = vsel %vm67, %v1810, 0.0
    %1817 = vadd.xlane.f32.xlu0 %v1816
    %v1818 = vpop.xlane.xlu0 %1817
    %v1819 = vmul.f32 %v1815, 0.03125
    %v1820 = vmul.f32 %v1818, 0.03125
    %v1821 = vsub.f32 %v1809, %v1819
    %v1822 = vsub.f32 %v1810, %v1820
    %v1823 = vmul.f32 %v1821, %v1821
    %v1824 = vmul.f32 %v1822, %v1822
    %v1825 = vsel %vm67, %v1823, 0.0
    %1826 = vadd.xlane.f32.xlu0 %v1825
    %v1827 = vpop.xlane.xlu0 %1826
    %v1828 = vsel %vm67, %v1824, 0.0
    %1829 = vadd.xlane.f32.xlu0 %v1828
    %v1830 = vpop.xlane.xlu0 %1829
    %v1831 = vmul.f32 %v1827, 0.03125
    %v1832 = vmul.f32 %v1830, 0.03125
    %v1833 = vadd.f32 %v1831, 1e-05
    %v1834 = vadd.f32 %v1832, 1e-05
    %v1835 = vrsqrt.pop %v1833
    %v1836 = vrsqrt.pop %v1834
    %v1837 = vmul.f32 %v1821, %v1835
    %v1838 = vmul.f32 %v1822, %v1836
    %v1840 = vlaneseq
    %v1841 = vshrl.u32 %v1840, 7
    %v1842 = vsub.s32 0, %v1841
    %v1843 = vrot.slane %v1811, %v1842
    %v1845 = vmul.f32 %v1837, %v1843
    %v1846 = vmul.f32 %v1838, %v1843
    %v1848 = vlaneseq
    %v1849 = vshrl.u32 %v1848, 7
    %v1850 = vsub.s32 0, %v1849
    %v1851 = vrot.slane %v1812, %v1850
    %v1853 = vadd.f32 %v1845, %v1851
    %v1854 = vadd.f32 %v1846, %v1851
    %v1855 = vld [vmem:[%s11] sm:$0xff]
    %v1856 = vld [vmem:[%s11 + $0x8] sm:$0xff]
    %v1857 = vld [vmem:[%s11 + $0x10] sm:$0xff]
    %v1858 = vld [vmem:[%s11 + $0x18] sm:$0xff]
    %v1859 = vld [vmem:[%s12] sm:$0x1]
    %v1861 = vlaneseq
    %v1862 = vshrl.u32 %v1861, 7
    %v1863 = vsub.s32 0, %v1862
    %v1864 = vrot.slane %v1859, %v1863
    %v1867 = vsel %vm67, %v1853, 0
    %v1870 = vsel %vm67, %v1854, 0
    %1872 = vmatprep.subr.mxu0 0.0
    %1873 = vmatpush1.msra.mxu0 %v1855
    %1874 = vmatprep.subr.mxu0 0.0
    %1875 = vmatpush1.msra.mxu0 %v1856
    %1876 = vmatprep.subr.mxu0 0.0
    %1877 = vmatpush1.msra.mxu0 %v1857
    %1878 = vmatprep.subr.mxu0 0.0
    %1879 = vmatpush1.msra.mxu0 %v1858
    %1880 = vmatprep.subr.mxu0 0.0
    %1881 = vmatpush1.msra.mxu0 0.0
    %1882 = vmatprep.subr.mxu0 0.0
    %1883 = vmatpush1.msra.mxu0 0.0
    %1884 = vmatprep.subr.mxu0 0.0
    %1885 = vmatpush1.msra.mxu0 0.0
    %1886 = vmatprep.subr.mxu0 0.0
    %1887 = vmatpush1.msra.mxu0 0.0
    %1888 = vmatprep.subr.mxu0 0.0
    %1889 = vmatpush1.msra.mxu0 0.0
    %1890 = vmatprep.subr.mxu0 0.0
    %1891 = vmatpush1.msra.mxu0 0.0
    %1892 = vmatprep.subr.mxu0 0.0
    %1893 = vmatpush1.msra.mxu0 0.0
    %1894 = vmatprep.subr.mxu0 0.0
    %1895 = vmatpush1.msra.mxu0 0.0
    %1896 = vmatprep.subr.mxu0 0.0
    %1897 = vmatpush1.msra.mxu0 0.0
    %1898 = vmatprep.subr.mxu0 0.0
    %1899 = vmatpush1.msra.mxu0 0.0
    %1900 = vmatprep.subr.mxu0 0.0
    %1901 = vmatpush1.msra.mxu0 0.0
    %1902 = vmatprep.subr.mxu0 0.0
    %1903 = vmatpush1.msra.mxu0 0.0
    %1904 = vmatprep.subr.mxu0 0.0
    %1905 = vmatpush1.msra.mxu0 0.0
    %1906 = vmatprep.subr.mxu0 0.0
    %1907 = vmatpush1.msra.mxu0 0.0
    %1908 = vmatprep.subr.mxu0 0.0
    %1909 = vmatpush1.msra.mxu0 0.0
    %1910 = vmatprep.subr.mxu0 0.0
    %1911 = vmatpush1.msra.mxu0 0.0
    %1912 = vmatprep.subr.mxu0 0.0
    %1913 = vmatpush1.msra.mxu0 0.0
    %1914 = vmatprep.subr.mxu0 0.0
    %1915 = vmatpush1.msra.mxu0 0.0
    %1916 = vmatprep.subr.mxu0 0.0
    %1917 = vmatpush1.msra.mxu0 0.0
    %1918 = vmatprep.subr.mxu0 0.0
    %1919 = vmatpush1.msra.mxu0 0.0
    %1920 = vmatprep.subr.mxu0 0.0
    %1921 = vmatpush1.msra.mxu0 0.0
    %1922 = vmatprep.subr.mxu0 0.0
    %1923 = vmatpush1.msra.mxu0 0.0
    %1924 = vmatprep.subr.mxu0 0.0
    %1925 = vmatpush1.msra.mxu0 0.0
    %1926 = vmatprep.subr.mxu0 0.0
    %1927 = vmatpush1.msra.mxu0 0.0
    %1928 = vmatprep.subr.mxu0 0.0
    %1929 = vmatpush1.msra.mxu0 0.0
    %1930 = vmatprep.subr.mxu0 0.0
    %1931 = vmatpush1.msra.mxu0 0.0
    %1932 = vmatprep.subr.mxu0 0.0
    %1933 = vmatpush1.msra.mxu0 0.0
    %1934 = vmatprep.subr.mxu0 0.0
    %1935 = vmatpush1.msra.mxu0 0.0
    %1936 = vmatprep.mubr.f32.mxu0 0.0
    %1937 = vmatmul.mubr.f32.gmra.mrb[0].mxu0 %v1867
    %v1938 = vpop.f32.mrb[0].mxu0
    %v1939 = vadd.f32 %v1864, %v1938
    %v1940 = vpop.f32.mrb[0].mxu0
    %1941 = vmatprep.mubr.f32.mxu0 0.0
    %1942 = vmatmul.mubr.f32.gmra.mrb[0].mxu0 %v1870
    %v1943 = vpop.f32.mrb[0].mxu0
    %v1944 = vadd.f32 %v1864, %v1943
    %v1945 = vpop.f32.mrb[0].mxu0
    %1946 = vdwg.mxu0
    %v1947 = vmul.f32 %v1939, 0.5
    %v1948 = vmul.f32 %v1944, 0.5
    %v1949 = vmul.f32 %v1939, 0.044715
    %v1950 = vmul.f32 %v1944, 0.044715
    %v1951 = vmul.f32 %v1949, %v1939
    %v1952 = vmul.f32 %v1950, %v1944
    %v1953 = vmul.f32 %v1951, %v1939
    %v1954 = vmul.f32 %v1952, %v1944
    %v1955 = vadd.f32 %v1939, %v1953
    %v1956 = vadd.f32 %v1944, %v1954
    %v1957 = vmul.f32 %v1955, 0.7978846
    %v1958 = vmul.f32 %v1956, 0.7978846
    %v1959 = vtanh.pop %v1957
    %v1960 = vtanh.pop %v1958
    %v1961 = vadd.f32 %v1959, 1.0
    %v1962 = vadd.f32 %v1960, 1.0
    %v1963 = vmul.f32 %v1947, %v1961
    %v1964 = vmul.f32 %v1948, %v1962
    %v1965 = vld [vmem:[%s13] sm:$0xff]
    %v1966 = vld [vmem:[%s13 + $0x8] sm:$0xff]
    %v1967 = vld [vmem:[%s13 + $0x10] sm:$0xff]
    %v1968 = vld [vmem:[%s13 + $0x18] sm:$0xff]
    %v1969 = vld [vmem:[%s13 + $0x20] sm:$0xff]
    %v1970 = vld [vmem:[%s13 + $0x28] sm:$0xff]
    %v1971 = vld [vmem:[%s13 + $0x30] sm:$0xff]
    %v1972 = vld [vmem:[%s13 + $0x38] sm:$0xff]
    %v1973 = vld [vmem:[%s13 + $0x40] sm:$0xff]
    %v1974 = vld [vmem:[%s13 + $0x48] sm:$0xff]
    %v1975 = vld [vmem:[%s13 + $0x50] sm:$0xff]
    %v1976 = vld [vmem:[%s13 + $0x58] sm:$0xff]
    %v1977 = vld [vmem:[%s13 + $0x60] sm:$0xff]
    %v1978 = vld [vmem:[%s13 + $0x68] sm:$0xff]
    %v1979 = vld [vmem:[%s13 + $0x70] sm:$0xff]
    %v1980 = vld [vmem:[%s13 + $0x78] sm:$0xff]
    %v1981 = vld [vmem:[%s14] sm:$0x1]
    %v1983 = vlaneseq
    %v1984 = vshrl.u32 %v1983, 7
    %v1985 = vsub.s32 0, %v1984
    %v1986 = vrot.slane %v1981, %v1985
    %1988 = vmatprep.subr.mxu0 0.0
    %1989 = vmatpush1.msra.mxu0 %v1965
    %1990 = vmatprep.subr.mxu0 0.0
    %1991 = vmatpush1.msra.mxu0 %v1966
    %1992 = vmatprep.subr.mxu0 0.0
    %1993 = vmatpush1.msra.mxu0 %v1967
    %1994 = vmatprep.subr.mxu0 0.0
    %1995 = vmatpush1.msra.mxu0 %v1968
    %1996 = vmatprep.subr.mxu0 0.0
    %1997 = vmatpush1.msra.mxu0 %v1969
    %1998 = vmatprep.subr.mxu0 0.0
    %1999 = vmatpush1.msra.mxu0 %v1970
    %2000 = vmatprep.subr.mxu0 0.0
    %2001 = vmatpush1.msra.mxu0 %v1971
    %2002 = vmatprep.subr.mxu0 0.0
    %2003 = vmatpush1.msra.mxu0 %v1972
    %2004 = vmatprep.subr.mxu0 0.0
    %2005 = vmatpush1.msra.mxu0 %v1973
    %2006 = vmatprep.subr.mxu0 0.0
    %2007 = vmatpush1.msra.mxu0 %v1974
    %2008 = vmatprep.subr.mxu0 0.0
    %2009 = vmatpush1.msra.mxu0 %v1975
    %2010 = vmatprep.subr.mxu0 0.0
    %2011 = vmatpush1.msra.mxu0 %v1976
    %2012 = vmatprep.subr.mxu0 0.0
    %2013 = vmatpush1.msra.mxu0 %v1977
    %2014 = vmatprep.subr.mxu0 0.0
    %2015 = vmatpush1.msra.mxu0 %v1978
    %2016 = vmatprep.subr.mxu0 0.0
    %2017 = vmatpush1.msra.mxu0 %v1979
    %2018 = vmatprep.subr.mxu0 0.0
    %2019 = vmatpush1.msra.mxu0 %v1980
    %2020 = vmatprep.subr.mxu0 0.0
    %2021 = vmatpush1.msra.mxu0 0.0
    %2022 = vmatprep.subr.mxu0 0.0
    %2023 = vmatpush1.msra.mxu0 0.0
    %2024 = vmatprep.subr.mxu0 0.0
    %2025 = vmatpush1.msra.mxu0 0.0
    %2026 = vmatprep.subr.mxu0 0.0
    %2027 = vmatpush1.msra.mxu0 0.0
    %2028 = vmatprep.subr.mxu0 0.0
    %2029 = vmatpush1.msra.mxu0 0.0
    %2030 = vmatprep.subr.mxu0 0.0
    %2031 = vmatpush1.msra.mxu0 0.0
    %2032 = vmatprep.subr.mxu0 0.0
    %2033 = vmatpush1.msra.mxu0 0.0
    %2034 = vmatprep.subr.mxu0 0.0
    %2035 = vmatpush1.msra.mxu0 0.0
    %2036 = vmatprep.subr.mxu0 0.0
    %2037 = vmatpush1.msra.mxu0 0.0
    %2038 = vmatprep.subr.mxu0 0.0
    %2039 = vmatpush1.msra.mxu0 0.0
    %2040 = vmatprep.subr.mxu0 0.0
    %2041 = vmatpush1.msra.mxu0 0.0
    %2042 = vmatprep.subr.mxu0 0.0
    %2043 = vmatpush1.msra.mxu0 0.0
    %2044 = vmatprep.subr.mxu0 0.0
    %2045 = vmatpush1.msra.mxu0 0.0
    %2046 = vmatprep.subr.mxu0 0.0
    %2047 = vmatpush1.msra.mxu0 0.0
    %2048 = vmatprep.subr.mxu0 0.0
    %2049 = vmatpush1.msra.mxu0 0.0
    %2050 = vmatprep.subr.mxu0 0.0
    %2051 = vmatpush1.msra.mxu0 0.0
    %2052 = vmatprep.mubr.f32.mxu0 0.0
    %2053 = vmatmul.mubr.f32.gmra.mrb[0].mxu0 %v1963
    %v2054 = vpop.f32.mrb[0].mxu0
    %v2055 = vadd.f32 %v1986, %v2054
    %v2056 = vpop.f32.mrb[0].mxu0
    %2057 = vmatprep.mubr.f32.mxu0 0.0
    %2058 = vmatmul.mubr.f32.gmra.mrb[0].mxu0 %v1964
    %v2059 = vpop.f32.mrb[0].mxu0
    %v2060 = vadd.f32 %v1986, %v2059
    %v2061 = vpop.f32.mrb[0].mxu0
    %2062 = vdwg.mxu0
    %v2063 = vadd.f32 %v1853, %v2055
    %v2064 = vadd.f32 %v1854, %v2060
    %v2065 = vld [vmem:[%s15] sm:$0x1]
    %v2066 = vld [vmem:[%s16] sm:$0x1]
    %v2067 = vsel %vm67, %v2063, 0.0
    %2068 = vadd.xlane.f32.xlu0 %v2067
    %v2069 = vpop.xlane.xlu0 %2068
    %v2070 = vsel %vm67, %v2064, 0.0
    %2071 = vadd.xlane.f32.xlu0 %v2070
    %v2072 = vpop.xlane.xlu0 %2071
    %v2073 = vmul.f32 %v2069, 0.03125
    %v2074 = vmul.f32 %v2072, 0.03125
    %v2075 = vsub.f32 %v2063, %v2073
    %v2076 = vsub.f32 %v2064, %v2074
    %v2077 = vmul.f32 %v2075, %v2075
    %v2078 = vmul.f32 %v2076, %v2076
    %v2079 = vsel %vm67, %v2077, 0.0
    %2080 = vadd.xlane.f32.xlu0 %v2079
    %v2081 = vpop.xlane.xlu0 %2080
    %v2082 = vsel %vm67, %v2078, 0.0
    %2083 = vadd.xlane.f32.xlu0 %v2082
    %v2084 = vpop.xlane.xlu0 %2083
    %v2085 = vmul.f32 %v2081, 0.03125
    %v2086 = vmul.f32 %v2084, 0.03125
    %v2087 = vadd.f32 %v2085, 1e-05
    %v2088 = vadd.f32 %v2086, 1e-05
    %v2089 = vrsqrt.pop %v2087
    %v2090 = vrsqrt.pop %v2088
    %v2091 = vmul.f32 %v2075, %v2089
    %v2092 = vmul.f32 %v2076, %v2090
    %v2094 = vlaneseq
    %v2095 = vshrl.u32 %v2094, 7
    %v2096 = vsub.s32 0, %v2095
    %v2097 = vrot.slane %v2065, %v2096
    %v2099 = vmul.f32 %v2091, %v2097
    %v2100 = vmul.f32 %v2092, %v2097
    %v2102 = vlaneseq
    %v2103 = vshrl.u32 %v2102, 7
    %v2104 = vsub.s32 0, %v2103
    %v2105 = vrot.slane %v2066, %v2104
    %v2107 = vadd.f32 %v2099, %v2105
    %v2108 = vadd.f32 %v2100, %v2105
    %s2109 = scalar_lea.vmem %s5, 32
    %v2110 = vld [vmem:[%s2109] sm:$0xff]
    %v2111 = vld [vmem:[%s2109 + $0x8] sm:$0xff]
    %v2112 = vld [vmem:[%s2109 + $0x10] sm:$0xff]
    %v2113 = vld [vmem:[%s2109 + $0x18] sm:$0xff]
    %s2114 = scalar_lea.vmem %s6, 1
    %v2115 = vld [vmem:[%s2114] sm:$0x1]
    %v2117 = vlaneseq
    %v2118 = vshrl.u32 %v2117, 7
    %v2119 = vsub.s32 0, %v2118
    %v2120 = vrot.slane %v2115, %v2119
    %v2123 = vsel %vm67, %v2107, 0
    %v2126 = vsel %vm67, %v2108, 0
    %2128 = vmatprep.subr.mxu0 0.0
    %2129 = vmatpush1.msra.mxu0 %v2110
    %2130 = vmatprep.subr.mxu0 0.0
    %2131 = vmatpush1.msra.mxu0 %v2111
    %2132 = vmatprep.subr.mxu0 0.0
    %2133 = vmatpush1.msra.mxu0 %v2112
    %2134 = vmatprep.subr.mxu0 0.0
    %2135 = vmatpush1.msra.mxu0 %v2113
    %2136 = vmatprep.subr.mxu0 0.0
    %2137 = vmatpush1.msra.mxu0 0.0
    %2138 = vmatprep.subr.mxu0 0.0
    %2139 = vmatpush1.msra.mxu0 0.0
    %2140 = vmatprep.subr.mxu0 0.0
    %2141 = vmatpush1.msra.mxu0 0.0
    %2142 = vmatprep.subr.mxu0 0.0
    %2143 = vmatpush1.msra.mxu0 0.0
    %2144 = vmatprep.subr.mxu0 0.0
    %2145 = vmatpush1.msra.mxu0 0.0
    %2146 = vmatprep.subr.mxu0 0.0
    %2147 = vmatpush1.msra.mxu0 0.0
    %2148 = vmatprep.subr.mxu0 0.0
    %2149 = vmatpush1.msra.mxu0 0.0
    %2150 = vmatprep.subr.mxu0 0.0
    %2151 = vmatpush1.msra.mxu0 0.0
    %2152 = vmatprep.subr.mxu0 0.0
    %2153 = vmatpush1.msra.mxu0 0.0
    %2154 = vmatprep.subr.mxu0 0.0
    %2155 = vmatpush1.msra.mxu0 0.0
    %2156 = vmatprep.subr.mxu0 0.0
    %2157 = vmatpush1.msra.mxu0 0.0
    %2158 = vmatprep.subr.mxu0 0.0
    %2159 = vmatpush1.msra.mxu0 0.0
    %2160 = vmatprep.subr.mxu0 0.0
    %2161 = vmatpush1.msra.mxu0 0.0
    %2162 = vmatprep.subr.mxu0 0.0
    %2163 = vmatpush1.msra.mxu0 0.0
    %2164 = vmatprep.subr.mxu0 0.0
    %2165 = vmatpush1.msra.mxu0 0.0
    %2166 = vmatprep.subr.mxu0 0.0
    %2167 = vmatpush1.msra.mxu0 0.0
    %2168 = vmatprep.subr.mxu0 0.0
    %2169 = vmatpush1.msra.mxu0 0.0
    %2170 = vmatprep.subr.mxu0 0.0
    %2171 = vmatpush1.msra.mxu0 0.0
    %2172 = vmatprep.subr.mxu0 0.0
    %2173 = vmatpush1.msra.mxu0 0.0
    %2174 = vmatprep.subr.mxu0 0.0
    %2175 = vmatpush1.msra.mxu0 0.0
    %2176 = vmatprep.subr.mxu0 0.0
    %2177 = vmatpush1.msra.mxu0 0.0
    %2178 = vmatprep.subr.mxu0 0.0
    %2179 = vmatpush1.msra.mxu0 0.0
    %2180 = vmatprep.subr.mxu0 0.0
    %2181 = vmatpush1.msra.mxu0 0.0
    %2182 = vmatprep.subr.mxu0 0.0
    %2183 = vmatpush1.msra.mxu0 0.0
    %2184 = vmatprep.subr.mxu0 0.0
    %2185 = vmatpush1.msra.mxu0 0.0
    %2186 = vmatprep.subr.mxu0 0.0
    %2187 = vmatpush1.msra.mxu0 0.0
    %2188 = vmatprep.subr.mxu0 0.0
    %2189 = vmatpush1.msra.mxu0 0.0
    %2190 = vmatprep.subr.mxu0 0.0
    %2191 = vmatpush1.msra.mxu0 0.0
    %2192 = vmatprep.mubr.f32.mxu0 0.0
    %2193 = vmatmul.mubr.f32.gmra.mrb[0].mxu0 %v2123
    %v2194 = vpop.f32.mrb[0].mxu0
    %v2195 = vadd.f32 %v2120, %v2194
    %v2196 = vpop.f32.mrb[0].mxu0
    %2197 = vmatprep.mubr.f32.mxu0 0.0
    %2198 = vmatmul.mubr.f32.gmra.mrb[0].mxu0 %v2126
    %v2199 = vpop.f32.mrb[0].mxu0
    %v2200 = vadd.f32 %v2120, %v2199
    %v2201 = vpop.f32.mrb[0].mxu0
    %2202 = vdwg.mxu0
    %2203 = vst.msk [vmem:[#allocation2] sm:$0xff] %vm210, %v2195
    %2204 = vst.msk [vmem:[#allocation2 + $0x8] sm:$0xff] %vm210, %v2200
    %2207 = vrot.lane.b32.xlu0 %v2195, 96
    %v2208 = vpop.permute.xlu0 %2207
    %2209 = vrot.lane.b32.xlu0 %v2200, 96
    %v2210 = vpop.permute.xlu0 %2209
    %2213 = vst.msk [vmem:[#allocation3] sm:$0xff] %vm210, %v2208
    %2214 = vst.msk [vmem:[#allocation3 + $0x8] sm:$0xff] %vm210, %v2210
    %2215 = vrot.lane.b32.xlu0 %v2195, 64
    %v2216 = vpop.permute.xlu0 %2215
    %2217 = vrot.lane.b32.xlu0 %v2200, 64
    %v2218 = vpop.permute.xlu0 %2217
    %2221 = vst.msk [vmem:[#allocation4] sm:$0xff] %vm210, %v2216
    %2222 = vst.msk [vmem:[#allocation4 + $0x8] sm:$0xff] %vm210, %v2218
    %2223 = vrot.lane.b32.xlu0 %v2195, 120
    %v2224 = vpop.permute.xlu0 %2223
    %2225 = vrot.lane.b32.xlu0 %v2200, 120
    %v2226 = vpop.permute.xlu0 %2225
    %2229 = vst.msk [vmem:[%s237] sm:$0xff] %vm210, %v2224
    %2230 = vst.msk [vmem:[%s237 + $0x8] sm:$0xff] %vm210, %v2226
    %2231 = vrot.lane.b32.xlu0 %v2195, 88
    %v2232 = vpop.permute.xlu0 %2231
    %2233 = vrot.lane.b32.xlu0 %v2200, 88
    %v2234 = vpop.permute.xlu0 %2233
    %2237 = vst.msk [vmem:[%s246] sm:$0xff] %vm210, %v2232
    %2238 = vst.msk [vmem:[%s246 + $0x8] sm:$0xff] %vm210, %v2234
    %2239 = vrot.lane.b32.xlu0 %v2195, 56
    %v2240 = vpop.permute.xlu0 %2239
    %2241 = vrot.lane.b32.xlu0 %v2200, 56
    %v2242 = vpop.permute.xlu0 %2241
    %2245 = vst.msk [vmem:[%s255] sm:$0xff] %vm210, %v2240
    %2246 = vst.msk [vmem:[%s255 + $0x8] sm:$0xff] %vm210, %v2242
    %2247 = vrot.lane.b32.xlu0 %v2195, 112
    %v2248 = vpop.permute.xlu0 %2247
    %2249 = vrot.lane.b32.xlu0 %v2200, 112
    %v2250 = vpop.permute.xlu0 %2249
    %2253 = vst.msk [vmem:[%s264] sm:$0xff] %vm210, %v2248
    %2254 = vst.msk [vmem:[%s264 + $0x8] sm:$0xff] %vm210, %v2250
    %2255 = vrot.lane.b32.xlu0 %v2195, 80
    %v2256 = vpop.permute.xlu0 %2255
    %2257 = vrot.lane.b32.xlu0 %v2200, 80
    %v2258 = vpop.permute.xlu0 %2257
    %2261 = vst.msk [vmem:[%s273] sm:$0xff] %vm210, %v2256
    %2262 = vst.msk [vmem:[%s273 + $0x8] sm:$0xff] %vm210, %v2258
    %2263 = vrot.lane.b32.xlu0 %v2195, 48
    %v2264 = vpop.permute.xlu0 %2263
    %2265 = vrot.lane.b32.xlu0 %v2200, 48
    %v2266 = vpop.permute.xlu0 %2265
    %2269 = vst.msk [vmem:[%s282] sm:$0xff] %vm210, %v2264
    %2270 = vst.msk [vmem:[%s282 + $0x8] sm:$0xff] %vm210, %v2266
    %2271 = vrot.lane.b32.xlu0 %v2195, 104
    %v2272 = vpop.permute.xlu0 %2271
    %2273 = vrot.lane.b32.xlu0 %v2200, 104
    %v2274 = vpop.permute.xlu0 %2273
    %2277 = vst.msk [vmem:[%s291] sm:$0xff] %vm210, %v2272
    %2278 = vst.msk [vmem:[%s291 + $0x8] sm:$0xff] %vm210, %v2274
    %2279 = vrot.lane.b32.xlu0 %v2195, 72
    %v2280 = vpop.permute.xlu0 %2279
    %2281 = vrot.lane.b32.xlu0 %v2200, 72
    %v2282 = vpop.permute.xlu0 %2281
    %2285 = vst.msk [vmem:[%s300] sm:$0xff] %vm210, %v2280
    %2286 = vst.msk [vmem:[%s300 + $0x8] sm:$0xff] %vm210, %v2282
    %2287 = vrot.lane.b32.xlu0 %v2195, 40
    %v2288 = vpop.permute.xlu0 %2287
    %2289 = vrot.lane.b32.xlu0 %v2200, 40
    %v2290 = vpop.permute.xlu0 %2289
    %2293 = vst.msk [vmem:[%s309] sm:$0xff] %vm210, %v2288
    %2294 = vst.msk [vmem:[%s309 + $0x8] sm:$0xff] %vm210, %v2290
    %v2295 = vld [vmem:[#allocation2] sm:$0xff]
    %v2296 = vld [vmem:[#allocation2 + $0x8] sm:$0xff]
    %v2297 = vld [vmem:[#allocation2 + $0x10] sm:$0xff]
    %v2298 = vld [vmem:[#allocation2 + $0x18] sm:$0xff]
    %v2299 = vld [vmem:[#allocation2 + $0x20] sm:$0xff]
    %v2300 = vld [vmem:[#allocation2 + $0x28] sm:$0xff]
    %v2301 = vld [vmem:[#allocation2 + $0x30] sm:$0xff]
    %v2302 = vld [vmem:[#allocation2 + $0x38] sm:$0xff]
    %v2303 = vld [vmem:[#allocation3] sm:$0xff]
    %v2304 = vld [vmem:[#allocation3 + $0x8] sm:$0xff]
    %v2305 = vld [vmem:[#allocation3 + $0x10] sm:$0xff]
    %v2306 = vld [vmem:[#allocation3 + $0x18] sm:$0xff]
    %v2307 = vld [vmem:[#allocation3 + $0x20] sm:$0xff]
    %v2308 = vld [vmem:[#allocation3 + $0x28] sm:$0xff]
    %v2309 = vld [vmem:[#allocation3 + $0x30] sm:$0xff]
    %v2310 = vld [vmem:[#allocation3 + $0x38] sm:$0xff]
    %v2312 = vsel %vm210, %v2295, 0
    %v2315 = vsel %vm210, %v2303, 0
    %2317 = vmatprep.subr.mxu0 0.0
    %2318 = vmatpush1.xpose.msra.mxu0 %v2315
    %2319 = vmatprep.subr.mxu0 0.0
    %2320 = vmatpush1.xpose.msra.mxu0 0.0
    %2321 = vmatprep.subr.mxu0 0.0
    %2322 = vmatpush1.xpose.msra.mxu0 0.0
    %2323 = vmatprep.subr.mxu0 0.0
    %2324 = vmatpush1.xpose.msra.mxu0 0.0
    %2325 = vmatprep.subr.mxu0 0.0
    %2326 = vmatpush1.xpose.msra.mxu0 0.0
    %2327 = vmatprep.subr.mxu0 0.0
    %2328 = vmatpush1.xpose.msra.mxu0 0.0
    %2329 = vmatprep.subr.mxu0 0.0
    %2330 = vmatpush1.xpose.msra.mxu0 0.0
    %2331 = vmatprep.subr.mxu0 0.0
    %2332 = vmatpush1.xpose.msra.mxu0 0.0
    %2333 = vmatprep.subr.mxu0 0.0
    %2334 = vmatpush1.xpose.msra.mxu0 0.0
    %2335 = vmatprep.subr.mxu0 0.0
    %2336 = vmatpush1.xpose.msra.mxu0 0.0
    %2337 = vmatprep.subr.mxu0 0.0
    %2338 = vmatpush1.xpose.msra.mxu0 0.0
    %2339 = vmatprep.subr.mxu0 0.0
    %2340 = vmatpush1.xpose.msra.mxu0 0.0
    %2341 = vmatprep.subr.mxu0 0.0
    %2342 = vmatpush1.xpose.msra.mxu0 0.0
    %2343 = vmatprep.subr.mxu0 0.0
    %2344 = vmatpush1.xpose.msra.mxu0 0.0
    %2345 = vmatprep.subr.mxu0 0.0
    %2346 = vmatpush1.xpose.msra.mxu0 0.0
    %2347 = vmatprep.subr.mxu0 0.0
    %2348 = vmatpush1.xpose.msra.mxu0 0.0
    %2349 = vmatprep.subr.mxu0 0.0
    %2350 = vmatpush1.xpose.msra.mxu0 0.0
    %2351 = vmatprep.subr.mxu0 0.0
    %2352 = vmatpush1.xpose.msra.mxu0 0.0
    %2353 = vmatprep.subr.mxu0 0.0
    %2354 = vmatpush1.xpose.msra.mxu0 0.0
    %2355 = vmatprep.subr.mxu0 0.0
    %2356 = vmatpush1.xpose.msra.mxu0 0.0
    %2357 = vmatprep.subr.mxu0 0.0
    %2358 = vmatpush1.xpose.msra.mxu0 0.0
    %2359 = vmatprep.subr.mxu0 0.0
    %2360 = vmatpush1.xpose.msra.mxu0 0.0
    %2361 = vmatprep.subr.mxu0 0.0
    %2362 = vmatpush1.xpose.msra.mxu0 0.0
    %2363 = vmatprep.subr.mxu0 0.0
    %2364 = vmatpush1.xpose.msra.mxu0 0.0
    %2365 = vmatprep.subr.mxu0 0.0
    %2366 = vmatpush1.xpose.msra.mxu0 0.0
    %2367 = vmatprep.subr.mxu0 0.0
    %2368 = vmatpush1.xpose.msra.mxu0 0.0
    %2369 = vmatprep.subr.mxu0 0.0
    %2370 = vmatpush1.xpose.msra.mxu0 0.0
    %2371 = vmatprep.subr.mxu0 0.0
    %2372 = vmatpush1.xpose.msra.mxu0 0.0
    %2373 = vmatprep.subr.mxu0 0.0
    %2374 = vmatpush1.xpose.msra.mxu0 0.0
    %2375 = vmatprep.subr.mxu0 0.0
    %2376 = vmatpush1.xpose.msra.mxu0 0.0
    %2377 = vmatprep.subr.mxu0 0.0
    %2378 = vmatpush1.xpose.msra.mxu0 0.0
    %2379 = vmatprep.subr.mxu0 0.0
    %2380 = vmatpush1.xpose.msra.mxu0 0.0
    %2381 = vmatprep.mubr.f32.mxu0 0.0
    %2382 = vmatmul.mubr.f32.gmra.mrb[0].mxu0 %v2312
    %v2383 = vpop.f32.mrb[0].mxu0
    %v2384 = vadd.f32 0.0, %v2383
    %v2385 = vpop.f32.mrb[0].mxu0
    %2386 = vdwg.mxu0
    %v2388 = vsel %vm210, %v2296, 0
    %v2391 = vsel %vm210, %v2304, 0
    %2393 = vmatprep.subr.mxu0 0.0
    %2394 = vmatpush1.xpose.msra.mxu0 %v2391
    %2395 = vmatprep.subr.mxu0 0.0
    %2396 = vmatpush1.xpose.msra.mxu0 0.0
    %2397 = vmatprep.subr.mxu0 0.0
    %2398 = vmatpush1.xpose.msra.mxu0 0.0
    %2399 = vmatprep.subr.mxu0 0.0
    %2400 = vmatpush1.xpose.msra.mxu0 0.0
    %2401 = vmatprep.subr.mxu0 0.0
    %2402 = vmatpush1.xpose.msra.mxu0 0.0
    %2403 = vmatprep.subr.mxu0 0.0
    %2404 = vmatpush1.xpose.msra.mxu0 0.0
    %2405 = vmatprep.subr.mxu0 0.0
    %2406 = vmatpush1.xpose.msra.mxu0 0.0
    %2407 = vmatprep.subr.mxu0 0.0
    %2408 = vmatpush1.xpose.msra.mxu0 0.0
    %2409 = vmatprep.subr.mxu0 0.0
    %2410 = vmatpush1.xpose.msra.mxu0 0.0
    %2411 = vmatprep.subr.mxu0 0.0
    %2412 = vmatpush1.xpose.msra.mxu0 0.0
    %2413 = vmatprep.subr.mxu0 0.0
    %2414 = vmatpush1.xpose.msra.mxu0 0.0
    %2415 = vmatprep.subr.mxu0 0.0
    %2416 = vmatpush1.xpose.msra.mxu0 0.0
    %2417 = vmatprep.subr.mxu0 0.0
    %2418 = vmatpush1.xpose.msra.mxu0 0.0
    %2419 = vmatprep.subr.mxu0 0.0
    %2420 = vmatpush1.xpose.msra.mxu0 0.0
    %2421 = vmatprep.subr.mxu0 0.0
    %2422 = vmatpush1.xpose.msra.mxu0 0.0
    %2423 = vmatprep.subr.mxu0 0.0
    %2424 = vmatpush1.xpose.msra.mxu0 0.0
    %2425 = vmatprep.subr.mxu0 0.0
    %2426 = vmatpush1.xpose.msra.mxu0 0.0
    %2427 = vmatprep.subr.mxu0 0.0
    %2428 = vmatpush1.xpose.msra.mxu0 0.0
    %2429 = vmatprep.subr.mxu0 0.0
    %2430 = vmatpush1.xpose.msra.mxu0 0.0
    %2431 = vmatprep.subr.mxu0 0.0
    %2432 = vmatpush1.xpose.msra.mxu0 0.0
    %2433 = vmatprep.subr.mxu0 0.0
    %2434 = vmatpush1.xpose.msra.mxu0 0.0
    %2435 = vmatprep.subr.mxu0 0.0
    %2436 = vmatpush1.xpose.msra.mxu0 0.0
    %2437 = vmatprep.subr.mxu0 0.0
    %2438 = vmatpush1.xpose.msra.mxu0 0.0
    %2439 = vmatprep.subr.mxu0 0.0
    %2440 = vmatpush1.xpose.msra.mxu0 0.0
    %2441 = vmatprep.subr.mxu0 0.0
    %2442 = vmatpush1.xpose.msra.mxu0 0.0
    %2443 = vmatprep.subr.mxu0 0.0
    %2444 = vmatpush1.xpose.msra.mxu0 0.0
    %2445 = vmatprep.subr.mxu0 0.0
    %2446 = vmatpush1.xpose.msra.mxu0 0.0
    %2447 = vmatprep.subr.mxu0 0.0
    %2448 = vmatpush1.xpose.msra.mxu0 0.0
    %2449 = vmatprep.subr.mxu0 0.0
    %2450 = vmatpush1.xpose.msra.mxu0 0.0
    %2451 = vmatprep.subr.mxu0 0.0
    %2452 = vmatpush1.xpose.msra.mxu0 0.0
    %2453 = vmatprep.subr.mxu0 0.0
    %2454 = vmatpush1.xpose.msra.mxu0 0.0
    %2455 = vmatprep.subr.mxu0 0.0
    %2456 = vmatpush1.xpose.msra.mxu0 0.0
    %2457 = vmatprep.mubr.f32.mxu0 0.0
    %2458 = vmatmul.mubr.f32.gmra.mrb[0].mxu0 %v2388
    %v2459 = vpop.f32.mrb[0].mxu0
    %v2460 = vadd.f32 0.0, %v2459
    %v2461 = vpop.f32.mrb[0].mxu0
    %2462 = vdwg.mxu0
    %v2464 = vsel %vm210, %v2297, 0
    %v2467 = vsel %vm210, %v2305, 0
    %2469 = vmatprep.subr.mxu0 0.0
    %2470 = vmatpush1.xpose.msra.mxu0 %v2467
    %2471 = vmatprep.subr.mxu0 0.0
    %2472 = vmatpush1.xpose.msra.mxu0 0.0
    %2473 = vmatprep.subr.mxu0 0.0
    %2474 = vmatpush1.xpose.msra.mxu0 0.0
    %2475 = vmatprep.subr.mxu0 0.0
    %2476 = vmatpush1.xpose.msra.mxu0 0.0
    %2477 = vmatprep.subr.mxu0 0.0
    %2478 = vmatpush1.xpose.msra.mxu0 0.0
    %2479 = vmatprep.subr.mxu0 0.0
    %2480 = vmatpush1.xpose.msra.mxu0 0.0
    %2481 = vmatprep.subr.mxu0 0.0
    %2482 = vmatpush1.xpose.msra.mxu0 0.0
    %2483 = vmatprep.subr.mxu0 0.0
    %2484 = vmatpush1.xpose.msra.mxu0 0.0
    %2485 = vmatprep.subr.mxu0 0.0
    %2486 = vmatpush1.xpose.msra.mxu0 0.0
    %2487 = vmatprep.subr.mxu0 0.0
    %2488 = vmatpush1.xpose.msra.mxu0 0.0
    %2489 = vmatprep.subr.mxu0 0.0
    %2490 = vmatpush1.xpose.msra.mxu0 0.0
    %2491 = vmatprep.subr.mxu0 0.0
    %2492 = vmatpush1.xpose.msra.mxu0 0.0
    %2493 = vmatprep.subr.mxu0 0.0
    %2494 = vmatpush1.xpose.msra.mxu0 0.0
    %2495 = vmatprep.subr.mxu0 0.0
    %2496 = vmatpush1.xpose.msra.mxu0 0.0
    %2497 = vmatprep.subr.mxu0 0.0
    %2498 = vmatpush1.xpose.msra.mxu0 0.0
    %2499 = vmatprep.subr.mxu0 0.0
    %2500 = vmatpush1.xpose.msra.mxu0 0.0
    %2501 = vmatprep.subr.mxu0 0.0
    %2502 = vmatpush1.xpose.msra.mxu0 0.0
    %2503 = vmatprep.subr.mxu0 0.0
    %2504 = vmatpush1.xpose.msra.mxu0 0.0
    %2505 = vmatprep.subr.mxu0 0.0
    %2506 = vmatpush1.xpose.msra.mxu0 0.0
    %2507 = vmatprep.subr.mxu0 0.0
    %2508 = vmatpush1.xpose.msra.mxu0 0.0
    %2509 = vmatprep.subr.mxu0 0.0
    %2510 = vmatpush1.xpose.msra.mxu0 0.0
    %2511 = vmatprep.subr.mxu0 0.0
    %2512 = vmatpush1.xpose.msra.mxu0 0.0
    %2513 = vmatprep.subr.mxu0 0.0
    %2514 = vmatpush1.xpose.msra.mxu0 0.0
    %2515 = vmatprep.subr.mxu0 0.0
    %2516 = vmatpush1.xpose.msra.mxu0 0.0
    %2517 = vmatprep.subr.mxu0 0.0
    %2518 = vmatpush1.xpose.msra.mxu0 0.0
    %2519 = vmatprep.subr.mxu0 0.0
    %2520 = vmatpush1.xpose.msra.mxu0 0.0
    %2521 = vmatprep.subr.mxu0 0.0
    %2522 = vmatpush1.xpose.msra.mxu0 0.0
    %2523 = vmatprep.subr.mxu0 0.0
    %2524 = vmatpush1.xpose.msra.mxu0 0.0
    %2525 = vmatprep.subr.mxu0 0.0
    %2526 = vmatpush1.xpose.msra.mxu0 0.0
    %2527 = vmatprep.subr.mxu0 0.0
    %2528 = vmatpush1.xpose.msra.mxu0 0.0
    %2529 = vmatprep.subr.mxu0 0.0
    %2530 = vmatpush1.xpose.msra.mxu0 0.0
    %2531 = vmatprep.subr.mxu0 0.0
    %2532 = vmatpush1.xpose.msra.mxu0 0.0
    %2533 = vmatprep.mubr.f32.mxu0 0.0
    %2534 = vmatmul.mubr.f32.gmra.mrb[0].mxu0 %v2464
    %v2535 = vpop.f32.mrb[0].mxu0
    %v2536 = vadd.f32 0.0, %v2535
    %v2537 = vpop.f32.mrb[0].mxu0
    %2538 = vdwg.mxu0
    %v2540 = vsel %vm210, %v2298, 0
    %v2543 = vsel %vm210, %v2306, 0
    %2545 = vmatprep.subr.mxu0 0.0
    %2546 = vmatpush1.xpose.msra.mxu0 %v2543
    %2547 = vmatprep.subr.mxu0 0.0
    %2548 = vmatpush1.xpose.msra.mxu0 0.0
    %2549 = vmatprep.subr.mxu0 0.0
    %2550 = vmatpush1.xpose.msra.mxu0 0.0
    %2551 = vmatprep.subr.mxu0 0.0
    %2552 = vmatpush1.xpose.msra.mxu0 0.0
    %2553 = vmatprep.subr.mxu0 0.0
    %2554 = vmatpush1.xpose.msra.mxu0 0.0
    %2555 = vmatprep.subr.mxu0 0.0
    %2556 = vmatpush1.xpose.msra.mxu0 0.0
    %2557 = vmatprep.subr.mxu0 0.0
    %2558 = vmatpush1.xpose.msra.mxu0 0.0
    %2559 = vmatprep.subr.mxu0 0.0
    %2560 = vmatpush1.xpose.msra.mxu0 0.0
    %2561 = vmatprep.subr.mxu0 0.0
    %2562 = vmatpush1.xpose.msra.mxu0 0.0
    %2563 = vmatprep.subr.mxu0 0.0
    %2564 = vmatpush1.xpose.msra.mxu0 0.0
    %2565 = vmatprep.subr.mxu0 0.0
    %2566 = vmatpush1.xpose.msra.mxu0 0.0
    %2567 = vmatprep.subr.mxu0 0.0
    %2568 = vmatpush1.xpose.msra.mxu0 0.0
    %2569 = vmatprep.subr.mxu0 0.0
    %2570 = vmatpush1.xpose.msra.mxu0 0.0
    %2571 = vmatprep.subr.mxu0 0.0
    %2572 = vmatpush1.xpose.msra.mxu0 0.0
    %2573 = vmatprep.subr.mxu0 0.0
    %2574 = vmatpush1.xpose.msra.mxu0 0.0
    %2575 = vmatprep.subr.mxu0 0.0
    %2576 = vmatpush1.xpose.msra.mxu0 0.0
    %2577 = vmatprep.subr.mxu0 0.0
    %2578 = vmatpush1.xpose.msra.mxu0 0.0
    %2579 = vmatprep.subr.mxu0 0.0
    %2580 = vmatpush1.xpose.msra.mxu0 0.0
    %2581 = vmatprep.subr.mxu0 0.0
    %2582 = vmatpush1.xpose.msra.mxu0 0.0
    %2583 = vmatprep.subr.mxu0 0.0
    %2584 = vmatpush1.xpose.msra.mxu0 0.0
    %2585 = vmatprep.subr.mxu0 0.0
    %2586 = vmatpush1.xpose.msra.mxu0 0.0
    %2587 = vmatprep.subr.mxu0 0.0
    %2588 = vmatpush1.xpose.msra.mxu0 0.0
    %2589 = vmatprep.subr.mxu0 0.0
    %2590 = vmatpush1.xpose.msra.mxu0 0.0
    %2591 = vmatprep.subr.mxu0 0.0
    %2592 = vmatpush1.xpose.msra.mxu0 0.0
    %2593 = vmatprep.subr.mxu0 0.0
    %2594 = vmatpush1.xpose.msra.mxu0 0.0
    %2595 = vmatprep.subr.mxu0 0.0
    %2596 = vmatpush1.xpose.msra.mxu0 0.0
    %2597 = vmatprep.subr.mxu0 0.0
    %2598 = vmatpush1.xpose.msra.mxu0 0.0
    %2599 = vmatprep.subr.mxu0 0.0
    %2600 = vmatpush1.xpose.msra.mxu0 0.0
    %2601 = vmatprep.subr.mxu0 0.0
    %2602 = vmatpush1.xpose.msra.mxu0 0.0
    %2603 = vmatprep.subr.mxu0 0.0
    %2604 = vmatpush1.xpose.msra.mxu0 0.0
    %2605 = vmatprep.subr.mxu0 0.0
    %2606 = vmatpush1.xpose.msra.mxu0 0.0
    %2607 = vmatprep.subr.mxu0 0.0
    %2608 = vmatpush1.xpose.msra.mxu0 0.0
    %2609 = vmatprep.mubr.f32.mxu0 0.0
    %2610 = vmatmul.mubr.f32.gmra.mrb[0].mxu0 %v2540
    %v2611 = vpop.f32.mrb[0].mxu0
    %v2612 = vadd.f32 0.0, %v2611
    %v2613 = vpop.f32.mrb[0].mxu0
    %2614 = vdwg.mxu0
    %v2616 = vsel %vm210, %v2299, 0
    %v2619 = vsel %vm210, %v2307, 0
    %2621 = vmatprep.subr.mxu0 0.0
    %2622 = vmatpush1.xpose.msra.mxu0 %v2619
    %2623 = vmatprep.subr.mxu0 0.0
    %2624 = vmatpush1.xpose.msra.mxu0 0.0
    %2625 = vmatprep.subr.mxu0 0.0
    %2626 = vmatpush1.xpose.msra.mxu0 0.0
    %2627 = vmatprep.subr.mxu0 0.0
    %2628 = vmatpush1.xpose.msra.mxu0 0.0
    %2629 = vmatprep.subr.mxu0 0.0
    %2630 = vmatpush1.xpose.msra.mxu0 0.0
    %2631 = vmatprep.subr.mxu0 0.0
    %2632 = vmatpush1.xpose.msra.mxu0 0.0
    %2633 = vmatprep.subr.mxu0 0.0
    %2634 = vmatpush1.xpose.msra.mxu0 0.0
    %2635 = vmatprep.subr.mxu0 0.0
    %2636 = vmatpush1.xpose.msra.mxu0 0.0
    %2637 = vmatprep.subr.mxu0 0.0
    %2638 = vmatpush1.xpose.msra.mxu0 0.0
    %2639 = vmatprep.subr.mxu0 0.0
    %2640 = vmatpush1.xpose.msra.mxu0 0.0
    %2641 = vmatprep.subr.mxu0 0.0
    %2642 = vmatpush1.xpose.msra.mxu0 0.0
    %2643 = vmatprep.subr.mxu0 0.0
    %2644 = vmatpush1.xpose.msra.mxu0 0.0
    %2645 = vmatprep.subr.mxu0 0.0
    %2646 = vmatpush1.xpose.msra.mxu0 0.0
    %2647 = vmatprep.subr.mxu0 0.0
    %2648 = vmatpush1.xpose.msra.mxu0 0.0
    %2649 = vmatprep.subr.mxu0 0.0
    %2650 = vmatpush1.xpose.msra.mxu0 0.0
    %2651 = vmatprep.subr.mxu0 0.0
    %2652 = vmatpush1.xpose.msra.mxu0 0.0
    %2653 = vmatprep.subr.mxu0 0.0
    %2654 = vmatpush1.xpose.msra.mxu0 0.0
    %2655 = vmatprep.subr.mxu0 0.0
    %2656 = vmatpush1.xpose.msra.mxu0 0.0
    %2657 = vmatprep.subr.mxu0 0.0
    %2658 = vmatpush1.xpose.msra.mxu0 0.0
    %2659 = vmatprep.subr.mxu0 0.0
    %2660 = vmatpush1.xpose.msra.mxu0 0.0
    %2661 = vmatprep.subr.mxu0 0.0
    %2662 = vmatpush1.xpose.msra.mxu0 0.0
    %2663 = vmatprep.subr.mxu0 0.0
    %2664 = vmatpush1.xpose.msra.mxu0 0.0
    %2665 = vmatprep.subr.mxu0 0.0
    %2666 = vmatpush1.xpose.msra.mxu0 0.0
    %2667 = vmatprep.subr.mxu0 0.0
    %2668 = vmatpush1.xpose.msra.mxu0 0.0
    %2669 = vmatprep.subr.mxu0 0.0
    %2670 = vmatpush1.xpose.msra.mxu0 0.0
    %2671 = vmatprep.subr.mxu0 0.0
    %2672 = vmatpush1.xpose.msra.mxu0 0.0
    %2673 = vmatprep.subr.mxu0 0.0
    %2674 = vmatpush1.xpose.msra.mxu0 0.0
    %2675 = vmatprep.subr.mxu0 0.0
    %2676 = vmatpush1.xpose.msra.mxu0 0.0
    %2677 = vmatprep.subr.mxu0 0.0
    %2678 = vmatpush1.xpose.msra.mxu0 0.0
    %2679 = vmatprep.subr.mxu0 0.0
    %2680 = vmatpush1.xpose.msra.mxu0 0.0
    %2681 = vmatprep.subr.mxu0 0.0
    %2682 = vmatpush1.xpose.msra.mxu0 0.0
    %2683 = vmatprep.subr.mxu0 0.0
    %2684 = vmatpush1.xpose.msra.mxu0 0.0
    %2685 = vmatprep.mubr.f32.mxu0 0.0
    %2686 = vmatmul.mubr.f32.gmra.mrb[0].mxu0 %v2616
    %v2687 = vpop.f32.mrb[0].mxu0
    %v2688 = vadd.f32 0.0, %v2687
    %v2689 = vpop.f32.mrb[0].mxu0
    %2690 = vdwg.mxu0
    %v2692 = vsel %vm210, %v2300, 0
    %v2695 = vsel %vm210, %v2308, 0
    %2697 = vmatprep.subr.mxu0 0.0
    %2698 = vmatpush1.xpose.msra.mxu0 %v2695
    %2699 = vmatprep.subr.mxu0 0.0
    %2700 = vmatpush1.xpose.msra.mxu0 0.0
    %2701 = vmatprep.subr.mxu0 0.0
    %2702 = vmatpush1.xpose.msra.mxu0 0.0
    %2703 = vmatprep.subr.mxu0 0.0
    %2704 = vmatpush1.xpose.msra.mxu0 0.0
    %2705 = vmatprep.subr.mxu0 0.0
    %2706 = vmatpush1.xpose.msra.mxu0 0.0
    %2707 = vmatprep.subr.mxu0 0.0
    %2708 = vmatpush1.xpose.msra.mxu0 0.0
    %2709 = vmatprep.subr.mxu0 0.0
    %2710 = vmatpush1.xpose.msra.mxu0 0.0
    %2711 = vmatprep.subr.mxu0 0.0
    %2712 = vmatpush1.xpose.msra.mxu0 0.0
    %2713 = vmatprep.subr.mxu0 0.0
    %2714 = vmatpush1.xpose.msra.mxu0 0.0
    %2715 = vmatprep.subr.mxu0 0.0
    %2716 = vmatpush1.xpose.msra.mxu0 0.0
    %2717 = vmatprep.subr.mxu0 0.0
    %2718 = vmatpush1.xpose.msra.mxu0 0.0
    %2719 = vmatprep.subr.mxu0 0.0
    %2720 = vmatpush1.xpose.msra.mxu0 0.0
    %2721 = vmatprep.subr.mxu0 0.0
    %2722 = vmatpush1.xpose.msra.mxu0 0.0
    %2723 = vmatprep.subr.mxu0 0.0
    %2724 = vmatpush1.xpose.msra.mxu0 0.0
    %2725 = vmatprep.subr.mxu0 0.0
    %2726 = vmatpush1.xpose.msra.mxu0 0.0
    %2727 = vmatprep.subr.mxu0 0.0
    %2728 = vmatpush1.xpose.msra.mxu0 0.0
    %2729 = vmatprep.subr.mxu0 0.0
    %2730 = vmatpush1.xpose.msra.mxu0 0.0
    %2731 = vmatprep.subr.mxu0 0.0
    %2732 = vmatpush1.xpose.msra.mxu0 0.0
    %2733 = vmatprep.subr.mxu0 0.0
    %2734 = vmatpush1.xpose.msra.mxu0 0.0
    %2735 = vmatprep.subr.mxu0 0.0
    %2736 = vmatpush1.xpose.msra.mxu0 0.0
    %2737 = vmatprep.subr.mxu0 0.0
    %2738 = vmatpush1.xpose.msra.mxu0 0.0
    %2739 = vmatprep.subr.mxu0 0.0
    %2740 = vmatpush1.xpose.msra.mxu0 0.0
    %2741 = vmatprep.subr.mxu0 0.0
    %2742 = vmatpush1.xpose.msra.mxu0 0.0
    %2743 = vmatprep.subr.mxu0 0.0
    %2744 = vmatpush1.xpose.msra.mxu0 0.0
    %2745 = vmatprep.subr.mxu0 0.0
    %2746 = vmatpush1.xpose.msra.mxu0 0.0
    %2747 = vmatprep.subr.mxu0 0.0
    %2748 = vmatpush1.xpose.msra.mxu0 0.0
    %2749 = vmatprep.subr.mxu0 0.0
    %2750 = vmatpush1.xpose.msra.mxu0 0.0
    %2751 = vmatprep.subr.mxu0 0.0
    %2752 = vmatpush1.xpose.msra.mxu0 0.0
    %2753 = vmatprep.subr.mxu0 0.0
    %2754 = vmatpush1.xpose.msra.mxu0 0.0
    %2755 = vmatprep.subr.mxu0 0.0
    %2756 = vmatpush1.xpose.msra.mxu0 0.0
    %2757 = vmatprep.subr.mxu0 0.0
    %2758 = vmatpush1.xpose.msra.mxu0 0.0
    %2759 = vmatprep.subr.mxu0 0.0
    %2760 = vmatpush1.xpose.msra.mxu0 0.0
    %2761 = vmatprep.mubr.f32.mxu0 0.0
    %2762 = vmatmul.mubr.f32.gmra.mrb[0].mxu0 %v2692
    %v2763 = vpop.f32.mrb[0].mxu0
    %v2764 = vadd.f32 0.0, %v2763
    %v2765 = vpop.f32.mrb[0].mxu0
    %2766 = vdwg.mxu0
    %v2768 = vsel %vm210, %v2301, 0
    %v2771 = vsel %vm210, %v2309, 0
    %2773 = vmatprep.subr.mxu0 0.0
    %2774 = vmatpush1.xpose.msra.mxu0 %v2771
    %2775 = vmatprep.subr.mxu0 0.0
    %2776 = vmatpush1.xpose.msra.mxu0 0.0
    %2777 = vmatprep.subr.mxu0 0.0
    %2778 = vmatpush1.xpose.msra.mxu0 0.0
    %2779 = vmatprep.subr.mxu0 0.0
    %2780 = vmatpush1.xpose.msra.mxu0 0.0
    %2781 = vmatprep.subr.mxu0 0.0
    %2782 = vmatpush1.xpose.msra.mxu0 0.0
    %2783 = vmatprep.subr.mxu0 0.0
    %2784 = vmatpush1.xpose.msra.mxu0 0.0
    %2785 = vmatprep.subr.mxu0 0.0
    %2786 = vmatpush1.xpose.msra.mxu0 0.0
    %2787 = vmatprep.subr.mxu0 0.0
    %2788 = vmatpush1.xpose.msra.mxu0 0.0
    %2789 = vmatprep.subr.mxu0 0.0
    %2790 = vmatpush1.xpose.msra.mxu0 0.0
    %2791 = vmatprep.subr.mxu0 0.0
    %2792 = vmatpush1.xpose.msra.mxu0 0.0
    %2793 = vmatprep.subr.mxu0 0.0
    %2794 = vmatpush1.xpose.msra.mxu0 0.0
    %2795 = vmatprep.subr.mxu0 0.0
    %2796 = vmatpush1.xpose.msra.mxu0 0.0
    %2797 = vmatprep.subr.mxu0 0.0
    %2798 = vmatpush1.xpose.msra.mxu0 0.0
    %2799 = vmatprep.subr.mxu0 0.0
    %2800 = vmatpush1.xpose.msra.mxu0 0.0
    %2801 = vmatprep.subr.mxu0 0.0
    %2802 = vmatpush1.xpose.msra.mxu0 0.0
    %2803 = vmatprep.subr.mxu0 0.0
    %2804 = vmatpush1.xpose.msra.mxu0 0.0
    %2805 = vmatprep.subr.mxu0 0.0
    %2806 = vmatpush1.xpose.msra.mxu0 0.0
    %2807 = vmatprep.subr.mxu0 0.0
    %2808 = vmatpush1.xpose.msra.mxu0 0.0
    %2809 = vmatprep.subr.mxu0 0.0
    %2810 = vmatpush1.xpose.msra.mxu0 0.0
    %2811 = vmatprep.subr.mxu0 0.0
    %2812 = vmatpush1.xpose.msra.mxu0 0.0
    %2813 = vmatprep.subr.mxu0 0.0
    %2814 = vmatpush1.xpose.msra.mxu0 0.0
    %2815 = vmatprep.subr.mxu0 0.0
    %2816 = vmatpush1.xpose.msra.mxu0 0.0
    %2817 = vmatprep.subr.mxu0 0.0
    %2818 = vmatpush1.xpose.msra.mxu0 0.0
    %2819 = vmatprep.subr.mxu0 0.0
    %2820 = vmatpush1.xpose.msra.mxu0 0.0
    %2821 = vmatprep.subr.mxu0 0.0
    %2822 = vmatpush1.xpose.msra.mxu0 0.0
    %2823 = vmatprep.subr.mxu0 0.0
    %2824 = vmatpush1.xpose.msra.mxu0 0.0
    %2825 = vmatprep.subr.mxu0 0.0
    %2826 = vmatpush1.xpose.msra.mxu0 0.0
    %2827 = vmatprep.subr.mxu0 0.0
    %2828 = vmatpush1.xpose.msra.mxu0 0.0
    %2829 = vmatprep.subr.mxu0 0.0
    %2830 = vmatpush1.xpose.msra.mxu0 0.0
    %2831 = vmatprep.subr.mxu0 0.0
    %2832 = vmatpush1.xpose.msra.mxu0 0.0
    %2833 = vmatprep.subr.mxu0 0.0
    %2834 = vmatpush1.xpose.msra.mxu0 0.0
    %2835 = vmatprep.subr.mxu0 0.0
    %2836 = vmatpush1.xpose.msra.mxu0 0.0
    %2837 = vmatprep.mubr.f32.mxu0 0.0
    %2838 = vmatmul.mubr.f32.gmra.mrb[0].mxu0 %v2768
    %v2839 = vpop.f32.mrb[0].mxu0
    %v2840 = vadd.f32 0.0, %v2839
    %v2841 = vpop.f32.mrb[0].mxu0
    %2842 = vdwg.mxu0
    %v2844 = vsel %vm210, %v2302, 0
    %v2847 = vsel %vm210, %v2310, 0
    %2849 = vmatprep.subr.mxu0 0.0
    %2850 = vmatpush1.xpose.msra.mxu0 %v2847
    %2851 = vmatprep.subr.mxu0 0.0
    %2852 = vmatpush1.xpose.msra.mxu0 0.0
    %2853 = vmatprep.subr.mxu0 0.0
    %2854 = vmatpush1.xpose.msra.mxu0 0.0
    %2855 = vmatprep.subr.mxu0 0.0
    %2856 = vmatpush1.xpose.msra.mxu0 0.0
    %2857 = vmatprep.subr.mxu0 0.0
    %2858 = vmatpush1.xpose.msra.mxu0 0.0
    %2859 = vmatprep.subr.mxu0 0.0
    %2860 = vmatpush1.xpose.msra.mxu0 0.0
    %2861 = vmatprep.subr.mxu0 0.0
    %2862 = vmatpush1.xpose.msra.mxu0 0.0
    %2863 = vmatprep.subr.mxu0 0.0
    %2864 = vmatpush1.xpose.msra.mxu0 0.0
    %2865 = vmatprep.subr.mxu0 0.0
    %2866 = vmatpush1.xpose.msra.mxu0 0.0
    %2867 = vmatprep.subr.mxu0 0.0
    %2868 = vmatpush1.xpose.msra.mxu0 0.0
    %2869 = vmatprep.subr.mxu0 0.0
    %2870 = vmatpush1.xpose.msra.mxu0 0.0
    %2871 = vmatprep.subr.mxu0 0.0
    %2872 = vmatpush1.xpose.msra.mxu0 0.0
    %2873 = vmatprep.subr.mxu0 0.0
    %2874 = vmatpush1.xpose.msra.mxu0 0.0
    %2875 = vmatprep.subr.mxu0 0.0
    %2876 = vmatpush1.xpose.msra.mxu0 0.0
    %2877 = vmatprep.subr.mxu0 0.0
    %2878 = vmatpush1.xpose.msra.mxu0 0.0
    %2879 = vmatprep.subr.mxu0 0.0
    %2880 = vmatpush1.xpose.msra.mxu0 0.0
    %2881 = vmatprep.subr.mxu0 0.0
    %2882 = vmatpush1.xpose.msra.mxu0 0.0
    %2883 = vmatprep.subr.mxu0 0.0
    %2884 = vmatpush1.xpose.msra.mxu0 0.0
    %2885 = vmatprep.subr.mxu0 0.0
    %2886 = vmatpush1.xpose.msra.mxu0 0.0
    %2887 = vmatprep.subr.mxu0 0.0
    %2888 = vmatpush1.xpose.msra.mxu0 0.0
    %2889 = vmatprep.subr.mxu0 0.0
    %2890 = vmatpush1.xpose.msra.mxu0 0.0
    %2891 = vmatprep.subr.mxu0 0.0
    %2892 = vmatpush1.xpose.msra.mxu0 0.0
    %2893 = vmatprep.subr.mxu0 0.0
    %2894 = vmatpush1.xpose.msra.mxu0 0.0
    %2895 = vmatprep.subr.mxu0 0.0
    %2896 = vmatpush1.xpose.msra.mxu0 0.0
    %2897 = vmatprep.subr.mxu0 0.0
    %2898 = vmatpush1.xpose.msra.mxu0 0.0
    %2899 = vmatprep.subr.mxu0 0.0
    %2900 = vmatpush1.xpose.msra.mxu0 0.0
    %2901 = vmatprep.subr.mxu0 0.0
    %2902 = vmatpush1.xpose.msra.mxu0 0.0
    %2903 = vmatprep.subr.mxu0 0.0
    %2904 = vmatpush1.xpose.msra.mxu0 0.0
    %2905 = vmatprep.subr.mxu0 0.0
    %2906 = vmatpush1.xpose.msra.mxu0 0.0
    %2907 = vmatprep.subr.mxu0 0.0
    %2908 = vmatpush1.xpose.msra.mxu0 0.0
    %2909 = vmatprep.subr.mxu0 0.0
    %2910 = vmatpush1.xpose.msra.mxu0 0.0
    %2911 = vmatprep.subr.mxu0 0.0
    %2912 = vmatpush1.xpose.msra.mxu0 0.0
    %2913 = vmatprep.mubr.f32.mxu0 0.0
    %2914 = vmatmul.mubr.f32.gmra.mrb[0].mxu0 %v2844
    %v2915 = vpop.f32.mrb[0].mxu0
    %v2916 = vadd.f32 0.0, %v2915
    %v2917 = vpop.f32.mrb[0].mxu0
    %2918 = vdwg.mxu0
    %v2919 = vmul.f32 %v2384, 0.35355338
    %v2920 = vmul.f32 %v2460, 0.35355338
    %v2921 = vmul.f32 %v2536, 0.35355338
    %v2922 = vmul.f32 %v2612, 0.35355338
    %v2923 = vmul.f32 %v2688, 0.35355338
    %v2924 = vmul.f32 %v2764, 0.35355338
    %v2925 = vmul.f32 %v2840, 0.35355338
    %v2926 = vmul.f32 %v2916, 0.35355338
    %v2927 = vadd.f32 %v2919, %v955
    %v2928 = vadd.f32 %v2920, %v959
    %v2929 = vadd.f32 %v2921, %v963
    %v2930 = vadd.f32 %v2922, %v967
    %v2931 = vadd.f32 %v2923, %v971
    %v2932 = vadd.f32 %v2924, %v975
    %v2933 = vadd.f32 %v2925, %v979
    %v2934 = vadd.f32 %v2926, %v983
    %v2935 = vsel %vm210, %v2927, -inf
    %2936 = vmax.xlane.f32.xlu0 %v2935
    %v2937 = vpop.xlane.xlu0 %2936
    %v2938 = vsel %vm210, %v2928, -inf
    %2939 = vmax.xlane.f32.xlu0 %v2938
    %v2940 = vpop.xlane.xlu0 %2939
    %v2941 = vsel %vm210, %v2929, -inf
    %2942 = vmax.xlane.f32.xlu0 %v2941
    %v2943 = vpop.xlane.xlu0 %2942
    %v2944 = vsel %vm210, %v2930, -inf
    %2945 = vmax.xlane.f32.xlu0 %v2944
    %v2946 = vpop.xlane.xlu0 %2945
    %v2947 = vsel %vm210, %v2931, -inf
    %2948 = vmax.xlane.f32.xlu0 %v2947
    %v2949 = vpop.xlane.xlu0 %2948
    %v2950 = vsel %vm210, %v2932, -inf
    %2951 = vmax.xlane.f32.xlu0 %v2950
    %v2952 = vpop.xlane.xlu0 %2951
    %v2953 = vsel %vm210, %v2933, -inf
    %2954 = vmax.xlane.f32.xlu0 %v2953
    %v2955 = vpop.xlane.xlu0 %2954
    %v2956 = vsel %vm210, %v2934, -inf
    %2957 = vmax.xlane.f32.xlu0 %v2956
    %v2958 = vpop.xlane.xlu0 %2957
    %v2959 = vsub.f32 %v2927, %v2937
    %v2960 = vsub.f32 %v2928, %v2940
    %v2961 = vsub.f32 %v2929, %v2943
    %v2962 = vsub.f32 %v2930, %v2946
    %v2963 = vsub.f32 %v2931, %v2949
    %v2964 = vsub.f32 %v2932, %v2952
    %v2965 = vsub.f32 %v2933, %v2955
    %v2966 = vsub.f32 %v2934, %v2958
    %v2967 = vmul.f32 %v2959, 1.442695
    %v2968 = vpow.pop %v2967
    %v2969 = vmul.f32 %v2960, 1.442695
    %v2970 = vpow.pop %v2969
    %v2971 = vmul.f32 %v2961, 1.442695
    %v2972 = vpow.pop %v2971
    %v2973 = vmul.f32 %v2962, 1.442695
    %v2974 = vpow.pop %v2973
    %v2975 = vmul.f32 %v2963, 1.442695
    %v2976 = vpow.pop %v2975
    %v2977 = vmul.f32 %v2964, 1.442695
    %v2978 = vpow.pop %v2977
    %v2979 = vmul.f32 %v2965, 1.442695
    %v2980 = vpow.pop %v2979
    %v2981 = vmul.f32 %v2966, 1.442695
    %v2982 = vpow.pop %v2981
    %v2983 = vsel %vm210, %v2968, 0.0
    %2984 = vadd.xlane.f32.xlu0 %v2983
    %v2985 = vpop.xlane.xlu0 %2984
    %v2986 = vsel %vm210, %v2970, 0.0
    %2987 = vadd.xlane.f32.xlu0 %v2986
    %v2988 = vpop.xlane.xlu0 %2987
    %v2989 = vsel %vm210, %v2972, 0.0
    %2990 = vadd.xlane.f32.xlu0 %v2989
    %v2991 = vpop.xlane.xlu0 %2990
    %v2992 = vsel %vm210, %v2974, 0.0
    %2993 = vadd.xlane.f32.xlu0 %v2992
    %v2994 = vpop.xlane.xlu0 %2993
    %v2995 = vsel %vm210, %v2976, 0.0
    %2996 = vadd.xlane.f32.xlu0 %v2995
    %v2997 = vpop.xlane.xlu0 %2996
    %v2998 = vsel %vm210, %v2978, 0.0
    %2999 = vadd.xlane.f32.xlu0 %v2998
    %v3000 = vpop.xlane.xlu0 %2999
    %v3001 = vsel %vm210, %v2980, 0.0
    %3002 = vadd.xlane.f32.xlu0 %v3001
    %v3003 = vpop.xlane.xlu0 %3002
    %v3004 = vsel %vm210, %v2982, 0.0
    %3005 = vadd.xlane.f32.xlu0 %v3004
    %v3006 = vpop.xlane.xlu0 %3005
    %v3007 = vrcp.pop %v2985
    %v3008 = vrcp.pop %v2988
    %v3009 = vrcp.pop %v2991
    %v3010 = vrcp.pop %v2994
    %v3011 = vrcp.pop %v2997
    %v3012 = vrcp.pop %v3000
    %v3013 = vrcp.pop %v3003
    %v3014 = vrcp.pop %v3006
    %v3015 = vmul.f32 %v2968, %v3007
    %v3016 = vmul.f32 %v2970, %v3008
    %v3017 = vmul.f32 %v2972, %v3009
    %v3018 = vmul.f32 %v2974, %v3010
    %v3019 = vmul.f32 %v2976, %v3011
    %v3020 = vmul.f32 %v2978, %v3012
    %v3021 = vmul.f32 %v2980, %v3013
    %v3022 = vmul.f32 %v2982, %v3014
    %v3023 = vld [vmem:[#allocation4] sm:$0xff]
    %v3024 = vld [vmem:[#allocation4 + $0x8] sm:$0xff]
    %v3025 = vld [vmem:[#allocation4 + $0x10] sm:$0xff]
    %v3026 = vld [vmem:[#allocation4 + $0x18] sm:$0xff]
    %v3027 = vld [vmem:[#allocation4 + $0x20] sm:$0xff]
    %v3028 = vld [vmem:[#allocation4 + $0x28] sm:$0xff]
    %v3029 = vld [vmem:[#allocation4 + $0x30] sm:$0xff]
    %v3030 = vld [vmem:[#allocation4 + $0x38] sm:$0xff]
    %v3032 = vsel %vm210, %v3015, 0
    %3034 = vmatprep.subr.mxu0 0.0
    %3035 = vmatpush1.msra.mxu0 %v3023
    %3036 = vmatprep.subr.mxu0 0.0
    %3037 = vmatpush1.msra.mxu0 0.0
    %3038 = vmatprep.subr.mxu0 0.0
    %3039 = vmatpush1.msra.mxu0 0.0
    %3040 = vmatprep.subr.mxu0 0.0
    %3041 = vmatpush1.msra.mxu0 0.0
    %3042 = vmatprep.subr.mxu0 0.0
    %3043 = vmatpush1.msra.mxu0 0.0
    %3044 = vmatprep.subr.mxu0 0.0
    %3045 = vmatpush1.msra.mxu0 0.0
    %3046 = vmatprep.subr.mxu0 0.0
    %3047 = vmatpush1.msra.mxu0 0.0
    %3048 = vmatprep.subr.mxu0 0.0
    %3049 = vmatpush1.msra.mxu0 0.0
    %3050 = vmatprep.subr.mxu0 0.0
    %3051 = vmatpush1.msra.mxu0 0.0
    %3052 = vmatprep.subr.mxu0 0.0
    %3053 = vmatpush1.msra.mxu0 0.0
    %3054 = vmatprep.subr.mxu0 0.0
    %3055 = vmatpush1.msra.mxu0 0.0
    %3056 = vmatprep.subr.mxu0 0.0
    %3057 = vmatpush1.msra.mxu0 0.0
    %3058 = vmatprep.subr.mxu0 0.0
    %3059 = vmatpush1.msra.mxu0 0.0
    %3060 = vmatprep.subr.mxu0 0.0
    %3061 = vmatpush1.msra.mxu0 0.0
    %3062 = vmatprep.subr.mxu0 0.0
    %3063 = vmatpush1.msra.mxu0 0.0
    %3064 = vmatprep.subr.mxu0 0.0
    %3065 = vmatpush1.msra.mxu0 0.0
    %3066 = vmatprep.subr.mxu0 0.0
    %3067 = vmatpush1.msra.mxu0 0.0
    %3068 = vmatprep.subr.mxu0 0.0
    %3069 = vmatpush1.msra.mxu0 0.0
    %3070 = vmatprep.subr.mxu0 0.0
    %3071 = vmatpush1.msra.mxu0 0.0
    %3072 = vmatprep.subr.mxu0 0.0
    %3073 = vmatpush1.msra.mxu0 0.0
    %3074 = vmatprep.subr.mxu0 0.0
    %3075 = vmatpush1.msra.mxu0 0.0
    %3076 = vmatprep.subr.mxu0 0.0
    %3077 = vmatpush1.msra.mxu0 0.0
    %3078 = vmatprep.subr.mxu0 0.0
    %3079 = vmatpush1.msra.mxu0 0.0
    %3080 = vmatprep.subr.mxu0 0.0
    %3081 = vmatpush1.msra.mxu0 0.0
    %3082 = vmatprep.subr.mxu0 0.0
    %3083 = vmatpush1.msra.mxu0 0.0
    %3084 = vmatprep.subr.mxu0 0.0
    %3085 = vmatpush1.msra.mxu0 0.0
    %3086 = vmatprep.subr.mxu0 0.0
    %3087 = vmatpush1.msra.mxu0 0.0
    %3088 = vmatprep.subr.mxu0 0.0
    %3089 = vmatpush1.msra.mxu0 0.0
    %3090 = vmatprep.subr.mxu0 0.0
    %3091 = vmatpush1.msra.mxu0 0.0
    %3092 = vmatprep.subr.mxu0 0.0
    %3093 = vmatpush1.msra.mxu0 0.0
    %3094 = vmatprep.subr.mxu0 0.0
    %3095 = vmatpush1.msra.mxu0 0.0
    %3096 = vmatprep.subr.mxu0 0.0
    %3097 = vmatpush1.msra.mxu0 0.0
    %3098 = vmatprep.mubr.f32.mxu0 0.0
    %3099 = vmatmul.mubr.f32.gmra.mrb[0].mxu0 %v3032
    %v3100 = vpop.f32.mrb[0].mxu0
    %v3101 = vadd.f32 0.0, %v3100
    %v3102 = vpop.f32.mrb[0].mxu0
    %3103 = vdwg.mxu0
    %v3105 = vsel %vm210, %v3016, 0
    %3107 = vmatprep.subr.mxu0 0.0
    %3108 = vmatpush1.msra.mxu0 %v3024
    %3109 = vmatprep.subr.mxu0 0.0
    %3110 = vmatpush1.msra.mxu0 0.0
    %3111 = vmatprep.subr.mxu0 0.0
    %3112 = vmatpush1.msra.mxu0 0.0
    %3113 = vmatprep.subr.mxu0 0.0
    %3114 = vmatpush1.msra.mxu0 0.0
    %3115 = vmatprep.subr.mxu0 0.0
    %3116 = vmatpush1.msra.mxu0 0.0
    %3117 = vmatprep.subr.mxu0 0.0
    %3118 = vmatpush1.msra.mxu0 0.0
    %3119 = vmatprep.subr.mxu0 0.0
    %3120 = vmatpush1.msra.mxu0 0.0
    %3121 = vmatprep.subr.mxu0 0.0
    %3122 = vmatpush1.msra.mxu0 0.0
    %3123 = vmatprep.subr.mxu0 0.0
    %3124 = vmatpush1.msra.mxu0 0.0
    %3125 = vmatprep.subr.mxu0 0.0
    %3126 = vmatpush1.msra.mxu0 0.0
    %3127 = vmatprep.subr.mxu0 0.0
    %3128 = vmatpush1.msra.mxu0 0.0
    %3129 = vmatprep.subr.mxu0 0.0
    %3130 = vmatpush1.msra.mxu0 0.0
    %3131 = vmatprep.subr.mxu0 0.0
    %3132 = vmatpush1.msra.mxu0 0.0
    %3133 = vmatprep.subr.mxu0 0.0
    %3134 = vmatpush1.msra.mxu0 0.0
    %3135 = vmatprep.subr.mxu0 0.0
    %3136 = vmatpush1.msra.mxu0 0.0
    %3137 = vmatprep.subr.mxu0 0.0
    %3138 = vmatpush1.msra.mxu0 0.0
    %3139 = vmatprep.subr.mxu0 0.0
    %3140 = vmatpush1.msra.mxu0 0.0
    %3141 = vmatprep.subr.mxu0 0.0
    %3142 = vmatpush1.msra.mxu0 0.0
    %3143 = vmatprep.subr.mxu0 0.0
    %3144 = vmatpush1.msra.mxu0 0.0
    %3145 = vmatprep.subr.mxu0 0.0
    %3146 = vmatpush1.msra.mxu0 0.0
    %3147 = vmatprep.subr.mxu0 0.0
    %3148 = vmatpush1.msra.mxu0 0.0
    %3149 = vmatprep.subr.mxu0 0.0
    %3150 = vmatpush1.msra.mxu0 0.0
    %3151 = vmatprep.subr.mxu0 0.0
    %3152 = vmatpush1.msra.mxu0 0.0
    %3153 = vmatprep.subr.mxu0 0.0
    %3154 = vmatpush1.msra.mxu0 0.0
    %3155 = vmatprep.subr.mxu0 0.0
    %3156 = vmatpush1.msra.mxu0 0.0
    %3157 = vmatprep.subr.mxu0 0.0
    %3158 = vmatpush1.msra.mxu0 0.0
    %3159 = vmatprep.subr.mxu0 0.0
    %3160 = vmatpush1.msra.mxu0 0.0
    %3161 = vmatprep.subr.mxu0 0.0
    %3162 = vmatpush1.msra.mxu0 0.0
    %3163 = vmatprep.subr.mxu0 0.0
    %3164 = vmatpush1.msra.mxu0 0.0
    %3165 = vmatprep.subr.mxu0 0.0
    %3166 = vmatpush1.msra.mxu0 0.0
    %3167 = vmatprep.subr.mxu0 0.0
    %3168 = vmatpush1.msra.mxu0 0.0
    %3169 = vmatprep.subr.mxu0 0.0
    %3170 = vmatpush1.msra.mxu0 0.0
    %3171 = vmatprep.mubr.f32.mxu0 0.0
    %3172 = vmatmul.mubr.f32.gmra.mrb[0].mxu0 %v3105
    %v3173 = vpop.f32.mrb[0].mxu0
    %v3174 = vadd.f32 0.0, %v3173
    %v3175 = vpop.f32.mrb[0].mxu0
    %3176 = vdwg.mxu0
    %v3178 = vsel %vm210, %v3017, 0
    %3180 = vmatprep.subr.mxu0 0.0
    %3181 = vmatpush1.msra.mxu0 %v3025
    %3182 = vmatprep.subr.mxu0 0.0
    %3183 = vmatpush1.msra.mxu0 0.0
    %3184 = vmatprep.subr.mxu0 0.0
    %3185 = vmatpush1.msra.mxu0 0.0
    %3186 = vmatprep.subr.mxu0 0.0
    %3187 = vmatpush1.msra.mxu0 0.0
    %3188 = vmatprep.subr.mxu0 0.0
    %3189 = vmatpush1.msra.mxu0 0.0
    %3190 = vmatprep.subr.mxu0 0.0
    %3191 = vmatpush1.msra.mxu0 0.0
    %3192 = vmatprep.subr.mxu0 0.0
    %3193 = vmatpush1.msra.mxu0 0.0
    %3194 = vmatprep.subr.mxu0 0.0
    %3195 = vmatpush1.msra.mxu0 0.0
    %3196 = vmatprep.subr.mxu0 0.0
    %3197 = vmatpush1.msra.mxu0 0.0
    %3198 = vmatprep.subr.mxu0 0.0
    %3199 = vmatpush1.msra.mxu0 0.0
    %3200 = vmatprep.subr.mxu0 0.0
    %3201 = vmatpush1.msra.mxu0 0.0
    %3202 = vmatprep.subr.mxu0 0.0
    %3203 = vmatpush1.msra.mxu0 0.0
    %3204 = vmatprep.subr.mxu0 0.0
    %3205 = vmatpush1.msra.mxu0 0.0
    %3206 = vmatprep.subr.mxu0 0.0
    %3207 = vmatpush1.msra.mxu0 0.0
    %3208 = vmatprep.subr.mxu0 0.0
    %3209 = vmatpush1.msra.mxu0 0.0
    %3210 = vmatprep.subr.mxu0 0.0
    %3211 = vmatpush1.msra.mxu0 0.0
    %3212 = vmatprep.subr.mxu0 0.0
    %3213 = vmatpush1.msra.mxu0 0.0
    %3214 = vmatprep.subr.mxu0 0.0
    %3215 = vmatpush1.msra.mxu0 0.0
    %3216 = vmatprep.subr.mxu0 0.0
    %3217 = vmatpush1.msra.mxu0 0.0
    %3218 = vmatprep.subr.mxu0 0.0
    %3219 = vmatpush1.msra.mxu0 0.0
    %3220 = vmatprep.subr.mxu0 0.0
    %3221 = vmatpush1.msra.mxu0 0.0
    %3222 = vmatprep.subr.mxu0 0.0
    %3223 = vmatpush1.msra.mxu0 0.0
    %3224 = vmatprep.subr.mxu0 0.0
    %3225 = vmatpush1.msra.mxu0 0.0
    %3226 = vmatprep.subr.mxu0 0.0
    %3227 = vmatpush1.msra.mxu0 0.0
    %3228 = vmatprep.subr.mxu0 0.0
    %3229 = vmatpush1.msra.mxu0 0.0
    %3230 = vmatprep.subr.mxu0 0.0
    %3231 = vmatpush1.msra.mxu0 0.0
    %3232 = vmatprep.subr.mxu0 0.0
    %3233 = vmatpush1.msra.mxu0 0.0
    %3234 = vmatprep.subr.mxu0 0.0
    %3235 = vmatpush1.msra.mxu0 0.0
    %3236 = vmatprep.subr.mxu0 0.0
    %3237 = vmatpush1.msra.mxu0 0.0
    %3238 = vmatprep.subr.mxu0 0.0
    %3239 = vmatpush1.msra.mxu0 0.0
    %3240 = vmatprep.subr.mxu0 0.0
    %3241 = vmatpush1.msra.mxu0 0.0
    %3242 = vmatprep.subr.mxu0 0.0
    %3243 = vmatpush1.msra.mxu0 0.0
    %3244 = vmatprep.mubr.f32.mxu0 0.0
    %3245 = vmatmul.mubr.f32.gmra.mrb[0].mxu0 %v3178
    %v3246 = vpop.f32.mrb[0].mxu0
    %v3247 = vadd.f32 0.0, %v3246
    %v3248 = vpop.f32.mrb[0].mxu0
    %3249 = vdwg.mxu0
    %v3251 = vsel %vm210, %v3018, 0
    %3253 = vmatprep.subr.mxu0 0.0
    %3254 = vmatpush1.msra.mxu0 %v3026
    %3255 = vmatprep.subr.mxu0 0.0
    %3256 = vmatpush1.msra.mxu0 0.0
    %3257 = vmatprep.subr.mxu0 0.0
    %3258 = vmatpush1.msra.mxu0 0.0
    %3259 = vmatprep.subr.mxu0 0.0
    %3260 = vmatpush1.msra.mxu0 0.0
    %3261 = vmatprep.subr.mxu0 0.0
    %3262 = vmatpush1.msra.mxu0 0.0
    %3263 = vmatprep.subr.mxu0 0.0
    %3264 = vmatpush1.msra.mxu0 0.0
    %3265 = vmatprep.subr.mxu0 0.0
    %3266 = vmatpush1.msra.mxu0 0.0
    %3267 = vmatprep.subr.mxu0 0.0
    %3268 = vmatpush1.msra.mxu0 0.0
    %3269 = vmatprep.subr.mxu0 0.0
    %3270 = vmatpush1.msra.mxu0 0.0
    %3271 = vmatprep.subr.mxu0 0.0
    %3272 = vmatpush1.msra.mxu0 0.0
    %3273 = vmatprep.subr.mxu0 0.0
    %3274 = vmatpush1.msra.mxu0 0.0
    %3275 = vmatprep.subr.mxu0 0.0
    %3276 = vmatpush1.msra.mxu0 0.0
    %3277 = vmatprep.subr.mxu0 0.0
    %3278 = vmatpush1.msra.mxu0 0.0
    %3279 = vmatprep.subr.mxu0 0.0
    %3280 = vmatpush1.msra.mxu0 0.0
    %3281 = vmatprep.subr.mxu0 0.0
    %3282 = vmatpush1.msra.mxu0 0.0
    %3283 = vmatprep.subr.mxu0 0.0
    %3284 = vmatpush1.msra.mxu0 0.0
    %3285 = vmatprep.subr.mxu0 0.0
    %3286 = vmatpush1.msra.mxu0 0.0
    %3287 = vmatprep.subr.mxu0 0.0
    %3288 = vmatpush1.msra.mxu0 0.0
    %3289 = vmatprep.subr.mxu0 0.0
    %3290 = vmatpush1.msra.mxu0 0.0
    %3291 = vmatprep.subr.mxu0 0.0
    %3292 = vmatpush1.msra.mxu0 0.0
    %3293 = vmatprep.subr.mxu0 0.0
    %3294 = vmatpush1.msra.mxu0 0.0
    %3295 = vmatprep.subr.mxu0 0.0
    %3296 = vmatpush1.msra.mxu0 0.0
    %3297 = vmatprep.subr.mxu0 0.0
    %3298 = vmatpush1.msra.mxu0 0.0
    %3299 = vmatprep.subr.mxu0 0.0
    %3300 = vmatpush1.msra.mxu0 0.0
    %3301 = vmatprep.subr.mxu0 0.0
    %3302 = vmatpush1.msra.mxu0 0.0
    %3303 = vmatprep.subr.mxu0 0.0
    %3304 = vmatpush1.msra.mxu0 0.0
    %3305 = vmatprep.subr.mxu0 0.0
    %3306 = vmatpush1.msra.mxu0 0.0
    %3307 = vmatprep.subr.mxu0 0.0
    %3308 = vmatpush1.msra.mxu0 0.0
    %3309 = vmatprep.subr.mxu0 0.0
    %3310 = vmatpush1.msra.mxu0 0.0
    %3311 = vmatprep.subr.mxu0 0.0
    %3312 = vmatpush1.msra.mxu0 0.0
    %3313 = vmatprep.subr.mxu0 0.0
    %3314 = vmatpush1.msra.mxu0 0.0
    %3315 = vmatprep.subr.mxu0 0.0
    %3316 = vmatpush1.msra.mxu0 0.0
    %3317 = vmatprep.mubr.f32.mxu0 0.0
    %3318 = vmatmul.mubr.f32.gmra.mrb[0].mxu0 %v3251
    %v3319 = vpop.f32.mrb[0].mxu0
    %v3320 = vadd.f32 0.0, %v3319
    %v3321 = vpop.f32.mrb[0].mxu0
    %3322 = vdwg.mxu0
    %v3324 = vsel %vm210, %v3019, 0
    %3326 = vmatprep.subr.mxu0 0.0
    %3327 = vmatpush1.msra.mxu0 %v3027
    %3328 = vmatprep.subr.mxu0 0.0
    %3329 = vmatpush1.msra.mxu0 0.0
    %3330 = vmatprep.subr.mxu0 0.0
    %3331 = vmatpush1.msra.mxu0 0.0
    %3332 = vmatprep.subr.mxu0 0.0
    %3333 = vmatpush1.msra.mxu0 0.0
    %3334 = vmatprep.subr.mxu0 0.0
    %3335 = vmatpush1.msra.mxu0 0.0
    %3336 = vmatprep.subr.mxu0 0.0
    %3337 = vmatpush1.msra.mxu0 0.0
    %3338 = vmatprep.subr.mxu0 0.0
    %3339 = vmatpush1.msra.mxu0 0.0
    %3340 = vmatprep.subr.mxu0 0.0
    %3341 = vmatpush1.msra.mxu0 0.0
    %3342 = vmatprep.subr.mxu0 0.0
    %3343 = vmatpush1.msra.mxu0 0.0
    %3344 = vmatprep.subr.mxu0 0.0
    %3345 = vmatpush1.msra.mxu0 0.0
    %3346 = vmatprep.subr.mxu0 0.0
    %3347 = vmatpush1.msra.mxu0 0.0
    %3348 = vmatprep.subr.mxu0 0.0
    %3349 = vmatpush1.msra.mxu0 0.0
    %3350 = vmatprep.subr.mxu0 0.0
    %3351 = vmatpush1.msra.mxu0 0.0
    %3352 = vmatprep.subr.mxu0 0.0
    %3353 = vmatpush1.msra.mxu0 0.0
    %3354 = vmatprep.subr.mxu0 0.0
    %3355 = vmatpush1.msra.mxu0 0.0
    %3356 = vmatprep.subr.mxu0 0.0
    %3357 = vmatpush1.msra.mxu0 0.0
    %3358 = vmatprep.subr.mxu0 0.0
    %3359 = vmatpush1.msra.mxu0 0.0
    %3360 = vmatprep.subr.mxu0 0.0
    %3361 = vmatpush1.msra.mxu0 0.0
    %3362 = vmatprep.subr.mxu0 0.0
    %3363 = vmatpush1.msra.mxu0 0.0
    %3364 = vmatprep.subr.mxu0 0.0
    %3365 = vmatpush1.msra.mxu0 0.0
    %3366 = vmatprep.subr.mxu0 0.0
    %3367 = vmatpush1.msra.mxu0 0.0
    %3368 = vmatprep.subr.mxu0 0.0
    %3369 = vmatpush1.msra.mxu0 0.0
    %3370 = vmatprep.subr.mxu0 0.0
    %3371 = vmatpush1.msra.mxu0 0.0
    %3372 = vmatprep.subr.mxu0 0.0
    %3373 = vmatpush1.msra.mxu0 0.0
    %3374 = vmatprep.subr.mxu0 0.0
    %3375 = vmatpush1.msra.mxu0 0.0
    %3376 = vmatprep.subr.mxu0 0.0
    %3377 = vmatpush1.msra.mxu0 0.0
    %3378 = vmatprep.subr.mxu0 0.0
    %3379 = vmatpush1.msra.mxu0 0.0
    %3380 = vmatprep.subr.mxu0 0.0
    %3381 = vmatpush1.msra.mxu0 0.0
    %3382 = vmatprep.subr.mxu0 0.0
    %3383 = vmatpush1.msra.mxu0 0.0
    %3384 = vmatprep.subr.mxu0 0.0
    %3385 = vmatpush1.msra.mxu0 0.0
    %3386 = vmatprep.subr.mxu0 0.0
    %3387 = vmatpush1.msra.mxu0 0.0
    %3388 = vmatprep.subr.mxu0 0.0
    %3389 = vmatpush1.msra.mxu0 0.0
    %3390 = vmatprep.mubr.f32.mxu0 0.0
    %3391 = vmatmul.mubr.f32.gmra.mrb[0].mxu0 %v3324
    %v3392 = vpop.f32.mrb[0].mxu0
    %v3393 = vadd.f32 0.0, %v3392
    %v3394 = vpop.f32.mrb[0].mxu0
    %3395 = vdwg.mxu0
    %v3397 = vsel %vm210, %v3020, 0
    %3399 = vmatprep.subr.mxu0 0.0
    %3400 = vmatpush1.msra.mxu0 %v3028
    %3401 = vmatprep.subr.mxu0 0.0
    %3402 = vmatpush1.msra.mxu0 0.0
    %3403 = vmatprep.subr.mxu0 0.0
    %3404 = vmatpush1.msra.mxu0 0.0
    %3405 = vmatprep.subr.mxu0 0.0
    %3406 = vmatpush1.msra.mxu0 0.0
    %3407 = vmatprep.subr.mxu0 0.0
    %3408 = vmatpush1.msra.mxu0 0.0
    %3409 = vmatprep.subr.mxu0 0.0
    %3410 = vmatpush1.msra.mxu0 0.0
    %3411 = vmatprep.subr.mxu0 0.0
    %3412 = vmatpush1.msra.mxu0 0.0
    %3413 = vmatprep.subr.mxu0 0.0
    %3414 = vmatpush1.msra.mxu0 0.0
    %3415 = vmatprep.subr.mxu0 0.0
    %3416 = vmatpush1.msra.mxu0 0.0
    %3417 = vmatprep.subr.mxu0 0.0
    %3418 = vmatpush1.msra.mxu0 0.0
    %3419 = vmatprep.subr.mxu0 0.0
    %3420 = vmatpush1.msra.mxu0 0.0
    %3421 = vmatprep.subr.mxu0 0.0
    %3422 = vmatpush1.msra.mxu0 0.0
    %3423 = vmatprep.subr.mxu0 0.0
    %3424 = vmatpush1.msra.mxu0 0.0
    %3425 = vmatprep.subr.mxu0 0.0
    %3426 = vmatpush1.msra.mxu0 0.0
    %3427 = vmatprep.subr.mxu0 0.0
    %3428 = vmatpush1.msra.mxu0 0.0
    %3429 = vmatprep.subr.mxu0 0.0
    %3430 = vmatpush1.msra.mxu0 0.0
    %3431 = vmatprep.subr.mxu0 0.0
    %3432 = vmatpush1.msra.mxu0 0.0
    %3433 = vmatprep.subr.mxu0 0.0
    %3434 = vmatpush1.msra.mxu0 0.0
    %3435 = vmatprep.subr.mxu0 0.0
    %3436 = vmatpush1.msra.mxu0 0.0
    %3437 = vmatprep.subr.mxu0 0.0
    %3438 = vmatpush1.msra.mxu0 0.0
    %3439 = vmatprep.subr.mxu0 0.0
    %3440 = vmatpush1.msra.mxu0 0.0
    %3441 = vmatprep.subr.mxu0 0.0
    %3442 = vmatpush1.msra.mxu0 0.0
    %3443 = vmatprep.subr.mxu0 0.0
    %3444 = vmatpush1.msra.mxu0 0.0
    %3445 = vmatprep.subr.mxu0 0.0
    %3446 = vmatpush1.msra.mxu0 0.0
    %3447 = vmatprep.subr.mxu0 0.0
    %3448 = vmatpush1.msra.mxu0 0.0
    %3449 = vmatprep.subr.mxu0 0.0
    %3450 = vmatpush1.msra.mxu0 0.0
    %3451 = vmatprep.subr.mxu0 0.0
    %3452 = vmatpush1.msra.mxu0 0.0
    %3453 = vmatprep.subr.mxu0 0.0
    %3454 = vmatpush1.msra.mxu0 0.0
    %3455 = vmatprep.subr.mxu0 0.0
    %3456 = vmatpush1.msra.mxu0 0.0
    %3457 = vmatprep.subr.mxu0 0.0
    %3458 = vmatpush1.msra.mxu0 0.0
    %3459 = vmatprep.subr.mxu0 0.0
    %3460 = vmatpush1.msra.mxu0 0.0
    %3461 = vmatprep.subr.mxu0 0.0
    %3462 = vmatpush1.msra.mxu0 0.0
    %3463 = vmatprep.mubr.f32.mxu0 0.0
    %3464 = vmatmul.mubr.f32.gmra.mrb[0].mxu0 %v3397
    %v3465 = vpop.f32.mrb[0].mxu0
    %v3466 = vadd.f32 0.0, %v3465
    %v3467 = vpop.f32.mrb[0].mxu0
    %3468 = vdwg.mxu0
    %v3470 = vsel %vm210, %v3021, 0
    %3472 = vmatprep.subr.mxu0 0.0
    %3473 = vmatpush1.msra.mxu0 %v3029
    %3474 = vmatprep.subr.mxu0 0.0
    %3475 = vmatpush1.msra.mxu0 0.0
    %3476 = vmatprep.subr.mxu0 0.0
    %3477 = vmatpush1.msra.mxu0 0.0
    %3478 = vmatprep.subr.mxu0 0.0
    %3479 = vmatpush1.msra.mxu0 0.0
    %3480 = vmatprep.subr.mxu0 0.0
    %3481 = vmatpush1.msra.mxu0 0.0
    %3482 = vmatprep.subr.mxu0 0.0
    %3483 = vmatpush1.msra.mxu0 0.0
    %3484 = vmatprep.subr.mxu0 0.0
    %3485 = vmatpush1.msra.mxu0 0.0
    %3486 = vmatprep.subr.mxu0 0.0
    %3487 = vmatpush1.msra.mxu0 0.0
    %3488 = vmatprep.subr.mxu0 0.0
    %3489 = vmatpush1.msra.mxu0 0.0
    %3490 = vmatprep.subr.mxu0 0.0
    %3491 = vmatpush1.msra.mxu0 0.0
    %3492 = vmatprep.subr.mxu0 0.0
    %3493 = vmatpush1.msra.mxu0 0.0
    %3494 = vmatprep.subr.mxu0 0.0
    %3495 = vmatpush1.msra.mxu0 0.0
    %3496 = vmatprep.subr.mxu0 0.0
    %3497 = vmatpush1.msra.mxu0 0.0
    %3498 = vmatprep.subr.mxu0 0.0
    %3499 = vmatpush1.msra.mxu0 0.0
    %3500 = vmatprep.subr.mxu0 0.0
    %3501 = vmatpush1.msra.mxu0 0.0
    %3502 = vmatprep.subr.mxu0 0.0
    %3503 = vmatpush1.msra.mxu0 0.0
    %3504 = vmatprep.subr.mxu0 0.0
    %3505 = vmatpush1.msra.mxu0 0.0
    %3506 = vmatprep.subr.mxu0 0.0
    %3507 = vmatpush1.msra.mxu0 0.0
    %3508 = vmatprep.subr.mxu0 0.0
    %3509 = vmatpush1.msra.mxu0 0.0
    %3510 = vmatprep.subr.mxu0 0.0
    %3511 = vmatpush1.msra.mxu0 0.0
    %3512 = vmatprep.subr.mxu0 0.0
    %3513 = vmatpush1.msra.mxu0 0.0
    %3514 = vmatprep.subr.mxu0 0.0
    %3515 = vmatpush1.msra.mxu0 0.0
    %3516 = vmatprep.subr.mxu0 0.0
    %3517 = vmatpush1.msra.mxu0 0.0
    %3518 = vmatprep.subr.mxu0 0.0
    %3519 = vmatpush1.msra.mxu0 0.0
    %3520 = vmatprep.subr.mxu0 0.0
    %3521 = vmatpush1.msra.mxu0 0.0
    %3522 = vmatprep.subr.mxu0 0.0
    %3523 = vmatpush1.msra.mxu0 0.0
    %3524 = vmatprep.subr.mxu0 0.0
    %3525 = vmatpush1.msra.mxu0 0.0
    %3526 = vmatprep.subr.mxu0 0.0
    %3527 = vmatpush1.msra.mxu0 0.0
    %3528 = vmatprep.subr.mxu0 0.0
    %3529 = vmatpush1.msra.mxu0 0.0
    %3530 = vmatprep.subr.mxu0 0.0
    %3531 = vmatpush1.msra.mxu0 0.0
    %3532 = vmatprep.subr.mxu0 0.0
    %3533 = vmatpush1.msra.mxu0 0.0
    %3534 = vmatprep.subr.mxu0 0.0
    %3535 = vmatpush1.msra.mxu0 0.0
    %3536 = vmatprep.mubr.f32.mxu0 0.0
    %3537 = vmatmul.mubr.f32.gmra.mrb[0].mxu0 %v3470
    %v3538 = vpop.f32.mrb[0].mxu0
    %v3539 = vadd.f32 0.0, %v3538
    %v3540 = vpop.f32.mrb[0].mxu0
    %3541 = vdwg.mxu0
    %v3543 = vsel %vm210, %v3022, 0
    %3545 = vmatprep.subr.mxu0 0.0
    %3546 = vmatpush1.msra.mxu0 %v3030
    %3547 = vmatprep.subr.mxu0 0.0
    %3548 = vmatpush1.msra.mxu0 0.0
    %3549 = vmatprep.subr.mxu0 0.0
    %3550 = vmatpush1.msra.mxu0 0.0
    %3551 = vmatprep.subr.mxu0 0.0
    %3552 = vmatpush1.msra.mxu0 0.0
    %3553 = vmatprep.subr.mxu0 0.0
    %3554 = vmatpush1.msra.mxu0 0.0
    %3555 = vmatprep.subr.mxu0 0.0
    %3556 = vmatpush1.msra.mxu0 0.0
    %3557 = vmatprep.subr.mxu0 0.0
    %3558 = vmatpush1.msra.mxu0 0.0
    %3559 = vmatprep.subr.mxu0 0.0
    %3560 = vmatpush1.msra.mxu0 0.0
    %3561 = vmatprep.subr.mxu0 0.0
    %3562 = vmatpush1.msra.mxu0 0.0
    %3563 = vmatprep.subr.mxu0 0.0
    %3564 = vmatpush1.msra.mxu0 0.0
    %3565 = vmatprep.subr.mxu0 0.0
    %3566 = vmatpush1.msra.mxu0 0.0
    %3567 = vmatprep.subr.mxu0 0.0
    %3568 = vmatpush1.msra.mxu0 0.0
    %3569 = vmatprep.subr.mxu0 0.0
    %3570 = vmatpush1.msra.mxu0 0.0
    %3571 = vmatprep.subr.mxu0 0.0
    %3572 = vmatpush1.msra.mxu0 0.0
    %3573 = vmatprep.subr.mxu0 0.0
    %3574 = vmatpush1.msra.mxu0 0.0
    %3575 = vmatprep.subr.mxu0 0.0
    %3576 = vmatpush1.msra.mxu0 0.0
    %3577 = vmatprep.subr.mxu0 0.0
    %3578 = vmatpush1.msra.mxu0 0.0
    %3579 = vmatprep.subr.mxu0 0.0
    %3580 = vmatpush1.msra.mxu0 0.0
    %3581 = vmatprep.subr.mxu0 0.0
    %3582 = vmatpush1.msra.mxu0 0.0
    %3583 = vmatprep.subr.mxu0 0.0
    %3584 = vmatpush1.msra.mxu0 0.0
    %3585 = vmatprep.subr.mxu0 0.0
    %3586 = vmatpush1.msra.mxu0 0.0
    %3587 = vmatprep.subr.mxu0 0.0
    %3588 = vmatpush1.msra.mxu0 0.0
    %3589 = vmatprep.subr.mxu0 0.0
    %3590 = vmatpush1.msra.mxu0 0.0
    %3591 = vmatprep.subr.mxu0 0.0
    %3592 = vmatpush1.msra.mxu0 0.0
    %3593 = vmatprep.subr.mxu0 0.0
    %3594 = vmatpush1.msra.mxu0 0.0
    %3595 = vmatprep.subr.mxu0 0.0
    %3596 = vmatpush1.msra.mxu0 0.0
    %3597 = vmatprep.subr.mxu0 0.0
    %3598 = vmatpush1.msra.mxu0 0.0
    %3599 = vmatprep.subr.mxu0 0.0
    %3600 = vmatpush1.msra.mxu0 0.0
    %3601 = vmatprep.subr.mxu0 0.0
    %3602 = vmatpush1.msra.mxu0 0.0
    %3603 = vmatprep.subr.mxu0 0.0
    %3604 = vmatpush1.msra.mxu0 0.0
    %3605 = vmatprep.subr.mxu0 0.0
    %3606 = vmatpush1.msra.mxu0 0.0
    %3607 = vmatprep.subr.mxu0 0.0
    %3608 = vmatpush1.msra.mxu0 0.0
    %3609 = vmatprep.mubr.f32.mxu0 0.0
    %3610 = vmatmul.mubr.f32.gmra.mrb[0].mxu0 %v3543
    %v3611 = vpop.f32.mrb[0].mxu0
    %v3612 = vadd.f32 0.0, %v3611
    %v3613 = vpop.f32.mrb[0].mxu0
    %3614 = vdwg.mxu0
    %3615 = vst.msk [vmem:[#allocation5] sm:$0xff] %vm210, %v3101
    %3616 = vst.msk [vmem:[#allocation5 + $0x8] sm:$0xff] %vm210, %v3174
    %3619 = vrot.lane.b32.xlu0 %v3247, 8
    %v3620 = vpop.permute.xlu0 %3619
    %3621 = vrot.lane.b32.xlu0 %v3320, 8
    %v3622 = vpop.permute.xlu0 %3621
    %3625 = vst.msk [vmem:[#allocation5] sm:$0xff] %vm1690, %v3620
    %3626 = vst.msk [vmem:[#allocation5 + $0x8] sm:$0xff] %vm1690, %v3622
    %3629 = vrot.lane.b32.xlu0 %v3393, 16
    %v3630 = vpop.permute.xlu0 %3629
    %3631 = vrot.lane.b32.xlu0 %v3466, 16
    %v3632 = vpop.permute.xlu0 %3631
    %3635 = vst.msk [vmem:[#allocation5] sm:$0xff] %vm1701, %v3630
    %3636 = vst.msk [vmem:[#allocation5 + $0x8] sm:$0xff] %vm1701, %v3632
    %3639 = vrot.lane.b32.xlu0 %v3539, 24
    %v3640 = vpop.permute.xlu0 %3639
    %3641 = vrot.lane.b32.xlu0 %v3612, 24
    %v3642 = vpop.permute.xlu0 %3641
    %3645 = vst.msk [vmem:[#allocation5] sm:$0xff] %vm1712, %v3640
    %3646 = vst.msk [vmem:[#allocation5 + $0x8] sm:$0xff] %vm1712, %v3642
    %v3647 = vld [vmem:[#allocation5] sm:$0xff]
    %v3648 = vld [vmem:[#allocation5 + $0x8] sm:$0xff]
    %s3649 = scalar_lea.vmem %s7, 32
    %v3650 = vld [vmem:[%s3649] sm:$0xff]
    %v3651 = vld [vmem:[%s3649 + $0x8] sm:$0xff]
    %v3652 = vld [vmem:[%s3649 + $0x10] sm:$0xff]
    %v3653 = vld [vmem:[%s3649 + $0x18] sm:$0xff]
    %s3654 = scalar_lea.vmem %s8, 1
    %v3655 = vld [vmem:[%s3654] sm:$0x1]
    %v3657 = vlaneseq
    %v3658 = vshrl.u32 %v3657, 7
    %v3659 = vsub.s32 0, %v3658
    %v3660 = vrot.slane %v3655, %v3659
    %v3663 = vsel %vm67, %v3647, 0
    %v3666 = vsel %vm67, %v3648, 0
    %3668 = vmatprep.subr.mxu0 0.0
    %3669 = vmatpush1.msra.mxu0 %v3650
    %3670 = vmatprep.subr.mxu0 0.0
    %3671 = vmatpush1.msra.mxu0 %v3651
    %3672 = vmatprep.subr.mxu0 0.0
    %3673 = vmatpush1.msra.mxu0 %v3652
    %3674 = vmatprep.subr.mxu0 0.0
    %3675 = vmatpush1.msra.mxu0 %v3653
    %3676 = vmatprep.subr.mxu0 0.0
    %3677 = vmatpush1.msra.mxu0 0.0
    %3678 = vmatprep.subr.mxu0 0.0
    %3679 = vmatpush1.msra.mxu0 0.0
    %3680 = vmatprep.subr.mxu0 0.0
    %3681 = vmatpush1.msra.mxu0 0.0
    %3682 = vmatprep.subr.mxu0 0.0
    %3683 = vmatpush1.msra.mxu0 0.0
    %3684 = vmatprep.subr.mxu0 0.0
    %3685 = vmatpush1.msra.mxu0 0.0
    %3686 = vmatprep.subr.mxu0 0.0
    %3687 = vmatpush1.msra.mxu0 0.0
    %3688 = vmatprep.subr.mxu0 0.0
    %3689 = vmatpush1.msra.mxu0 0.0
    %3690 = vmatprep.subr.mxu0 0.0
    %3691 = vmatpush1.msra.mxu0 0.0
    %3692 = vmatprep.subr.mxu0 0.0
    %3693 = vmatpush1.msra.mxu0 0.0
    %3694 = vmatprep.subr.mxu0 0.0
    %3695 = vmatpush1.msra.mxu0 0.0
    %3696 = vmatprep.subr.mxu0 0.0
    %3697 = vmatpush1.msra.mxu0 0.0
    %3698 = vmatprep.subr.mxu0 0.0
    %3699 = vmatpush1.msra.mxu0 0.0
    %3700 = vmatprep.subr.mxu0 0.0
    %3701 = vmatpush1.msra.mxu0 0.0
    %3702 = vmatprep.subr.mxu0 0.0
    %3703 = vmatpush1.msra.mxu0 0.0
    %3704 = vmatprep.subr.mxu0 0.0
    %3705 = vmatpush1.msra.mxu0 0.0
    %3706 = vmatprep.subr.mxu0 0.0
    %3707 = vmatpush1.msra.mxu0 0.0
    %3708 = vmatprep.subr.mxu0 0.0
    %3709 = vmatpush1.msra.mxu0 0.0
    %3710 = vmatprep.subr.mxu0 0.0
    %3711 = vmatpush1.msra.mxu0 0.0
    %3712 = vmatprep.subr.mxu0 0.0
    %3713 = vmatpush1.msra.mxu0 0.0
    %3714 = vmatprep.subr.mxu0 0.0
    %3715 = vmatpush1.msra.mxu0 0.0
    %3716 = vmatprep.subr.mxu0 0.0
    %3717 = vmatpush1.msra.mxu0 0.0
    %3718 = vmatprep.subr.mxu0 0.0
    %3719 = vmatpush1.msra.mxu0 0.0
    %3720 = vmatprep.subr.mxu0 0.0
    %3721 = vmatpush1.msra.mxu0 0.0
    %3722 = vmatprep.subr.mxu0 0.0
    %3723 = vmatpush1.msra.mxu0 0.0
    %3724 = vmatprep.subr.mxu0 0.0
    %3725 = vmatpush1.msra.mxu0 0.0
    %3726 = vmatprep.subr.mxu0 0.0
    %3727 = vmatpush1.msra.mxu0 0.0
    %3728 = vmatprep.subr.mxu0 0.0
    %3729 = vmatpush1.msra.mxu0 0.0
    %3730 = vmatprep.subr.mxu0 0.0
    %3731 = vmatpush1.msra.mxu0 0.0
    %3732 = vmatprep.mubr.f32.mxu0 0.0
    %3733 = vmatmul.mubr.f32.gmra.mrb[0].mxu0 %v3663
    %v3734 = vpop.f32.mrb[0].mxu0
    %v3735 = vadd.f32 %v3660, %v3734
    %v3736 = vpop.f32.mrb[0].mxu0
    %3737 = vmatprep.mubr.f32.mxu0 0.0
    %3738 = vmatmul.mubr.f32.gmra.mrb[0].mxu0 %v3666
    %v3739 = vpop.f32.mrb[0].mxu0
    %v3740 = vadd.f32 %v3660, %v3739
    %v3741 = vpop.f32.mrb[0].mxu0
    %3742 = vdwg.mxu0
    %v3743 = vadd.f32 %v2107, %v3735
    %v3744 = vadd.f32 %v2108, %v3740
    %s3745 = scalar_lea.vmem %s9, 1
    %v3746 = vld [vmem:[%s3745] sm:$0x1]
    %s3747 = scalar_lea.vmem %s10, 1
    %v3748 = vld [vmem:[%s3747] sm:$0x1]
    %v3749 = vsel %vm67, %v3743, 0.0
    %3750 = vadd.xlane.f32.xlu0 %v3749
    %v3751 = vpop.xlane.xlu0 %3750
    %v3752 = vsel %vm67, %v3744, 0.0
    %3753 = vadd.xlane.f32.xlu0 %v3752
    %v3754 = vpop.xlane.xlu0 %3753
    %v3755 = vmul.f32 %v3751, 0.03125
    %v3756 = vmul.f32 %v3754, 0.03125
    %v3757 = vsub.f32 %v3743, %v3755
    %v3758 = vsub.f32 %v3744, %v3756
    %v3759 = vmul.f32 %v3757, %v3757
    %v3760 = vmul.f32 %v3758, %v3758
    %v3761 = vsel %vm67, %v3759, 0.0
    %3762 = vadd.xlane.f32.xlu0 %v3761
    %v3763 = vpop.xlane.xlu0 %3762
    %v3764 = vsel %vm67, %v3760, 0.0
    %3765 = vadd.xlane.f32.xlu0 %v3764
    %v3766 = vpop.xlane.xlu0 %3765
    %v3767 = vmul.f32 %v3763, 0.03125
    %v3768 = vmul.f32 %v3766, 0.03125
    %v3769 = vadd.f32 %v3767, 1e-05
    %v3770 = vadd.f32 %v3768, 1e-05
    %v3771 = vrsqrt.pop %v3769
    %v3772 = vrsqrt.pop %v3770
    %v3773 = vmul.f32 %v3757, %v3771
    %v3774 = vmul.f32 %v3758, %v3772
    %v3776 = vlaneseq
    %v3777 = vshrl.u32 %v3776, 7
    %v3778 = vsub.s32 0, %v3777
    %v3779 = vrot.slane %v3746, %v3778
    %v3781 = vmul.f32 %v3773, %v3779
    %v3782 = vmul.f32 %v3774, %v3779
    %v3784 = vlaneseq
    %v3785 = vshrl.u32 %v3784, 7
    %v3786 = vsub.s32 0, %v3785
    %v3787 = vrot.slane %v3748, %v3786
    %v3789 = vadd.f32 %v3781, %v3787
    %v3790 = vadd.f32 %v3782, %v3787
    %s3791 = scalar_lea.vmem %s11, 32
    %v3792 = vld [vmem:[%s3791] sm:$0xff]
    %v3793 = vld [vmem:[%s3791 + $0x8] sm:$0xff]
    %v3794 = vld [vmem:[%s3791 + $0x10] sm:$0xff]
    %v3795 = vld [vmem:[%s3791 + $0x18] sm:$0xff]
    %s3796 = scalar_lea.vmem %s12, 1
    %v3797 = vld [vmem:[%s3796] sm:$0x1]
    %v3799 = vlaneseq
    %v3800 = vshrl.u32 %v3799, 7
    %v3801 = vsub.s32 0, %v3800
    %v3802 = vrot.slane %v3797, %v3801
    %v3805 = vsel %vm67, %v3789, 0
    %v3808 = vsel %vm67, %v3790, 0
    %3810 = vmatprep.subr.mxu0 0.0
    %3811 = vmatpush1.msra.mxu0 %v3792
    %3812 = vmatprep.subr.mxu0 0.0
    %3813 = vmatpush1.msra.mxu0 %v3793
    %3814 = vmatprep.subr.mxu0 0.0
    %3815 = vmatpush1.msra.mxu0 %v3794
    %3816 = vmatprep.subr.mxu0 0.0
    %3817 = vmatpush1.msra.mxu0 %v3795
    %3818 = vmatprep.subr.mxu0 0.0
    %3819 = vmatpush1.msra.mxu0 0.0
    %3820 = vmatprep.subr.mxu0 0.0
    %3821 = vmatpush1.msra.mxu0 0.0
    %3822 = vmatprep.subr.mxu0 0.0
    %3823 = vmatpush1.msra.mxu0 0.0
    %3824 = vmatprep.subr.mxu0 0.0
    %3825 = vmatpush1.msra.mxu0 0.0
    %3826 = vmatprep.subr.mxu0 0.0
    %3827 = vmatpush1.msra.mxu0 0.0
    %3828 = vmatprep.subr.mxu0 0.0
    %3829 = vmatpush1.msra.mxu0 0.0
    %3830 = vmatprep.subr.mxu0 0.0
    %3831 = vmatpush1.msra.mxu0 0.0
    %3832 = vmatprep.subr.mxu0 0.0
    %3833 = vmatpush1.msra.mxu0 0.0
    %3834 = vmatprep.subr.mxu0 0.0
    %3835 = vmatpush1.msra.mxu0 0.0
    %3836 = vmatprep.subr.mxu0 0.0
    %3837 = vmatpush1.msra.mxu0 0.0
    %3838 = vmatprep.subr.mxu0 0.0
    %3839 = vmatpush1.msra.mxu0 0.0
    %3840 = vmatprep.subr.mxu0 0.0
    %3841 = vmatpush1.msra.mxu0 0.0
    %3842 = vmatprep.subr.mxu0 0.0
    %3843 = vmatpush1.msra.mxu0 0.0
    %3844 = vmatprep.subr.mxu0 0.0
    %3845 = vmatpush1.msra.mxu0 0.0
    %3846 = vmatprep.subr.mxu0 0.0
    %3847 = vmatpush1.msra.mxu0 0.0
    %3848 = vmatprep.subr.mxu0 0.0
    %3849 = vmatpush1.msra.mxu0 0.0
    %3850 = vmatprep.subr.mxu0 0.0
    %3851 = vmatpush1.msra.mxu0 0.0
    %3852 = vmatprep.subr.mxu0 0.0
    %3853 = vmatpush1.msra.mxu0 0.0
    %3854 = vmatprep.subr.mxu0 0.0
    %3855 = vmatpush1.msra.mxu0 0.0
    %3856 = vmatprep.subr.mxu0 0.0
    %3857 = vmatpush1.msra.mxu0 0.0
    %3858 = vmatprep.subr.mxu0 0.0
    %3859 = vmatpush1.msra.mxu0 0.0
    %3860 = vmatprep.subr.mxu0 0.0
    %3861 = vmatpush1.msra.mxu0 0.0
    %3862 = vmatprep.subr.mxu0 0.0
    %3863 = vmatpush1.msra.mxu0 0.0
    %3864 = vmatprep.subr.mxu0 0.0
    %3865 = vmatpush1.msra.mxu0 0.0
    %3866 = vmatprep.subr.mxu0 0.0
    %3867 = vmatpush1.msra.mxu0 0.0
    %3868 = vmatprep.subr.mxu0 0.0
    %3869 = vmatpush1.msra.mxu0 0.0
    %3870 = vmatprep.subr.mxu0 0.0
    %3871 = vmatpush1.msra.mxu0 0.0
    %3872 = vmatprep.subr.mxu0 0.0
    %3873 = vmatpush1.msra.mxu0 0.0
    %3874 = vmatprep.mubr.f32.mxu0 0.0
    %3875 = vmatmul.mubr.f32.gmra.mrb[0].mxu0 %v3805
    %v3876 = vpop.f32.mrb[0].mxu0
    %v3877 = vadd.f32 %v3802, %v3876
    %v3878 = vpop.f32.mrb[0].mxu0
    %3879 = vmatprep.mubr.f32.mxu0 0.0
    %3880 = vmatmul.mubr.f32.gmra.mrb[0].mxu0 %v3808
    %v3881 = vpop.f32.mrb[0].mxu0
    %v3882 = vadd.f32 %v3802, %v3881
    %v3883 = vpop.f32.mrb[0].mxu0
    %3884 = vdwg.mxu0
    %v3885 = vmul.f32 %v3877, 0.5
    %v3886 = vmul.f32 %v3882, 0.5
    %v3887 = vmul.f32 %v3877, 0.044715
    %v3888 = vmul.f32 %v3882, 0.044715
    %v3889 = vmul.f32 %v3887, %v3877
    %v3890 = vmul.f32 %v3888, %v3882
    %v3891 = vmul.f32 %v3889, %v3877
    %v3892 = vmul.f32 %v3890, %v3882
    %v3893 = vadd.f32 %v3877, %v3891
    %v3894 = vadd.f32 %v3882, %v3892
    %v3895 = vmul.f32 %v3893, 0.7978846
    %v3896 = vmul.f32 %v3894, 0.7978846
    %v3897 = vtanh.pop %v3895
    %v3898 = vtanh.pop %v3896
    %v3899 = vadd.f32 %v3897, 1.0
    %v3900 = vadd.f32 %v3898, 1.0
    %v3901 = vmul.f32 %v3885, %v3899
    %v3902 = vmul.f32 %v3886, %v3900
    %s3903 = scalar_lea.vmem %s13, 128
    %v3904 = vld [vmem:[%s3903] sm:$0xff]
    %v3905 = vld [vmem:[%s3903 + $0x8] sm:$0xff]
    %v3906 = vld [vmem:[%s3903 + $0x10] sm:$0xff]
    %v3907 = vld [vmem:[%s3903 + $0x18] sm:$0xff]
    %v3908 = vld [vmem:[%s3903 + $0x20] sm:$0xff]
    %v3909 = vld [vmem:[%s3903 + $0x28] sm:$0xff]
    %v3910 = vld [vmem:[%s3903 + $0x30] sm:$0xff]
    %v3911 = vld [vmem:[%s3903 + $0x38] sm:$0xff]
    %v3912 = vld [vmem:[%s3903 + $0x40] sm:$0xff]
    %v3913 = vld [vmem:[%s3903 + $0x48] sm:$0xff]
    %v3914 = vld [vmem:[%s3903 + $0x50] sm:$0xff]
    %v3915 = vld [vmem:[%s3903 + $0x58] sm:$0xff]
    %v3916 = vld [vmem:[%s3903 + $0x60] sm:$0xff]
    %v3917 = vld [vmem:[%s3903 + $0x68] sm:$0xff]
    %v3918 = vld [vmem:[%s3903 + $0x70] sm:$0xff]
    %v3919 = vld [vmem:[%s3903 + $0x78] sm:$0xff]
    %s3920 = scalar_lea.vmem %s14, 1
    %v3921 = vld [vmem:[%s3920] sm:$0x1]
    %v3923 = vlaneseq
    %v3924 = vshrl.u32 %v3923, 7
    %v3925 = vsub.s32 0, %v3924
    %v3926 = vrot.slane %v3921, %v3925
    %3928 = vmatprep.subr.mxu0 0.0
    %3929 = vmatpush1.msra.mxu0 %v3904
    %3930 = vmatprep.subr.mxu0 0.0
    %3931 = vmatpush1.msra.mxu0 %v3905
    %3932 = vmatprep.subr.mxu0 0.0
    %3933 = vmatpush1.msra.mxu0 %v3906
    %3934 = vmatprep.subr.mxu0 0.0
    %3935 = vmatpush1.msra.mxu0 %v3907
    %3936 = vmatprep.subr.mxu0 0.0
    %3937 = vmatpush1.msra.mxu0 %v3908
    %3938 = vmatprep.subr.mxu0 0.0
    %3939 = vmatpush1.msra.mxu0 %v3909
    %3940 = vmatprep.subr.mxu0 0.0
    %3941 = vmatpush1.msra.mxu0 %v3910
    %3942 = vmatprep.subr.mxu0 0.0
    %3943 = vmatpush1.msra.mxu0 %v3911
    %3944 = vmatprep.subr.mxu0 0.0
    %3945 = vmatpush1.msra.mxu0 %v3912
    %3946 = vmatprep.subr.mxu0 0.0
    %3947 = vmatpush1.msra.mxu0 %v3913
    %3948 = vmatprep.subr.mxu0 0.0
    %3949 = vmatpush1.msra.mxu0 %v3914
    %3950 = vmatprep.subr.mxu0 0.0
    %3951 = vmatpush1.msra.mxu0 %v3915
    %3952 = vmatprep.subr.mxu0 0.0
    %3953 = vmatpush1.msra.mxu0 %v3916
    %3954 = vmatprep.subr.mxu0 0.0
    %3955 = vmatpush1.msra.mxu0 %v3917
    %3956 = vmatprep.subr.mxu0 0.0
    %3957 = vmatpush1.msra.mxu0 %v3918
    %3958 = vmatprep.subr.mxu0 0.0
    %3959 = vmatpush1.msra.mxu0 %v3919
    %3960 = vmatprep.subr.mxu0 0.0
    %3961 = vmatpush1.msra.mxu0 0.0
    %3962 = vmatprep.subr.mxu0 0.0
    %3963 = vmatpush1.msra.mxu0 0.0
    %3964 = vmatprep.subr.mxu0 0.0
    %3965 = vmatpush1.msra.mxu0 0.0
    %3966 = vmatprep.subr.mxu0 0.0
    %3967 = vmatpush1.msra.mxu0 0.0
    %3968 = vmatprep.subr.mxu0 0.0
    %3969 = vmatpush1.msra.mxu0 0.0
    %3970 = vmatprep.subr.mxu0 0.0
    %3971 = vmatpush1.msra.mxu0 0.0
    %3972 = vmatprep.subr.mxu0 0.0
    %3973 = vmatpush1.msra.mxu0 0.0
    %3974 = vmatprep.subr.mxu0 0.0
    %3975 = vmatpush1.msra.mxu0 0.0
    %3976 = vmatprep.subr.mxu0 0.0
    %3977 = vmatpush1.msra.mxu0 0.0
    %3978 = vmatprep.subr.mxu0 0.0
    %3979 = vmatpush1.msra.mxu0 0.0
    %3980 = vmatprep.subr.mxu0 0.0
    %3981 = vmatpush1.msra.mxu0 0.0
    %3982 = vmatprep.subr.mxu0 0.0
    %3983 = vmatpush1.msra.mxu0 0.0
    %3984 = vmatprep.subr.mxu0 0.0
    %3985 = vmatpush1.msra.mxu0 0.0
    %3986 = vmatprep.subr.mxu0 0.0
    %3987 = vmatpush1.msra.mxu0 0.0
    %3988 = vmatprep.subr.mxu0 0.0
    %3989 = vmatpush1.msra.mxu0 0.0
    %3990 = vmatprep.subr.mxu0 0.0
    %3991 = vmatpush1.msra.mxu0 0.0
    %3992 = vmatprep.mubr.f32.mxu0 0.0
    %3993 = vmatmul.mubr.f32.gmra.mrb[0].mxu0 %v3901
    %v3994 = vpop.f32.mrb[0].mxu0
    %v3995 = vadd.f32 %v3926, %v3994
    %v3996 = vpop.f32.mrb[0].mxu0
    %3997 = vmatprep.mubr.f32.mxu0 0.0
    %3998 = vmatmul.mubr.f32.gmra.mrb[0].mxu0 %v3902
    %v3999 = vpop.f32.mrb[0].mxu0
    %v4000 = vadd.f32 %v3926, %v3999
    %v4001 = vpop.f32.mrb[0].mxu0
    %4002 = vdwg.mxu0
    %v4003 = vadd.f32 %v3789, %v3995
    %v4004 = vadd.f32 %v3790, %v4000
    %s4005 = scalar_lea.vmem %s15, 1
    %v4006 = vld [vmem:[%s4005] sm:$0x1]
    %s4007 = scalar_lea.vmem %s16, 1
    %v4008 = vld [vmem:[%s4007] sm:$0x1]
    %v4009 = vsel %vm67, %v4003, 0.0
    %4010 = vadd.xlane.f32.xlu0 %v4009
    %v4011 = vpop.xlane.xlu0 %4010
    %v4012 = vsel %vm67, %v4004, 0.0
    %4013 = vadd.xlane.f32.xlu0 %v4012
    %v4014 = vpop.xlane.xlu0 %4013
    %v4015 = vmul.f32 %v4011, 0.03125
    %v4016 = vmul.f32 %v4014, 0.03125
    %v4017 = vsub.f32 %v4003, %v4015
    %v4018 = vsub.f32 %v4004, %v4016
    %v4019 = vmul.f32 %v4017, %v4017
    %v4020 = vmul.f32 %v4018, %v4018
    %v4021 = vsel %vm67, %v4019, 0.0
    %4022 = vadd.xlane.f32.xlu0 %v4021
    %v4023 = vpop.xlane.xlu0 %4022
    %v4024 = vsel %vm67, %v4020, 0.0
    %4025 = vadd.xlane.f32.xlu0 %v4024
    %v4026 = vpop.xlane.xlu0 %4025
    %v4027 = vmul.f32 %v4023, 0.03125
    %v4028 = vmul.f32 %v4026, 0.03125
    %v4029 = vadd.f32 %v4027, 1e-05
    %v4030 = vadd.f32 %v4028, 1e-05
    %v4031 = vrsqrt.pop %v4029
    %v4032 = vrsqrt.pop %v4030
    %v4033 = vmul.f32 %v4017, %v4031
    %v4034 = vmul.f32 %v4018, %v4032
    %v4036 = vlaneseq
    %v4037 = vshrl.u32 %v4036, 7
    %v4038 = vsub.s32 0, %v4037
    %v4039 = vrot.slane %v4006, %v4038
    %v4041 = vmul.f32 %v4033, %v4039
    %v4042 = vmul.f32 %v4034, %v4039
    %v4044 = vlaneseq
    %v4045 = vshrl.u32 %v4044, 7
    %v4046 = vsub.s32 0, %v4045
    %v4047 = vrot.slane %v4008, %v4046
    %v4049 = vadd.f32 %v4041, %v4047
    %v4050 = vadd.f32 %v4042, %v4047
    %v4051 = vld [vmem:[%s17] sm:$0xff]
    %v4052 = vld [vmem:[%s17 + $0x8] sm:$0xff]
    %v4053 = vld [vmem:[%s17 + $0x10] sm:$0xff]
    %v4054 = vld [vmem:[%s17 + $0x18] sm:$0xff]
    %v4055 = vld [vmem:[%s18] sm:$0x1]
    %v4057 = vlaneseq
    %v4058 = vshrl.u32 %v4057, 7
    %v4059 = vsub.s32 0, %v4058
    %v4060 = vrot.slane %v4055, %v4059
    %v4063 = vsel %vm67, %v4049, 0
    %v4066 = vsel %vm67, %v4050, 0
    %4068 = vmatprep.subr.mxu0 0.0
    %4069 = vmatpush1.msra.mxu0 %v4051
    %4070 = vmatprep.subr.mxu0 0.0
    %4071 = vmatpush1.msra.mxu0 %v4052
    %4072 = vmatprep.subr.mxu0 0.0
    %4073 = vmatpush1.msra.mxu0 %v4053
    %4074 = vmatprep.subr.mxu0 0.0
    %4075 = vmatpush1.msra.mxu0 %v4054
    %4076 = vmatprep.subr.mxu0 0.0
    %4077 = vmatpush1.msra.mxu0 0.0
    %4078 = vmatprep.subr.mxu0 0.0
    %4079 = vmatpush1.msra.mxu0 0.0
    %4080 = vmatprep.subr.mxu0 0.0
    %4081 = vmatpush1.msra.mxu0 0.0
    %4082 = vmatprep.subr.mxu0 0.0
    %4083 = vmatpush1.msra.mxu0 0.0
    %4084 = vmatprep.subr.mxu0 0.0
    %4085 = vmatpush1.msra.mxu0 0.0
    %4086 = vmatprep.subr.mxu0 0.0
    %4087 = vmatpush1.msra.mxu0 0.0
    %4088 = vmatprep.subr.mxu0 0.0
    %4089 = vmatpush1.msra.mxu0 0.0
    %4090 = vmatprep.subr.mxu0 0.0
    %4091 = vmatpush1.msra.mxu0 0.0
    %4092 = vmatprep.subr.mxu0 0.0
    %4093 = vmatpush1.msra.mxu0 0.0
    %4094 = vmatprep.subr.mxu0 0.0
    %4095 = vmatpush1.msra.mxu0 0.0
    %4096 = vmatprep.subr.mxu0 0.0
    %4097 = vmatpush1.msra.mxu0 0.0
    %4098 = vmatprep.subr.mxu0 0.0
    %4099 = vmatpush1.msra.mxu0 0.0
    %4100 = vmatprep.subr.mxu0 0.0
    %4101 = vmatpush1.msra.mxu0 0.0
    %4102 = vmatprep.subr.mxu0 0.0
    %4103 = vmatpush1.msra.mxu0 0.0
    %4104 = vmatprep.subr.mxu0 0.0
    %4105 = vmatpush1.msra.mxu0 0.0
    %4106 = vmatprep.subr.mxu0 0.0
    %4107 = vmatpush1.msra.mxu0 0.0
    %4108 = vmatprep.subr.mxu0 0.0
    %4109 = vmatpush1.msra.mxu0 0.0
    %4110 = vmatprep.subr.mxu0 0.0
    %4111 = vmatpush1.msra.mxu0 0.0
    %4112 = vmatprep.subr.mxu0 0.0
    %4113 = vmatpush1.msra.mxu0 0.0
    %4114 = vmatprep.subr.mxu0 0.0
    %4115 = vmatpush1.msra.mxu0 0.0
    %4116 = vmatprep.subr.mxu0 0.0
    %4117 = vmatpush1.msra.mxu0 0.0
    %4118 = vmatprep.subr.mxu0 0.0
    %4119 = vmatpush1.msra.mxu0 0.0
    %4120 = vmatprep.subr.mxu0 0.0
    %4121 = vmatpush1.msra.mxu0 0.0
    %4122 = vmatprep.subr.mxu0 0.0
    %4123 = vmatpush1.msra.mxu0 0.0
    %4124 = vmatprep.subr.mxu0 0.0
    %4125 = vmatpush1.msra.mxu0 0.0
    %4126 = vmatprep.subr.mxu0 0.0
    %4127 = vmatpush1.msra.mxu0 0.0
    %4128 = vmatprep.subr.mxu0 0.0
    %4129 = vmatpush1.msra.mxu0 0.0
    %4130 = vmatprep.subr.mxu0 0.0
    %4131 = vmatpush1.msra.mxu0 0.0
    %4132 = vmatprep.mubr.f32.mxu0 0.0
    %4133 = vmatmul.mubr.f32.gmra.mrb[0].mxu0 %v4063
    %v4134 = vpop.f32.mrb[0].mxu0
    %v4135 = vadd.f32 %v4060, %v4134
    %v4136 = vpop.f32.mrb[0].mxu0
    %4137 = vmatprep.mubr.f32.mxu0 0.0
    %4138 = vmatmul.mubr.f32.gmra.mrb[0].mxu0 %v4066
    %v4139 = vpop.f32.mrb[0].mxu0
    %v4140 = vadd.f32 %v4060, %v4139
    %v4141 = vpop.f32.mrb[0].mxu0
    %4142 = vdwg.mxu0
    %v4143 = vld [vmem:[%s2] sm:$0xff]
    %v4144 = vld [vmem:[%s2 + $0x8] sm:$0xff]
    %vm4145 = vcmp.eq.f32.partialorder %v4143, 0.0
    %vm4146 = vcmp.eq.f32.partialorder %v4144, 0.0
    %v4147 = vsel %vm4145, 1, 0
    %v4148 = vsel %vm4146, 1, 0
    %4149 = vset.pattern.permute.xlu0 0
    %4150 = vperm.xlu0 %4149, %v4147
    %v4151 = vpop.permute.xlu0 %4150
    %4152 = vset.pattern.permute.xlu0 0
    %4153 = vperm.xlu0 %4152, %v4148
    %v4154 = vpop.permute.xlu0 %4153
    %vm4155 = vcmp.eq.s32.totalorder %v4151, 1
    %vm4156 = vcmp.eq.s32.totalorder %v4154, 1
    %v4157 = vsel %vm4155, -1.0, %v4135
    %v4158 = vsel %vm4156, -1.0, %v4140
    %4159 = vst [vmem:[#allocation6] sm:$0xff] %v4157
    %4160 = vst [vmem:[#allocation6 + $0x8] sm:$0xff] %v4158
    // Predicated region
    $region78: #{tpu_custom_call.1} parent=1 // pred_check
      _
    $region79: #{tpu_custom_call.1} parent=1 // pred_check_branch
      %4162 = sbr.rel (0) target = $region81
    $region80: #{tpu_custom_call.1} parent=1 // pred_region
      %s4164 = ssub.s32 256, 256
      %4165 = vsyncadd [#allocation7], %s4164
      %s4166 = sshll.u32 [#allocation6], 4
      %s4167 = int_to_ptr.vmem [resolvable:$true] %s4166
      %4172 = dma.vmem_to_hbm [thread:$0]  %s4167, 256, %s19, [#allocation7], 128, 128, 8
    $region81: #{tpu_custom_call.1} parent=1 // pred_fallthru
      _
    // Predicated region
    $region82: #{tpu_custom_call.1} parent=1 // pred_check
      _
    $region83: #{tpu_custom_call.1} parent=1 // pred_check_branch
      %4174 = sbr.rel (0) target = $region85
    $region84: #{tpu_custom_call.1} parent=1 // pred_region
      %4175 = dma.done [#allocation7], 256
    $region85: #{tpu_custom_call.1} parent=1 // pred_fallthru
      _
    %4176 = vsyncpa [#allocation7], 1

</llo_original>
